<compile_context>
chip_gen: v7x
topology: tpu7x:2x2x1
jax: 0.10.0
libtpu: 0.0.40
codegen_flags: <defaults>
</compile_context>

<pallas_src>
import functools

import jax
import jax.numpy as jnp
from jax.experimental import pallas as pl
from jax.experimental.pallas import tpu as pltpu


def _round_up(x, m):
    return (x + m - 1) // m * m


# -----------------------------------------------------------------------------
# Kernel 1: tiled matmul + bias + ReLU  (used for the 1x1 convs, BN scale folded into W)
# -----------------------------------------------------------------------------
def _matmul_bias_act_kernel(a_ref, w_ref, b_ref, o_ref, acc_ref, *, relu):
    k = pl.program_id(2)

    @pl.when(k == 0)
    def _():
        acc_ref[...] = jnp.zeros_like(acc_ref)

    acc_ref[...] += jnp.dot(a_ref[...], w_ref[...], preferred_element_type=jnp.float32)

    @pl.when(k == pl.num_programs(2) - 1)
    def _():
        y = acc_ref[...] + b_ref[...]
        if relu:
            y = jnp.maximum(y, 0.0)
        o_ref[...] = y.astype(o_ref.dtype)


def matmul_bias_act(a, w, bias, *, relu=True, out_dtype=jnp.bfloat16):
    """y = act(a @ w + bias);  a:(M,K)  w:(K,N)  bias:(N,).  bf16 operands, f32 accum."""
    M, K = a.shape
    K2, N = w.shape
    assert K == K2

    Kp = _round_up(K, 128)
    Np = _round_up(N, 128)
    tn = 256 if Np % 256 == 0 else 128
    tk = 512 if Kp % 512 == 0 else (256 if Kp % 256 == 0 else 128)
    if M >= 256:
        tm, Mp = 256, _round_up(M, 256)
    else:
        tm = _round_up(M, 16)
        Mp = tm

    a = a.astype(jnp.bfloat16)
    w = w.astype(jnp.bfloat16)
    if (Mp, Kp) != (M, K):
        a = jnp.pad(a, ((0, Mp - M), (0, Kp - K)))
    if (Kp, Np) != (K, N):
        w = jnp.pad(w, ((0, Kp - K), (0, Np - N)))
    b = bias.reshape(1, N).astype(jnp.float32)
    if Np != N:
        b = jnp.pad(b, ((0, 0), (0, Np - N)))

    grid = (Mp // tm, Np // tn, Kp // tk)
    out = pl.pallas_call(
        functools.partial(_matmul_bias_act_kernel, relu=relu),
        out_shape=jax.ShapeDtypeStruct((Mp, Np), out_dtype),
        grid_spec=pltpu.PrefetchScalarGridSpec(
            num_scalar_prefetch=0,
            grid=grid,
            in_specs=[
                pl.BlockSpec((tm, tk), lambda i, j, k: (i, k)),
                pl.BlockSpec((tk, tn), lambda i, j, k: (k, j)),
                pl.BlockSpec((1, tn), lambda i, j, k: (0, j)),
            ],
            out_specs=pl.BlockSpec((tm, tn), lambda i, j, k: (i, j)),
            scratch_shapes=[pltpu.VMEM((tm, tn), jnp.float32)],
        ),
        compiler_params=pltpu.CompilerParams(
            dimension_semantics=("parallel", "parallel", "arbitrary"),
        ),
    )(a, w, b)
    if (Mp, Np) != (M, N):
        out = out[:M, :N]
    return out


# -----------------------------------------------------------------------------
# Kernel 2: direct 3x3 conv + bias + ReLU (no im2col materialisation).
# The padded input is polyphase-split by the stride at the JAX level (total bytes ~= input),
# so every one of the 9 taps is a unit-stride shifted window of one phase; the kernel
# accumulates 9 MXU matmuls into an f32 accumulator.
# -----------------------------------------------------------------------------
def _conv3x3_bias_relu_kernel(x_ref, w_ref, b_ref, o_ref, *, stride, Ho, Wo):
    # x_ref: (s*s, Hph, Wph, Cin) bf16 -- phases of one image (s=1 -> single padded image)
    # w_ref: (9, Cin, TN) bf16   (BN scale already folded in)
    # b_ref: (1, TN) f32
    # o_ref: (1, Ho*Wo, TN)
    s = stride
    tn = o_ref.shape[-1]
    acc = jnp.zeros((Ho * Wo, tn), jnp.float32)
    for dy in range(3):
        for dx in range(3):
            py, qy = dy % s, dy // s
            px, qx = dx % s, dx // s
            xp = x_ref[py * s + px]                       # (Hph, Wph, Cin)
            cin = xp.shape[2]
            a = jax.lax.slice(xp, (qy, qx, 0), (qy + Ho, qx + Wo, cin))
            a = a.reshape(Ho * Wo, cin)
            acc = acc + jnp.dot(a, w_ref[dy * 3 + dx],
                                preferred_element_type=jnp.float32)
    y = jnp.maximum(acc + b_ref[...], 0.0)
    o_ref[0] = y.astype(o_ref.dtype)


def conv3x3_bn_relu(x, w, bias, stride):
    """x: (N,H,W,Cin); w: (3,3,Cin,Cout) with BN scale folded; bias: (Cout,). stride static."""
    N, H, W, Cin = x.shape
    Cout = w.shape[-1]
    s = int(stride)
    Ho = (H + 2 - 3) // s + 1
    Wo = (W + 2 - 3) // s + 1

    xp = jnp.pad(x.astype(jnp.bfloat16), ((0, 0), (1, 1), (1, 1), (0, 0)))
    Hp, Wp = H + 2, W + 2
    if s == 1:
        Hph, Wph = Hp, Wp
        phased = xp.reshape(N, 1, Hph, Wph, Cin)
    else:
        Hph = (Hp + s - 1) // s
        Wph = (Wp + s - 1) // s
        phases = []
        for py in range(s):
            for px in range(s):
                ph = xp[:, py::s, px::s, :]
                ph = jnp.pad(ph, ((0, 0), (0, Hph - ph.shape[1]),
                                  (0, Wph - ph.shape[2]), (0, 0)))
                phases.append(ph)
        phased = jnp.stack(phases, axis=1)
    phased = phased.reshape(N * s * s, Hph, Wph, Cin)

    Cp = _round_up(Cout, 128)
    tn = 256 if Cp % 256 == 0 else 128
    wr = w.reshape(9, Cin, Cout).astype(jnp.bfloat16)
    br = bias.reshape(1, Cout).astype(jnp.float32)
    if Cp != Cout:
        wr = jnp.pad(wr, ((0, 0), (0, 0), (0, Cp - Cout)))
        br = jnp.pad(br, ((0, 0), (0, Cp - Cout)))

    out = pl.pallas_call(
        functools.partial(_conv3x3_bias_relu_kernel, stride=s, Ho=Ho, Wo=Wo),
        out_shape=jax.ShapeDtypeStruct((N, Ho * Wo, Cp), jnp.bfloat16),
        grid_spec=pltpu.PrefetchScalarGridSpec(
            num_scalar_prefetch=0,
            grid=(N, Cp // tn),
            in_specs=[
                pl.BlockSpec((s * s, Hph, Wph, Cin), lambda n, j: (n, 0, 0, 0)),
                pl.BlockSpec((9, Cin, tn), lambda n, j: (0, 0, j)),
                pl.BlockSpec((1, tn), lambda n, j: (0, j)),
            ],
            out_specs=pl.BlockSpec((1, Ho * Wo, tn), lambda n, j: (n, 0, j)),
        ),
        compiler_params=pltpu.CompilerParams(
            dimension_semantics=("parallel", "parallel"),
        ),
    )(phased, wr, br)
    out = out[:, :, :Cout]
    return out.reshape(N, Ho, Wo, Cout)


# -----------------------------------------------------------------------------
# Kernel 3: tiled global average pool (AdaptiveAvgPool2d(1) + flatten)
# -----------------------------------------------------------------------------
def _avgpool_kernel(x_ref, o_ref, *, inv):
    s = jnp.sum(x_ref[0].astype(jnp.float32), axis=0, keepdims=True) * inv
    o_ref[0] = s.astype(o_ref.dtype)


def global_avgpool(x):
    """x: (N,H,W,C) -> (N,C) f32, averaged over spatial dims."""
    N, H, W, C = x.shape
    HW = H * W
    HWp = _round_up(HW, 8)
    Cp = _round_up(C, 128)
    tc = min(Cp, 512)
    while Cp % tc:
        tc //= 2

    xr = x.reshape(N, HW, C)
    if (HWp, Cp) != (HW, C):
        xr = jnp.pad(xr, ((0, 0), (0, HWp - HW), (0, Cp - C)))

    out = pl.pallas_call(
        functools.partial(_avgpool_kernel, inv=1.0 / HW),
        out_shape=jax.ShapeDtypeStruct((N, 1, Cp), jnp.float32),
        grid_spec=pltpu.PrefetchScalarGridSpec(
            num_scalar_prefetch=0,
            grid=(N, Cp // tc),
            in_specs=[pl.BlockSpec((1, HWp, tc), lambda n, j: (n, 0, j))],
            out_specs=pl.BlockSpec((1, 1, tc), lambda n, j: (n, 0, j)),
        ),
        compiler_params=pltpu.CompilerParams(
            dimension_semantics=("parallel", "parallel"),
        ),
    )(xr)
    return out.reshape(N, Cp)[:, :C]


# -----------------------------------------------------------------------------
# Deterministic parameters (He-normal convs, PyTorch-default BatchNorm, folded for eval).
# -----------------------------------------------------------------------------
def make_bottleneck_params(inplanes, planes, expansion, seed=0):
    key = jax.random.PRNGKey(seed)

    def he(k, shape, fan_in):
        return jax.random.normal(k, shape, jnp.float32) * jnp.sqrt(2.0 / fan_in)

    def bn_fold(c):
        # Eval-mode BatchNorm2d with default init: gamma=1, beta=0, mean=0, var=1.
        eps = 1e-5
        gamma = jnp.ones((c,), jnp.float32)
        beta = jnp.zeros((c,), jnp.float32)
        mean = jnp.zeros((c,), jnp.float32)
        var = jnp.ones((c,), jnp.float32)
        scale = gamma * jax.lax.rsqrt(var + eps)
        bias = beta - mean * scale
        return scale, bias

    k1, k2, k3 = jax.random.split(key, 3)
    w1 = he(k1, (inplanes, planes), inplanes)            # 1x1 conv as (Cin, Cout)
    w2 = he(k2, (3, 3, planes, planes), 9 * planes)      # 3x3 conv, HWIO
    w3 = he(k3, (planes, planes * expansion), planes)    # 1x1 conv as (Cin, Cout)

    s1, b1 = bn_fold(planes)
    s2, b2 = bn_fold(planes)
    s3, b3 = bn_fold(planes * expansion)

    # Fold BN scale into conv weights; only a bias remains for the kernel epilogues.
    return {
        "w1": w1 * s1[None, :],                  "b1": b1,
        "w2": w2 * s2[None, None, None, :],      "b2": b2,
        "w3": w3 * s3[None, :],                  "b3": b3,
    }


# -----------------------------------------------------------------------------
# Forward pass (matches _Bottleneck.forward; BN is eval-mode, folded)
# -----------------------------------------------------------------------------
def bottleneck_forward(params, x_nchw, *, stride):
    # x_nchw: (N, C, H, W) like PyTorch; compute in NHWC.
    x = jnp.transpose(x_nchw, (0, 2, 3, 1))
    N, H, W, Cin = x.shape

    # conv1 (1x1) + bn1 + relu
    y = matmul_bias_act(x.reshape(N * H * W, Cin), params["w1"], params["b1"], relu=True)
    y = y.reshape(N, H, W, -1)

    # conv2 (3x3, stride, pad=1) + bn2 + relu
    y = conv3x3_bn_relu(y, params["w2"], params["b2"], stride)

    # conv3 (1x1, expansion) + bn3 + relu
    N2, Ho, Wo, C2 = y.shape
    y = matmul_bias_act(y.reshape(N2 * Ho * Wo, C2), params["w3"], params["b3"], relu=True)
    y = y.reshape(N2, Ho, Wo, -1)

    # avgpool(1) + view(N, -1)
    return global_avgpool(y)


if __name__ == "__main__":
    # TODO(synk): BatchNorm is folded in eval mode (running stats); train-mode statistics
    # are not modelled.  Weights are deterministic He-normal, not a pretrained checkpoint.
    inplanes, planes, stride, expansion = 64, 32, 2, 4
    N, H, W = 2, 16, 16

    key = jax.random.PRNGKey(0)
    x = jax.random.normal(key, (N, inplanes, H, W), jnp.float32)
    params = make_bottleneck_params(inplanes, planes, expansion, seed=0)

    fwd = jax.jit(functools.partial(bottleneck_forward, stride=stride))
    out = fwd(params, x)
    jax.block_until_ready(out)

    assert out.shape == (N, planes * expansion), out.shape
    assert bool(jnp.all(jnp.isfinite(out)))
    print("KERNEL_OK")
</pallas_src>

<mosaic_0001>
module attributes {stable_mosaic.version = 11 : i64} {
  func.func @_matmul_bias_act_kernel(%arg0: i32, %arg1: i32, %arg2: i32, %arg3: memref<256x128xbf16, #tpu.memory_space<vmem>>, %arg4: memref<128x128xbf16, #tpu.memory_space<vmem>>, %arg5: memref<1x128xf32, #tpu.memory_space<vmem>>, %arg6: memref<256x128xbf16, #tpu.memory_space<vmem>>, %arg7: memref<256x128xf32, #tpu.memory_space<vmem>>) attributes {dimension_semantics = [#tpu.dimension_semantics<parallel>, #tpu.dimension_semantics<parallel>, #tpu.dimension_semantics<arbitrary>], iteration_bounds = array<i64: 2, 1, 1>, scalar_prefetch = 0 : i64, scratch_operands = 1 : i64, tpu.core_type = #tpu.core_type<tc>, window_params = [{transform_indices = @transform_0, window_bounds = array<i64: 256, 128>}, {transform_indices = @transform_1, window_bounds = array<i64: 128, 128>}, {transform_indices = @transform_2, window_bounds = array<i64: 1, 128>}, {transform_indices = @transform_3, window_bounds = array<i64: 256, 128>}]} {
    %c0_i32 = arith.constant 0 : i32
    %0 = arith.cmpi eq, %arg2, %c0_i32 : i32
    %1 = arith.extui %0 : i1 to i32
    %c0_i32_0 = arith.constant 0 : i32
    %2 = arith.cmpi ne, %1, %c0_i32_0 : i32
    scf.if %2 {
      %cst_10 = arith.constant 0.000000e+00 : f32
      %12 = vector.broadcast %cst_10 : f32 to vector<256x128xf32>
      %c0_11 = arith.constant 0 : index
      %c0_12 = arith.constant 0 : index
      %13 = vector.load %arg7[%c0_11, %c0_12] : memref<256x128xf32, #tpu.memory_space<vmem>>, vector<256x128xf32>
      tpu.vector_store %arg7[%c0_11, %c0_12], %12 {strides = array<i32>} : memref<256x128xf32, #tpu.memory_space<vmem>>, vector<256x128xf32>,
    } else {
    }
    %c0 = arith.constant 0 : index
    %c0_1 = arith.constant 0 : index
    %3 = vector.load %arg7[%c0, %c0_1] : memref<256x128xf32, #tpu.memory_space<vmem>>, vector<256x128xf32>
    %c0_2 = arith.constant 0 : index
    %c0_3 = arith.constant 0 : index
    %4 = vector.load %arg3[%c0_2, %c0_3] : memref<256x128xbf16, #tpu.memory_space<vmem>>, vector<256x128xbf16>
    %c0_4 = arith.constant 0 : index
    %c0_5 = arith.constant 0 : index
    %5 = vector.load %arg4[%c0_4, %c0_5] : memref<128x128xbf16, #tpu.memory_space<vmem>>, vector<128x128xbf16>
    %cst = arith.constant dense<0.000000e+00> : vector<256x128xf32>
    %6 = tpu.matmul %4, %5, %cst {dimension_numbers = #tpu.dot_dimension_numbers<[1], [0], [0], [1], [0, 0, 1, 1], [], []>} : vector<256x128xbf16>, vector<128x128xbf16>, vector<256x128xf32> -> vector<256x128xf32>
    %7 = arith.addf %3, %6 : vector<256x128xf32>
    %c0_6 = arith.constant 0 : index
    %c0_7 = arith.constant 0 : index
    %8 = vector.load %arg7[%c0_6, %c0_7] : memref<256x128xf32, #tpu.memory_space<vmem>>, vector<256x128xf32>
    tpu.vector_store %arg7[%c0_6, %c0_7], %7 {strides = array<i32>} : memref<256x128xf32, #tpu.memory_space<vmem>>, vector<256x128xf32>,
    %c0_i32_8 = arith.constant 0 : i32
    %9 = arith.cmpi eq, %arg2, %c0_i32_8 : i32
    %10 = arith.extui %9 : i1 to i32
    %c0_i32_9 = arith.constant 0 : i32
    %11 = arith.cmpi ne, %10, %c0_i32_9 : i32
    scf.if %11 {
      %c0_10 = arith.constant 0 : index
      %c0_11 = arith.constant 0 : index
      %12 = vector.load %arg7[%c0_10, %c0_11] : memref<256x128xf32, #tpu.memory_space<vmem>>, vector<256x128xf32>
      %c0_12 = arith.constant 0 : index
      %c0_13 = arith.constant 0 : index
      %13 = vector.load %arg5[%c0_12, %c0_13] : memref<1x128xf32, #tpu.memory_space<vmem>>, vector<1x128xf32>
      %14 = vector.broadcast %13 : vector<1x128xf32> to vector<256x128xf32>
      %15 = arith.addf %12, %14 : vector<256x128xf32>
      %cst_14 = arith.constant 0.000000e+00 : f32
      %16 = vector.broadcast %cst_14 : f32 to vector<256x128xf32>
      %17 = arith.maximumf %15, %16 : vector<256x128xf32>
      %18 = arith.truncf %17 : vector<256x128xf32> to vector<256x128xbf16>
      %c0_15 = arith.constant 0 : index
      %c0_16 = arith.constant 0 : index
      %19 = vector.load %arg6[%c0_15, %c0_16] : memref<256x128xbf16, #tpu.memory_space<vmem>>, vector<256x128xbf16>
      tpu.vector_store %arg6[%c0_15, %c0_16], %18 {strides = array<i32>} : memref<256x128xbf16, #tpu.memory_space<vmem>>, vector<256x128xbf16>,
    } else {
    }
    return
  }
  func.func @transform_0(%arg0: i32, %arg1: i32, %arg2: i32) -> (i32, i32) {
    %c0_i32 = arith.constant 0 : i32
    return %arg0, %arg2 : i32, i32
  }
  func.func @transform_1(%arg0: i32, %arg1: i32, %arg2: i32) -> (i32, i32) {
    %c0_i32 = arith.constant 0 : i32
    return %arg2, %arg1 : i32, i32
  }
  func.func @transform_2(%arg0: i32, %arg1: i32, %arg2: i32) -> (i32, i32) {
    %c0_i32 = arith.constant 0 : i32
    %c0_i32_0 = arith.constant 0 : i32
    return %c0_i32, %arg1 : i32, i32
  }
  func.func @transform_3(%arg0: i32, %arg1: i32, %arg2: i32) -> (i32, i32) {
    %c0_i32 = arith.constant 0 : i32
    return %arg0, %arg1 : i32, i32
  }
}

module attributes {stable_mosaic.version = 11 : i64} {
  func.func @_conv3x3_bias_relu_kernel(%arg0: i32, %arg1: i32, %arg2: memref<4x9x9x32xbf16, #tpu.memory_space<vmem>>, %arg3: memref<9x32x128xbf16, #tpu.memory_space<vmem>>, %arg4: memref<1x128xf32, #tpu.memory_space<vmem>>, %arg5: memref<1x64x128xbf16, #tpu.memory_space<vmem>>) attributes {dimension_semantics = [#tpu.dimension_semantics<parallel>, #tpu.dimension_semantics<parallel>], iteration_bounds = array<i64: 2, 1>, scalar_prefetch = 0 : i64, scratch_operands = 0 : i64, tpu.core_type = #tpu.core_type<tc>, window_params = [{transform_indices = @transform_0, window_bounds = array<i64: 4, 9, 9, 32>}, {transform_indices = @transform_1, window_bounds = array<i64: 9, 32, 128>}, {transform_indices = @transform_2, window_bounds = array<i64: 1, 128>}, {transform_indices = @transform_3, window_bounds = array<i64: 1, 64, 128>}]} {
    %cst = arith.constant 0.000000e+00 : f32
    %0 = vector.broadcast %cst : f32 to vector<64x128xf32>
    %c0 = arith.constant 0 : index
    %c0_0 = arith.constant 0 : index
    %c0_1 = arith.constant 0 : index
    %c0_2 = arith.constant 0 : index
    %1 = vector.load %arg2[%c0, %c0_0, %c0_1, %c0_2] : memref<4x9x9x32xbf16, #tpu.memory_space<vmem>>, vector<1x9x9x32xbf16>
    %2 = vector.shape_cast %1 : vector<1x9x9x32xbf16> to vector<9x9x32xbf16>
    %3 = vector.extract_strided_slice %2 {offsets = [0, 0, 0], sizes = [8, 8, 32], strides = [1, 1, 1]} : vector<9x9x32xbf16> to vector<8x8x32xbf16>
    %4 = vector.shape_cast %3 : vector<8x8x32xbf16> to vector<64x32xbf16>
    %c0_3 = arith.constant 0 : index
    %c0_4 = arith.constant 0 : index
    %c0_5 = arith.constant 0 : index
    %5 = vector.load %arg3[%c0_3, %c0_4, %c0_5] : memref<9x32x128xbf16, #tpu.memory_space<vmem>>, vector<1x32x128xbf16>
    %6 = vector.shape_cast %5 : vector<1x32x128xbf16> to vector<32x128xbf16>
    %cst_6 = arith.constant dense<0.000000e+00> : vector<64x128xf32>
    %7 = tpu.matmul %4, %6, %cst_6 {dimension_numbers = #tpu.dot_dimension_numbers<[1], [0], [0], [1], [0, 0, 1, 1], [], []>} : vector<64x32xbf16>, vector<32x128xbf16>, vector<64x128xf32> -> vector<64x128xf32>
    %8 = arith.addf %0, %7 : vector<64x128xf32>
    %c1 = arith.constant 1 : index
    %c0_7 = arith.constant 0 : index
    %c0_8 = arith.constant 0 : index
    %c0_9 = arith.constant 0 : index
    %9 = vector.load %arg2[%c1, %c0_7, %c0_8, %c0_9] : memref<4x9x9x32xbf16, #tpu.memory_space<vmem>>, vector<1x9x9x32xbf16>
    %10 = vector.shape_cast %9 : vector<1x9x9x32xbf16> to vector<9x9x32xbf16>
    %11 = vector.extract_strided_slice %10 {offsets = [0, 0, 0], sizes = [8, 8, 32], strides = [1, 1, 1]} : vector<9x9x32xbf16> to vector<8x8x32xbf16>
    %12 = vector.shape_cast %11 : vector<8x8x32xbf16> to vector<64x32xbf16>
    %c1_10 = arith.constant 1 : index
    %c0_11 = arith.constant 0 : index
    %c0_12 = arith.constant 0 : index
    %13 = vector.load %arg3[%c1_10, %c0_11, %c0_12] : memref<9x32x128xbf16, #tpu.memory_space<vmem>>, vector<1x32x128xbf16>
    %14 = vector.shape_cast %13 : vector<1x32x128xbf16> to vector<32x128xbf16>
    %cst_13 = arith.constant dense<0.000000e+00> : vector<64x128xf32>
    %15 = tpu.matmul %12, %14, %cst_13 {dimension_numbers = #tpu.dot_dimension_numbers<[1], [0], [0], [1], [0, 0, 1, 1], [], []>} : vector<64x32xbf16>, vector<32x128xbf16>, vector<64x128xf32> -> vector<64x128xf32>
    %16 = arith.addf %8, %15 : vector<64x128xf32>
    %c0_14 = arith.constant 0 : index
    %c0_15 = arith.constant 0 : index
    %c0_16 = arith.constant 0 : index
    %c0_17 = arith.constant 0 : index
    %17 = vector.load %arg2[%c0_14, %c0_15, %c0_16, %c0_17] : memref<4x9x9x32xbf16, #tpu.memory_space<vmem>>, vector<1x9x9x32xbf16>
    %18 = vector.shape_cast %17 : vector<1x9x9x32xbf16> to vector<9x9x32xbf16>
    %19 = vector.extract_strided_slice %18 {offsets = [0, 1, 0], sizes = [8, 8, 32], strides = [1, 1, 1]} : vector<9x9x32xbf16> to vector<8x8x32xbf16>
    %20 = vector.shape_cast %19 : vector<8x8x32xbf16> to vector<64x32xbf16>
    %c2 = arith.constant 2 : index
    %c0_18 = arith.constant 0 : index
    %c0_19 = arith.constant 0 : index
    %21 = vector.load %arg3[%c2, %c0_18, %c0_19] : memref<9x32x128xbf16, #tpu.memory_space<vmem>>, vector<1x32x128xbf16>
    %22 = vector.shape_cast %21 : vector<1x32x128xbf16> to vector<32x128xbf16>
    %cst_20 = arith.constant dense<0.000000e+00> : vector<64x128xf32>
    %23 = tpu.matmul %20, %22, %cst_20 {dimension_numbers = #tpu.dot_dimension_numbers<[1], [0], [0], [1], [0, 0, 1, 1], [], []>} : vector<64x32xbf16>, vector<32x128xbf16>, vector<64x128xf32> -> vector<64x128xf32>
    %24 = arith.addf %16, %23 : vector<64x128xf32>
    %c2_21 = arith.constant 2 : index
    %c0_22 = arith.constant 0 : index
    %c0_23 = arith.constant 0 : index
    %c0_24 = arith.constant 0 : index
    %25 = vector.load %arg2[%c2_21, %c0_22, %c0_23, %c0_24] : memref<4x9x9x32xbf16, #tpu.memory_space<vmem>>, vector<1x9x9x32xbf16>
    %26 = vector.shape_cast %25 : vector<1x9x9x32xbf16> to vector<9x9x32xbf16>
    %27 = vector.extract_strided_slice %26 {offsets = [0, 0, 0], sizes = [8, 8, 32], strides = [1, 1, 1]} : vector<9x9x32xbf16> to vector<8x8x32xbf16>
    %28 = vector.shape_cast %27 : vector<8x8x32xbf16> to vector<64x32xbf16>
    %c3 = arith.constant 3 : index
    %c0_25 = arith.constant 0 : index
    %c0_26 = arith.constant 0 : index
    %29 = vector.load %arg3[%c3, %c0_25, %c0_26] : memref<9x32x128xbf16, #tpu.memory_space<vmem>>, vector<1x32x128xbf16>
    %30 = vector.shape_cast %29 : vector<1x32x128xbf16> to vector<32x128xbf16>
    %cst_27 = arith.constant dense<0.000000e+00> : vector<64x128xf32>
    %31 = tpu.matmul %28, %30, %cst_27 {dimension_numbers = #tpu.dot_dimension_numbers<[1], [0], [0], [1], [0, 0, 1, 1], [], []>} : vector<64x32xbf16>, vector<32x128xbf16>, vector<64x128xf32> -> vector<64x128xf32>
    %32 = arith.addf %24, %31 : vector<64x128xf32>
    %c3_28 = arith.constant 3 : index
    %c0_29 = arith.constant 0 : index
    %c0_30 = arith.constant 0 : index
    %c0_31 = arith.constant 0 : index
    %33 = vector.load %arg2[%c3_28, %c0_29, %c0_30, %c0_31] : memref<4x9x9x32xbf16, #tpu.memory_space<vmem>>, vector<1x9x9x32xbf16>
    %34 = vector.shape_cast %33 : vector<1x9x9x32xbf16> to vector<9x9x32xbf16>
    %35 = vector.extract_strided_slice %34 {offsets = [0, 0, 0], sizes = [8, 8, 32], strides = [1, 1, 1]} : vector<9x9x32xbf16> to vector<8x8x32xbf16>
    %36 = vector.shape_cast %35 : vector<8x8x32xbf16> to vector<64x32xbf16>
    %c4 = arith.constant 4 : index
    %c0_32 = arith.constant 0 : index
    %c0_33 = arith.constant 0 : index
    %37 = vector.load %arg3[%c4, %c0_32, %c0_33] : memref<9x32x128xbf16, #tpu.memory_space<vmem>>, vector<1x32x128xbf16>
    %38 = vector.shape_cast %37 : vector<1x32x128xbf16> to vector<32x128xbf16>
    %cst_34 = arith.constant dense<0.000000e+00> : vector<64x128xf32>
    %39 = tpu.matmul %36, %38, %cst_34 {dimension_numbers = #tpu.dot_dimension_numbers<[1], [0], [0], [1], [0, 0, 1, 1], [], []>} : vector<64x32xbf16>, vector<32x128xbf16>, vector<64x128xf32> -> vector<64x128xf32>
    %40 = arith.addf %32, %39 : vector<64x128xf32>
    %c2_35 = arith.constant 2 : index
    %c0_36 = arith.constant 0 : index
    %c0_37 = arith.constant 0 : index
    %c0_38 = arith.constant 0 : index
    %41 = vector.load %arg2[%c2_35, %c0_36, %c0_37, %c0_38] : memref<4x9x9x32xbf16, #tpu.memory_space<vmem>>, vector<1x9x9x32xbf16>
    %42 = vector.shape_cast %41 : vector<1x9x9x32xbf16> to vector<9x9x32xbf16>
    %43 = vector.extract_strided_slice %42 {offsets = [0, 1, 0], sizes = [8, 8, 32], strides = [1, 1, 1]} : vector<9x9x32xbf16> to vector<8x8x32xbf16>
    %44 = vector.shape_cast %43 : vector<8x8x32xbf16> to vector<64x32xbf16>
    %c5 = arith.constant 5 : index
    %c0_39 = arith.constant 0 : index
    %c0_40 = arith.constant 0 : index
    %45 = vector.load %arg3[%c5, %c0_39, %c0_40] : memref<9x32x128xbf16, #tpu.memory_space<vmem>>, vector<1x32x128xbf16>
    %46 = vector.shape_cast %45 : vector<1x32x128xbf16> to vector<32x128xbf16>
    %cst_41 = arith.constant dense<0.000000e+00> : vector<64x128xf32>
    %47 = tpu.matmul %44, %46, %cst_41 {dimension_numbers = #tpu.dot_dimension_numbers<[1], [0], [0], [1], [0, 0, 1, 1], [], []>} : vector<64x32xbf16>, vector<32x128xbf16>, vector<64x128xf32> -> vector<64x128xf32>
    %48 = arith.addf %40, %47 : vector<64x128xf32>
    %c0_42 = arith.constant 0 : index
    %c0_43 = arith.constant 0 : index
    %c0_44 = arith.constant 0 : index
    %c0_45 = arith.constant 0 : index
    %49 = vector.load %arg2[%c0_42, %c0_43, %c0_44, %c0_45] : memref<4x9x9x32xbf16, #tpu.memory_space<vmem>>, vector<1x9x9x32xbf16>
    %50 = vector.shape_cast %49 : vector<1x9x9x32xbf16> to vector<9x9x32xbf16>
    %51 = vector.extract_strided_slice %50 {offsets = [1, 0, 0], sizes = [8, 8, 32], strides = [1, 1, 1]} : vector<9x9x32xbf16> to vector<8x8x32xbf16>
    %52 = vector.shape_cast %51 : vector<8x8x32xbf16> to vector<64x32xbf16>
    %c6 = arith.constant 6 : index
    %c0_46 = arith.constant 0 : index
    %c0_47 = arith.constant 0 : index
    %53 = vector.load %arg3[%c6, %c0_46, %c0_47] : memref<9x32x128xbf16, #tpu.memory_space<vmem>>, vector<1x32x128xbf16>
    %54 = vector.shape_cast %53 : vector<1x32x128xbf16> to vector<32x128xbf16>
    %cst_48 = arith.constant dense<0.000000e+00> : vector<64x128xf32>
    %55 = tpu.matmul %52, %54, %cst_48 {dimension_numbers = #tpu.dot_dimension_numbers<[1], [0], [0], [1], [0, 0, 1, 1], [], []>} : vector<64x32xbf16>, vector<32x128xbf16>, vector<64x128xf32> -> vector<64x128xf32>
    %56 = arith.addf %48, %55 : vector<64x128xf32>
    %c1_49 = arith.constant 1 : index
    %c0_50 = arith.constant 0 : index
    %c0_51 = arith.constant 0 : index
    %c0_52 = arith.constant 0 : index
    %57 = vector.load %arg2[%c1_49, %c0_50, %c0_51, %c0_52] : memref<4x9x9x32xbf16, #tpu.memory_space<vmem>>, vector<1x9x9x32xbf16>
    %58 = vector.shape_cast %57 : vector<1x9x9x32xbf16> to vector<9x9x32xbf16>
    %59 = vector.extract_strided_slice %58 {offsets = [1, 0, 0], sizes = [8, 8, 32], strides = [1, 1, 1]} : vector<9x9x32xbf16> to vector<8x8x32xbf16>
    %60 = vector.shape_cast %59 : vector<8x8x32xbf16> to vector<64x32xbf16>
    %c7 = arith.constant 7 : index
    %c0_53 = arith.constant 0 : index
    %c0_54 = arith.constant 0 : index
    %61 = vector.load %arg3[%c7, %c0_53, %c0_54] : memref<9x32x128xbf16, #tpu.memory_space<vmem>>, vector<1x32x128xbf16>
    %62 = vector.shape_cast %61 : vector<1x32x128xbf16> to vector<32x128xbf16>
    %cst_55 = arith.constant dense<0.000000e+00> : vector<64x128xf32>
    %63 = tpu.matmul %60, %62, %cst_55 {dimension_numbers = #tpu.dot_dimension_numbers<[1], [0], [0], [1], [0, 0, 1, 1], [], []>} : vector<64x32xbf16>, vector<32x128xbf16>, vector<64x128xf32> -> vector<64x128xf32>
    %64 = arith.addf %56, %63 : vector<64x128xf32>
    %c0_56 = arith.constant 0 : index
    %c0_57 = arith.constant 0 : index
    %c0_58 = arith.constant 0 : index
    %c0_59 = arith.constant 0 : index
    %65 = vector.load %arg2[%c0_56, %c0_57, %c0_58, %c0_59] : memref<4x9x9x32xbf16, #tpu.memory_space<vmem>>, vector<1x9x9x32xbf16>
    %66 = vector.shape_cast %65 : vector<1x9x9x32xbf16> to vector<9x9x32xbf16>
    %67 = vector.extract_strided_slice %66 {offsets = [1, 1, 0], sizes = [8, 8, 32], strides = [1, 1, 1]} : vector<9x9x32xbf16> to vector<8x8x32xbf16>
    %68 = vector.shape_cast %67 : vector<8x8x32xbf16> to vector<64x32xbf16>
    %c8 = arith.constant 8 : index
    %c0_60 = arith.constant 0 : index
    %c0_61 = arith.constant 0 : index
    %69 = vector.load %arg3[%c8, %c0_60, %c0_61] : memref<9x32x128xbf16, #tpu.memory_space<vmem>>, vector<1x32x128xbf16>
    %70 = vector.shape_cast %69 : vector<1x32x128xbf16> to vector<32x128xbf16>
    %cst_62 = arith.constant dense<0.000000e+00> : vector<64x128xf32>
    %71 = tpu.matmul %68, %70, %cst_62 {dimension_numbers = #tpu.dot_dimension_numbers<[1], [0], [0], [1], [0, 0, 1, 1], [], []>} : vector<64x32xbf16>, vector<32x128xbf16>, vector<64x128xf32> -> vector<64x128xf32>
    %72 = arith.addf %64, %71 : vector<64x128xf32>
    %c0_63 = arith.constant 0 : index
    %c0_64 = arith.constant 0 : index
    %73 = vector.load %arg4[%c0_63, %c0_64] : memref<1x128xf32, #tpu.memory_space<vmem>>, vector<1x128xf32>
    %74 = vector.broadcast %73 : vector<1x128xf32> to vector<64x128xf32>
    %75 = arith.addf %72, %74 : vector<64x128xf32>
    %cst_65 = arith.constant 0.000000e+00 : f32
    %76 = vector.broadcast %cst_65 : f32 to vector<64x128xf32>
    %77 = arith.maximumf %75, %76 : vector<64x128xf32>
    %78 = arith.truncf %77 : vector<64x128xf32> to vector<64x128xbf16>
    %c0_66 = arith.constant 0 : index
    %c0_67 = arith.constant 0 : index
    %c0_68 = arith.constant 0 : index
    %79 = vector.load %arg5[%c0_66, %c0_67, %c0_68] : memref<1x64x128xbf16, #tpu.memory_space<vmem>>, vector<1x64x128xbf16>
    %80 = vector.shape_cast %79 : vector<1x64x128xbf16> to vector<64x128xbf16>
    %81 = vector.shape_cast %78 : vector<64x128xbf16> to vector<1x64x128xbf16>
    tpu.vector_store %arg5[%c0_66, %c0_67, %c0_68], %81 {strides = array<i32>} : memref<1x64x128xbf16, #tpu.memory_space<vmem>>, vector<1x64x128xbf16>,
    return
  }
  func.func @transform_0(%arg0: i32, %arg1: i32) -> (i32, i32, i32, i32) {
    %c0_i32 = arith.constant 0 : i32
    %c0_i32_0 = arith.constant 0 : i32
    %c0_i32_1 = arith.constant 0 : i32
    %c0_i32_2 = arith.constant 0 : i32
    return %arg0, %c0_i32, %c0_i32_0, %c0_i32_1 : i32, i32, i32, i32
  }
  func.func @transform_1(%arg0: i32, %arg1: i32) -> (i32, i32, i32) {
    %c0_i32 = arith.constant 0 : i32
    %c0_i32_0 = arith.constant 0 : i32
    %c0_i32_1 = arith.constant 0 : i32
    return %c0_i32, %c0_i32_0, %arg1 : i32, i32, i32
  }
  func.func @transform_2(%arg0: i32, %arg1: i32) -> (i32, i32) {
    %c0_i32 = arith.constant 0 : i32
    %c0_i32_0 = arith.constant 0 : i32
    return %c0_i32, %arg1 : i32, i32
  }
  func.func @transform_3(%arg0: i32, %arg1: i32) -> (i32, i32, i32) {
    %c0_i32 = arith.constant 0 : i32
    %c0_i32_0 = arith.constant 0 : i32
    return %arg0, %c0_i32, %arg1 : i32, i32, i32
  }
}

module attributes {stable_mosaic.version = 11 : i64} {
  func.func @_matmul_bias_act_kernel(%arg0: i32, %arg1: i32, %arg2: i32, %arg3: memref<128x128xbf16, #tpu.memory_space<vmem>>, %arg4: memref<128x128xbf16, #tpu.memory_space<vmem>>, %arg5: memref<1x128xf32, #tpu.memory_space<vmem>>, %arg6: memref<128x128xbf16, #tpu.memory_space<vmem>>, %arg7: memref<128x128xf32, #tpu.memory_space<vmem>>) attributes {dimension_semantics = [#tpu.dimension_semantics<parallel>, #tpu.dimension_semantics<parallel>, #tpu.dimension_semantics<arbitrary>], iteration_bounds = array<i64: 1, 1, 1>, scalar_prefetch = 0 : i64, scratch_operands = 1 : i64, tpu.core_type = #tpu.core_type<tc>, window_params = [{transform_indices = @transform_0, window_bounds = array<i64: 128, 128>}, {transform_indices = @transform_1, window_bounds = array<i64: 128, 128>}, {transform_indices = @transform_2, window_bounds = array<i64: 1, 128>}, {transform_indices = @transform_3, window_bounds = array<i64: 128, 128>}]} {
    %c0_i32 = arith.constant 0 : i32
    %0 = arith.cmpi eq, %arg2, %c0_i32 : i32
    %1 = arith.extui %0 : i1 to i32
    %c0_i32_0 = arith.constant 0 : i32
    %2 = arith.cmpi ne, %1, %c0_i32_0 : i32
    scf.if %2 {
      %cst_10 = arith.constant 0.000000e+00 : f32
      %12 = vector.broadcast %cst_10 : f32 to vector<128x128xf32>
      %c0_11 = arith.constant 0 : index
      %c0_12 = arith.constant 0 : index
      %13 = vector.load %arg7[%c0_11, %c0_12] : memref<128x128xf32, #tpu.memory_space<vmem>>, vector<128x128xf32>
      tpu.vector_store %arg7[%c0_11, %c0_12], %12 {strides = array<i32>} : memref<128x128xf32, #tpu.memory_space<vmem>>, vector<128x128xf32>,
    } else {
    }
    %c0 = arith.constant 0 : index
    %c0_1 = arith.constant 0 : index
    %3 = vector.load %arg7[%c0, %c0_1] : memref<128x128xf32, #tpu.memory_space<vmem>>, vector<128x128xf32>
    %c0_2 = arith.constant 0 : index
    %c0_3 = arith.constant 0 : index
    %4 = vector.load %arg3[%c0_2, %c0_3] : memref<128x128xbf16, #tpu.memory_space<vmem>>, vector<128x128xbf16>
    %c0_4 = arith.constant 0 : index
    %c0_5 = arith.constant 0 : index
    %5 = vector.load %arg4[%c0_4, %c0_5] : memref<128x128xbf16, #tpu.memory_space<vmem>>, vector<128x128xbf16>
    %cst = arith.constant dense<0.000000e+00> : vector<128x128xf32>
    %6 = tpu.matmul %4, %5, %cst {dimension_numbers = #tpu.dot_dimension_numbers<[1], [0], [0], [1], [0, 0, 1, 1], [], []>} : vector<128x128xbf16>, vector<128x128xbf16>, vector<128x128xf32> -> vector<128x128xf32>
    %7 = arith.addf %3, %6 : vector<128x128xf32>
    %c0_6 = arith.constant 0 : index
    %c0_7 = arith.constant 0 : index
    %8 = vector.load %arg7[%c0_6, %c0_7] : memref<128x128xf32, #tpu.memory_space<vmem>>, vector<128x128xf32>
    tpu.vector_store %arg7[%c0_6, %c0_7], %7 {strides = array<i32>} : memref<128x128xf32, #tpu.memory_space<vmem>>, vector<128x128xf32>,
    %c0_i32_8 = arith.constant 0 : i32
    %9 = arith.cmpi eq, %arg2, %c0_i32_8 : i32
    %10 = arith.extui %9 : i1 to i32
    %c0_i32_9 = arith.constant 0 : i32
    %11 = arith.cmpi ne, %10, %c0_i32_9 : i32
    scf.if %11 {
      %c0_10 = arith.constant 0 : index
      %c0_11 = arith.constant 0 : index
      %12 = vector.load %arg7[%c0_10, %c0_11] : memref<128x128xf32, #tpu.memory_space<vmem>>, vector<128x128xf32>
      %c0_12 = arith.constant 0 : index
      %c0_13 = arith.constant 0 : index
      %13 = vector.load %arg5[%c0_12, %c0_13] : memref<1x128xf32, #tpu.memory_space<vmem>>, vector<1x128xf32>
      %14 = vector.broadcast %13 : vector<1x128xf32> to vector<128x128xf32>
      %15 = arith.addf %12, %14 : vector<128x128xf32>
      %cst_14 = arith.constant 0.000000e+00 : f32
      %16 = vector.broadcast %cst_14 : f32 to vector<128x128xf32>
      %17 = arith.maximumf %15, %16 : vector<128x128xf32>
      %18 = arith.truncf %17 : vector<128x128xf32> to vector<128x128xbf16>
      %c0_15 = arith.constant 0 : index
      %c0_16 = arith.constant 0 : index
      %19 = vector.load %arg6[%c0_15, %c0_16] : memref<128x128xbf16, #tpu.memory_space<vmem>>, vector<128x128xbf16>
      tpu.vector_store %arg6[%c0_15, %c0_16], %18 {strides = array<i32>} : memref<128x128xbf16, #tpu.memory_space<vmem>>, vector<128x128xbf16>,
    } else {
    }
    return
  }
  func.func @transform_0(%arg0: i32, %arg1: i32, %arg2: i32) -> (i32, i32) {
    %c0_i32 = arith.constant 0 : i32
    return %arg0, %arg2 : i32, i32
  }
  func.func @transform_1(%arg0: i32, %arg1: i32, %arg2: i32) -> (i32, i32) {
    %c0_i32 = arith.constant 0 : i32
    return %arg2, %arg1 : i32, i32
  }
  func.func @transform_2(%arg0: i32, %arg1: i32, %arg2: i32) -> (i32, i32) {
    %c0_i32 = arith.constant 0 : i32
    %c0_i32_0 = arith.constant 0 : i32
    return %c0_i32, %arg1 : i32, i32
  }
  func.func @transform_3(%arg0: i32, %arg1: i32, %arg2: i32) -> (i32, i32) {
    %c0_i32 = arith.constant 0 : i32
    return %arg0, %arg1 : i32, i32
  }
}

module attributes {stable_mosaic.version = 11 : i64} {
  func.func @_avgpool_kernel(%arg0: i32, %arg1: i32, %arg2: memref<1x64x128xbf16, #tpu.memory_space<vmem>>, %arg3: memref<1x1x128xf32, #tpu.memory_space<vmem>>) attributes {dimension_semantics = [#tpu.dimension_semantics<parallel>, #tpu.dimension_semantics<parallel>], iteration_bounds = array<i64: 2, 1>, scalar_prefetch = 0 : i64, scratch_operands = 0 : i64, tpu.core_type = #tpu.core_type<tc>, window_params = [{transform_indices = @transform_0, window_bounds = array<i64: 1, 64, 128>}, {transform_indices = @transform_1, window_bounds = array<i64: 1, 1, 128>}]} {
    %c0 = arith.constant 0 : index
    %c0_0 = arith.constant 0 : index
    %c0_1 = arith.constant 0 : index
    %0 = vector.load %arg2[%c0, %c0_0, %c0_1] : memref<1x64x128xbf16, #tpu.memory_space<vmem>>, vector<1x64x128xbf16>
    %1 = vector.shape_cast %0 : vector<1x64x128xbf16> to vector<64x128xbf16>
    %2 = arith.extf %1 : vector<64x128xbf16> to vector<64x128xf32>
    %cst = arith.constant dense<0.000000e+00> : vector<128xf32>
    %3 = vector.multi_reduction <add>, %2, %cst [0] : vector<64x128xf32> to vector<128xf32>
    %4 = vector.shape_cast %3 : vector<128xf32> to vector<1x128xf32>
    %cst_2 = arith.constant 1.562500e-02 : f32
    %5 = vector.broadcast %cst_2 : f32 to vector<1x128xf32>
    %6 = arith.mulf %4, %5 : vector<1x128xf32>
    %c0_3 = arith.constant 0 : index
    %c0_4 = arith.constant 0 : index
    %c0_5 = arith.constant 0 : index
    %7 = vector.load %arg3[%c0_3, %c0_4, %c0_5] : memref<1x1x128xf32, #tpu.memory_space<vmem>>, vector<1x1x128xf32>
    %8 = vector.shape_cast %7 : vector<1x1x128xf32> to vector<1x128xf32>
    %9 = vector.shape_cast %6 : vector<1x128xf32> to vector<1x1x128xf32>
    tpu.vector_store %arg3[%c0_3, %c0_4, %c0_5], %9 {strides = array<i32>} : memref<1x1x128xf32, #tpu.memory_space<vmem>>, vector<1x1x128xf32>,
    return
  }
  func.func @transform_0(%arg0: i32, %arg1: i32) -> (i32, i32, i32) {
    %c0_i32 = arith.constant 0 : i32
    %c0_i32_0 = arith.constant 0 : i32
    return %arg0, %c0_i32, %arg1 : i32, i32, i32
  }
  func.func @transform_1(%arg0: i32, %arg1: i32) -> (i32, i32, i32) {
    %c0_i32 = arith.constant 0 : i32
    %c0_i32_0 = arith.constant 0 : i32
    return %arg0, %c0_i32, %arg1 : i32, i32, i32
  }
}

</mosaic_0001>

<llo_original>
// kernel: bottleneck_forward.4
$region0: #{bottleneck_forward.4}
  #allocation0 [shape = 'u32[]', space=smem, size = 0x4, offset = 0x4, fixed_abs, tag = 'smem constant byte address 0x4 - core index']
  #allocation1 [shape = 'u32[144,128]{1,0:T(1,128)}', space=vmem, size = 0x12000, scoped, tag = 'internal scratch']
  #allocation2 [shape = 'f32[256,128]{1,0:T(8,128)}', space=vmem, size = 0x20000, scoped, tag = 'scratch operand']
  %s0 = inlined_call_operand.vmem [shape: bf16[512,128], index: 0, kind: input, shape index: {}]
  %s1 = inlined_call_operand.vmem [shape: bf16[128,128], index: 1, kind: input, shape index: {}]
  %s2 = inlined_call_operand.vmem [shape: f32[1,128], index: 2, kind: input, shape index: {}]
  %s3 = inlined_call_operand.vmem [shape: bf16[512,128], index: 3, kind: output, shape index: {}]
  %s4 = sld [smem:[#allocation0]]
  $region53: #{bottleneck_forward.4} parent=0
    _
  %s6 = ssub.s32 1, %s4
  %s7 = scalar_select 0, %s6, %s4
  loop: start=0, step=1, limit=4
  $region2: #{bottleneck_forward.4} parent=0 // loop_pre_header
    _
  $region3: #{bottleneck_forward.4} parent=0 // loop_header
    %s9 = sphi 0, %s13
    %p10 = scmp.ge.s32.totalorder %s9, 4
    %s16 = sphi 0, %s35
    %s17 = sphi 0, %s31
    %s18 = sphi 0, %s27
    %s19 = sphi 0, %s16
    %s20 = sphi 0, %s17
    %s21 = sphi 0, %s18
    %s22 = sphi 0, %s19
    %s23 = sphi 0, %s20
    %s24 = sphi 0, %s21
    %s40 = sphi 0, %s42
    %s43 = sphi 0, %s40
    %s44 = sphi 0, %s43
    %s60 = sphi 0, %s44
    %s68 = sphi 0, %s70
    %s71 = sphi 0, %s68
    %s72 = sphi 0, %s71
    %s88 = sphi 0, %s72
    %s94 = sphi 0, %s96
    %s97 = sphi 0, %s94
    %s98 = sphi 0, %s97
    %s114 = sphi 0, %s98
    %s122 = sphi 0, %s124
    %s125 = sphi 0, %s122
    %s126 = sphi 0, %s125
    %s142 = sphi 0, %s126
  $region4: #{bottleneck_forward.4} parent=0 // loop_header_branch
    %12 = sbr.rel (%p10) target = $region8
  $region5: #{bottleneck_forward.4} parent=0 // loop_body
    %s14 = ssub.s32 %s9, 1
    %s15 = ssub.s32 %s9, 2
    %s25 = sadd.s32 1, %s18
    %p26 = scmp.ge.s32.totalorder %s25, 1
    %s27 = scalar_select %p26, 0, %s25
    %s28 = sadd.s32 1, %s17
    %s29 = scalar_select %p26, %s28, %s17
    %p30 = scmp.ge.s32.totalorder %s29, 1
    %s31 = scalar_select %p30, 0, %s29
    %s32 = sadd.s32 1, %s16
    %s33 = scalar_select %p30, %s32, %s16
    %p34 = scmp.ge.s32.totalorder %s33, 2
    %s35 = scalar_select %p34, 0, %s33
    %s36 = ssub.s32 %s16, %s35
    %s37 = ssub.s32 %s18, %s27
    %s38 = sor.u32 %s36, %s37
    %p39 = scmp.eq.s32.totalorder %s38, 0
    %s41 = sadd.s32 %s40, 1
    %s42 = scalar_select %p39, %s40, %s41
    %p45 = pneg %p39
    %p46 = scmp.eq.s32.totalorder %s9, 1
    %p47 = por %p45, %p46
    %p48 = scmp.ne.s32.totalorder %s40, %s43
    %p49 = scmp.eq.s32.totalorder %s9, 0
    %p50 = por %p48, %p49
    %p51 = scmp.ne.s32.totalorder %s40, %s43
    %p52 = scmp.eq.s32.totalorder %s14, 1
    %p53 = por %p51, %p52
    %p54 = scmp.ne.s32.totalorder %s43, %s44
    %p55 = scmp.eq.s32.totalorder %s14, 0
    %p56 = por %p54, %p55
    %p57 = scmp.ne.s32.totalorder %s43, %s44
    %p58 = scmp.eq.s32.totalorder %s15, 1
    %p59 = por %p57, %p58
    %p61 = scmp.ne.s32.totalorder %s44, %s60
    %p62 = scmp.eq.s32.totalorder %s15, 0
    %p63 = por %p61, %p62
    %s64 = ssub.s32 %s18, %s27
    %s65 = ssub.s32 %s17, %s31
    %s66 = sor.u32 %s64, %s65
    %p67 = scmp.eq.s32.totalorder %s66, 0
    %s69 = sadd.s32 %s68, 1
    %s70 = scalar_select %p67, %s68, %s69
    %p73 = pneg %p67
    %p74 = scmp.eq.s32.totalorder %s9, 1
    %p75 = por %p73, %p74
    %p76 = scmp.ne.s32.totalorder %s68, %s71
    %p77 = scmp.eq.s32.totalorder %s9, 0
    %p78 = por %p76, %p77
    %p79 = scmp.ne.s32.totalorder %s68, %s71
    %p80 = scmp.eq.s32.totalorder %s14, 1
    %p81 = por %p79, %p80
    %p82 = scmp.ne.s32.totalorder %s71, %s72
    %p83 = scmp.eq.s32.totalorder %s14, 0
    %p84 = por %p82, %p83
    %p85 = scmp.ne.s32.totalorder %s71, %s72
    %p86 = scmp.eq.s32.totalorder %s15, 1
    %p87 = por %p85, %p86
    %p89 = scmp.ne.s32.totalorder %s72, %s88
    %p90 = scmp.eq.s32.totalorder %s15, 0
    %p91 = por %p89, %p90
    %s92 = ssub.s32 %s17, %s31
    %p93 = scmp.eq.s32.totalorder %s92, 0
    %s95 = sadd.s32 %s94, 1
    %s96 = scalar_select %p93, %s94, %s95
    %p99 = pneg %p93
    %p100 = scmp.eq.s32.totalorder %s9, 1
    %p101 = por %p99, %p100
    %p102 = scmp.ne.s32.totalorder %s94, %s97
    %p103 = scmp.eq.s32.totalorder %s9, 0
    %p104 = por %p102, %p103
    %p105 = scmp.ne.s32.totalorder %s94, %s97
    %p106 = scmp.eq.s32.totalorder %s14, 1
    %p107 = por %p105, %p106
    %p108 = scmp.ne.s32.totalorder %s97, %s98
    %p109 = scmp.eq.s32.totalorder %s14, 0
    %p110 = por %p108, %p109
    %p111 = scmp.ne.s32.totalorder %s97, %s98
    %p112 = scmp.eq.s32.totalorder %s15, 1
    %p113 = por %p111, %p112
    %p115 = scmp.ne.s32.totalorder %s98, %s114
    %p116 = scmp.eq.s32.totalorder %s15, 0
    %p117 = por %p115, %p116
    %s118 = ssub.s32 %s16, %s35
    %s119 = ssub.s32 %s17, %s31
    %s120 = sor.u32 %s118, %s119
    %p121 = scmp.eq.s32.totalorder %s120, 0
    %s123 = sadd.s32 %s122, 1
    %s124 = scalar_select %p121, %s122, %s123
    %p127 = pneg %p121
    %p128 = scmp.eq.s32.totalorder %s9, 1
    %p129 = por %p127, %p128
    %p130 = scmp.ne.s32.totalorder %s122, %s125
    %p131 = scmp.eq.s32.totalorder %s9, 0
    %p132 = por %p130, %p131
    %p133 = scmp.ne.s32.totalorder %s122, %s125
    %p134 = scmp.eq.s32.totalorder %s14, 1
    %p135 = por %p133, %p134
    %p136 = scmp.ne.s32.totalorder %s125, %s126
    %p137 = scmp.eq.s32.totalorder %s14, 0
    %p138 = por %p136, %p137
    %p139 = scmp.ne.s32.totalorder %s125, %s126
    %p140 = scmp.eq.s32.totalorder %s15, 1
    %p141 = por %p139, %p140
    %p143 = scmp.ne.s32.totalorder %s126, %s142
    %p144 = scmp.eq.s32.totalorder %s15, 0
    %p145 = por %p143, %p144
    %p146 = scmp.le.s32.totalorder 1, %s9
    %p147 = scmp.lt.s32.totalorder %s9, 3
    %p148 = pnand %p146, %p147
    %p149 = pneg %p148
    // Predicated region
    $region9: #{bottleneck_forward.4} parent=5 // pred_check
      _
    $region10: #{bottleneck_forward.4} parent=5 // pred_check_branch
      %151 = sbr.rel (%p148) target = $region12
    $region11: #{bottleneck_forward.4} parent=5 // pred_region
      %s152 = ssub.s32 %s9, 1
      // Predicated region
      $region13: #{bottleneck_forward.4} parent=11 // pred_check
        %p153 = pneg %p84
      $region14: #{bottleneck_forward.4} parent=11 // pred_check_branch
        %155 = sbr.rel (%p153) target = $region16
      $region15: #{bottleneck_forward.4} parent=11 // pred_region
        %s156 = smul.u32 16, %s21
        %p157 = scmp.lt.s32.totalorder %s156, 15
        %s158 = scalar_select %p157, %s156, 15
        %p159 = scmp.lt.s32.totalorder %s20, 0
        %s160 = scalar_select %p159, %s20, 0
        %s161 = sadd.s32 %s160, %s158
        %s162 = smul.addr %s161, 4
        %s163 = scalar_lea.vmem %s1, %s162
        %s164 = smul.u32 16, %s21
      $region16: #{bottleneck_forward.4} parent=11 // pred_fallthru
        _
      // Predicated region
      $region17: #{bottleneck_forward.4} parent=11 // pred_check
        %p165 = pneg %p110
      $region18: #{bottleneck_forward.4} parent=11 // pred_check_branch
        %167 = sbr.rel (%p165) target = $region20
      $region19: #{bottleneck_forward.4} parent=11 // pred_region
        %p168 = scmp.lt.s32.totalorder %s20, 0
        %s169 = scalar_select %p168, %s20, 0
        %s170 = scalar_lea.vmem %s2, %s169
      $region20: #{bottleneck_forward.4} parent=11 // pred_fallthru
        _
    $region12: #{bottleneck_forward.4} parent=5 // pred_fallthru
      _
    %p171 = scmp.lt.s32.totalorder %s9, 2
    // Predicated region
    $region21: #{bottleneck_forward.4} parent=5 // pred_check
      %p172 = pneg %p171
    $region22: #{bottleneck_forward.4} parent=5 // pred_check_branch
      %174 = sbr.rel (%p172) target = $region24
    $region23: #{bottleneck_forward.4} parent=5 // pred_region
      // Predicated region
      $region25: #{bottleneck_forward.4} parent=23 // pred_check
        %p175 = pneg %p50
      $region26: #{bottleneck_forward.4} parent=23 // pred_check_branch
        %177 = sbr.rel (%p175) target = $region28
      $region27: #{bottleneck_forward.4} parent=23 // pred_region
        %s178 = smul.u32 32, %s16
        %p179 = scmp.lt.s32.totalorder %s178, 63
        %s180 = scalar_select %p179, %s178, 63
        %p181 = scmp.lt.s32.totalorder %s18, 0
        %s182 = scalar_select %p181, %s18, 0
        %s183 = sadd.s32 %s182, %s180
        %s184 = smul.addr %s183, 4
        %s185 = scalar_lea.vmem %s0, %s184
        %s186 = smul.u32 32, %s16
      $region28: #{bottleneck_forward.4} parent=23 // pred_fallthru
        _
    $region24: #{bottleneck_forward.4} parent=5 // pred_fallthru
      _
    %p187 = scmp.le.s32.totalorder 1, %s9
    %p188 = scmp.lt.s32.totalorder %s9, 3
    %p189 = pnand %p187, %p188
    %p190 = pneg %p189
    // Predicated region
    $region29: #{bottleneck_forward.4} parent=5 // pred_check
      _
    $region30: #{bottleneck_forward.4} parent=5 // pred_check_branch
      %192 = sbr.rel (%p189) target = $region32
    $region31: #{bottleneck_forward.4} parent=5 // pred_region
      %s193 = ssub.s32 %s9, 1
      %s194 = smul.u32 32, %s19
      %p195 = scmp.lt.s32.totalorder %s194, 63
      %s196 = scalar_select %p195, %s194, 63
      %p197 = scmp.lt.s32.totalorder %s21, 0
      %s198 = scalar_select %p197, %s21, 0
      %s199 = sadd.s32 %s198, %s196
      %s200 = smul.addr %s199, 4
      %s201 = scalar_lea.vmem %s0, %s200
      %p202 = pneg %p56
      %p203 = pneg %p53
      %s204 = smul.u32 16, %s21
      %p205 = scmp.lt.s32.totalorder %s204, 15
      %s206 = scalar_select %p205, %s204, 15
      %p207 = scmp.lt.s32.totalorder %s20, 0
      %s208 = scalar_select %p207, %s20, 0
      %s209 = sadd.s32 %s208, %s206
      %s210 = smul.addr %s209, 4
      %s211 = scalar_lea.vmem %s1, %s210
      %p212 = pneg %p84
      %p213 = pneg %p81
      %p214 = scmp.lt.s32.totalorder %s20, 0
      %s215 = scalar_select %p214, %s20, 0
      %s216 = scalar_lea.vmem %s2, %s215
      %p217 = pneg %p110
      %p218 = pneg %p107
      %p219 = pneg %p138
      %p220 = pneg %p135
      %s221 = smul.u32 32, %s19
      %p222 = scmp.lt.s32.totalorder %s221, 63
      %s223 = scalar_select %p222, %s221, 63
      %p224 = scmp.lt.s32.totalorder %s20, 0
      %s225 = scalar_select %p224, %s20, 0
      %s226 = sadd.s32 %s225, %s223
      %s227 = smul.addr %s226, 4
      %s228 = scalar_lea.vmem %s3, %s227
      %s229 = smul.u32 32, %s19
      %p230 = scmp.lt.s32.totalorder %s229, 63
      %s231 = scalar_select %p230, %s229, 63
      %p232 = scmp.lt.s32.totalorder %s21, 0
      %s233 = scalar_select %p232, %s21, 0
      %s234 = sadd.s32 %s233, %s231
      %s235 = smul.addr %s234, 4
      %s236 = scalar_lea.vmem %s0, %s235
      %s237 = smul.u32 32, %s19
      %s238 = smul.u32 16, %s21
      %p239 = scmp.lt.s32.totalorder %s238, 15
      %s240 = scalar_select %p239, %s238, 15
      %p241 = scmp.lt.s32.totalorder %s20, 0
      %s242 = scalar_select %p241, %s20, 0
      %s243 = sadd.s32 %s242, %s240
      %s244 = smul.addr %s243, 4
      %s245 = scalar_lea.vmem %s1, %s244
      %s246 = smul.u32 16, %s21
      %p247 = scmp.lt.s32.totalorder %s20, 0
      %s248 = scalar_select %p247, %s20, 0
      %s249 = scalar_lea.vmem %s2, %s248
      %s250 = smul.u32 32, %s19
      %p251 = scmp.lt.s32.totalorder %s250, 63
      %s252 = scalar_select %p251, %s250, 63
      %p253 = scmp.lt.s32.totalorder %s20, 0
      %s254 = scalar_select %p253, %s20, 0
      %s255 = sadd.s32 %s254, %s252
      %s256 = smul.addr %s255, 4
      %s257 = scalar_lea.vmem %s3, %s256
      %s258 = smul.u32 32, %s19
      %p260 = scmp.eq.s32.totalorder %s21, 0
      // Predicated region
      $region33: #{bottleneck_forward.4} parent=31 // pred_check
        %p261 = pneg %p260
      $region34: #{bottleneck_forward.4} parent=31 // pred_check_branch
        %263 = sbr.rel (%p261) target = $region36
      $region35: #{bottleneck_forward.4} parent=31 // pred_region
        %264 = vst [vmem:[#allocation2] sm:$0xff] 0.0
        %265 = vst [vmem:[#allocation2 + $0x8] sm:$0xff] 0.0
        %266 = vst [vmem:[#allocation2 + $0x10] sm:$0xff] 0.0
        %267 = vst [vmem:[#allocation2 + $0x18] sm:$0xff] 0.0
        %268 = vst [vmem:[#allocation2 + $0x20] sm:$0xff] 0.0
        %269 = vst [vmem:[#allocation2 + $0x28] sm:$0xff] 0.0
        %270 = vst [vmem:[#allocation2 + $0x30] sm:$0xff] 0.0
        %271 = vst [vmem:[#allocation2 + $0x38] sm:$0xff] 0.0
        %272 = vst [vmem:[#allocation2 + $0x40] sm:$0xff] 0.0
        %273 = vst [vmem:[#allocation2 + $0x48] sm:$0xff] 0.0
        %274 = vst [vmem:[#allocation2 + $0x50] sm:$0xff] 0.0
        %275 = vst [vmem:[#allocation2 + $0x58] sm:$0xff] 0.0
        %276 = vst [vmem:[#allocation2 + $0x60] sm:$0xff] 0.0
        %277 = vst [vmem:[#allocation2 + $0x68] sm:$0xff] 0.0
        %278 = vst [vmem:[#allocation2 + $0x70] sm:$0xff] 0.0
        %279 = vst [vmem:[#allocation2 + $0x78] sm:$0xff] 0.0
        %280 = vst [vmem:[#allocation2 + $0x80] sm:$0xff] 0.0
        %281 = vst [vmem:[#allocation2 + $0x88] sm:$0xff] 0.0
        %282 = vst [vmem:[#allocation2 + $0x90] sm:$0xff] 0.0
        %283 = vst [vmem:[#allocation2 + $0x98] sm:$0xff] 0.0
        %284 = vst [vmem:[#allocation2 + $0xa0] sm:$0xff] 0.0
        %285 = vst [vmem:[#allocation2 + $0xa8] sm:$0xff] 0.0
        %286 = vst [vmem:[#allocation2 + $0xb0] sm:$0xff] 0.0
        %287 = vst [vmem:[#allocation2 + $0xb8] sm:$0xff] 0.0
        %288 = vst [vmem:[#allocation2 + $0xc0] sm:$0xff] 0.0
        %289 = vst [vmem:[#allocation2 + $0xc8] sm:$0xff] 0.0
        %290 = vst [vmem:[#allocation2 + $0xd0] sm:$0xff] 0.0
        %291 = vst [vmem:[#allocation2 + $0xd8] sm:$0xff] 0.0
        %292 = vst [vmem:[#allocation2 + $0xe0] sm:$0xff] 0.0
        %293 = vst [vmem:[#allocation2 + $0xe8] sm:$0xff] 0.0
        %294 = vst [vmem:[#allocation2 + $0xf0] sm:$0xff] 0.0
        %295 = vst [vmem:[#allocation2 + $0xf8] sm:$0xff] 0.0
      $region36: #{bottleneck_forward.4} parent=31 // pred_fallthru
        _
      %v296 = vld [vmem:[#allocation2] sm:$0xff]
      %v297 = vld [vmem:[#allocation2 + $0x8] sm:$0xff]
      %v298 = vld [vmem:[#allocation2 + $0x10] sm:$0xff]
      %v299 = vld [vmem:[#allocation2 + $0x18] sm:$0xff]
      %v300 = vld [vmem:[#allocation2 + $0x20] sm:$0xff]
      %v301 = vld [vmem:[#allocation2 + $0x28] sm:$0xff]
      %v302 = vld [vmem:[#allocation2 + $0x30] sm:$0xff]
      %v303 = vld [vmem:[#allocation2 + $0x38] sm:$0xff]
      %v304 = vld [vmem:[#allocation2 + $0x40] sm:$0xff]
      %v305 = vld [vmem:[#allocation2 + $0x48] sm:$0xff]
      %v306 = vld [vmem:[#allocation2 + $0x50] sm:$0xff]
      %v307 = vld [vmem:[#allocation2 + $0x58] sm:$0xff]
      %v308 = vld [vmem:[#allocation2 + $0x60] sm:$0xff]
      %v309 = vld [vmem:[#allocation2 + $0x68] sm:$0xff]
      %v310 = vld [vmem:[#allocation2 + $0x70] sm:$0xff]
      %v311 = vld [vmem:[#allocation2 + $0x78] sm:$0xff]
      %v312 = vld [vmem:[#allocation2 + $0x80] sm:$0xff]
      %v313 = vld [vmem:[#allocation2 + $0x88] sm:$0xff]
      %v314 = vld [vmem:[#allocation2 + $0x90] sm:$0xff]
      %v315 = vld [vmem:[#allocation2 + $0x98] sm:$0xff]
      %v316 = vld [vmem:[#allocation2 + $0xa0] sm:$0xff]
      %v317 = vld [vmem:[#allocation2 + $0xa8] sm:$0xff]
      %v318 = vld [vmem:[#allocation2 + $0xb0] sm:$0xff]
      %v319 = vld [vmem:[#allocation2 + $0xb8] sm:$0xff]
      %v320 = vld [vmem:[#allocation2 + $0xc0] sm:$0xff]
      %v321 = vld [vmem:[#allocation2 + $0xc8] sm:$0xff]
      %v322 = vld [vmem:[#allocation2 + $0xd0] sm:$0xff]
      %v323 = vld [vmem:[#allocation2 + $0xd8] sm:$0xff]
      %v324 = vld [vmem:[#allocation2 + $0xe0] sm:$0xff]
      %v325 = vld [vmem:[#allocation2 + $0xe8] sm:$0xff]
      %v326 = vld [vmem:[#allocation2 + $0xf0] sm:$0xff]
      %v327 = vld [vmem:[#allocation2 + $0xf8] sm:$0xff]
      %v328 = vld [vmem:[%s236] sm:$0xf]
      %v329 = vld [vmem:[%s236 + $0x4] sm:$0xf]
      %v330 = vld [vmem:[%s236 + $0x8] sm:$0xf]
      %v331 = vld [vmem:[%s236 + $0xc] sm:$0xf]
      %v332 = vld [vmem:[%s236 + $0x10] sm:$0xf]
      %v333 = vld [vmem:[%s236 + $0x14] sm:$0xf]
      %v334 = vld [vmem:[%s236 + $0x18] sm:$0xf]
      %v335 = vld [vmem:[%s236 + $0x1c] sm:$0xf]
      %v336 = vld [vmem:[%s236 + $0x20] sm:$0xf]
      %v337 = vld [vmem:[%s236 + $0x24] sm:$0xf]
      %v338 = vld [vmem:[%s236 + $0x28] sm:$0xf]
      %v339 = vld [vmem:[%s236 + $0x2c] sm:$0xf]
      %v340 = vld [vmem:[%s236 + $0x30] sm:$0xf]
      %v341 = vld [vmem:[%s236 + $0x34] sm:$0xf]
      %v342 = vld [vmem:[%s236 + $0x38] sm:$0xf]
      %v343 = vld [vmem:[%s236 + $0x3c] sm:$0xf]
      %v344 = vld [vmem:[%s236 + $0x40] sm:$0xf]
      %v345 = vld [vmem:[%s236 + $0x44] sm:$0xf]
      %v346 = vld [vmem:[%s236 + $0x48] sm:$0xf]
      %v347 = vld [vmem:[%s236 + $0x4c] sm:$0xf]
      %v348 = vld [vmem:[%s236 + $0x50] sm:$0xf]
      %v349 = vld [vmem:[%s236 + $0x54] sm:$0xf]
      %v350 = vld [vmem:[%s236 + $0x58] sm:$0xf]
      %v351 = vld [vmem:[%s236 + $0x5c] sm:$0xf]
      %v352 = vld [vmem:[%s236 + $0x60] sm:$0xf]
      %v353 = vld [vmem:[%s236 + $0x64] sm:$0xf]
      %v354 = vld [vmem:[%s236 + $0x68] sm:$0xf]
      %v355 = vld [vmem:[%s236 + $0x6c] sm:$0xf]
      %v356 = vld [vmem:[%s236 + $0x70] sm:$0xf]
      %v357 = vld [vmem:[%s236 + $0x74] sm:$0xf]
      %v358 = vld [vmem:[%s236 + $0x78] sm:$0xf]
      %v359 = vld [vmem:[%s236 + $0x7c] sm:$0xf]
      %v360 = vld [vmem:[%s245] sm:$0xf]
      %v361 = vld [vmem:[%s245 + $0x4] sm:$0xf]
      %v362 = vld [vmem:[%s245 + $0x8] sm:$0xf]
      %v363 = vld [vmem:[%s245 + $0xc] sm:$0xf]
      %v364 = vld [vmem:[%s245 + $0x10] sm:$0xf]
      %v365 = vld [vmem:[%s245 + $0x14] sm:$0xf]
      %v366 = vld [vmem:[%s245 + $0x18] sm:$0xf]
      %v367 = vld [vmem:[%s245 + $0x1c] sm:$0xf]
      %v368 = vld [vmem:[%s245 + $0x20] sm:$0xf]
      %v369 = vld [vmem:[%s245 + $0x24] sm:$0xf]
      %v370 = vld [vmem:[%s245 + $0x28] sm:$0xf]
      %v371 = vld [vmem:[%s245 + $0x2c] sm:$0xf]
      %v372 = vld [vmem:[%s245 + $0x30] sm:$0xf]
      %v373 = vld [vmem:[%s245 + $0x34] sm:$0xf]
      %v374 = vld [vmem:[%s245 + $0x38] sm:$0xf]
      %v375 = vld [vmem:[%s245 + $0x3c] sm:$0xf]
      %v408 = vunpack.c.l.b16 %v328
      %v409 = vunpack.c.l.b16 %v329
      %v410 = vunpack.c.l.b16 %v330
      %v411 = vunpack.c.l.b16 %v331
      %v412 = vunpack.c.l.b16 %v332
      %v413 = vunpack.c.l.b16 %v333
      %v414 = vunpack.c.l.b16 %v334
      %v415 = vunpack.c.l.b16 %v335
      %v416 = vunpack.c.l.b16 %v336
      %v417 = vunpack.c.l.b16 %v337
      %v418 = vunpack.c.l.b16 %v338
      %v419 = vunpack.c.l.b16 %v339
      %v420 = vunpack.c.l.b16 %v340
      %v421 = vunpack.c.l.b16 %v341
      %v422 = vunpack.c.l.b16 %v342
      %v423 = vunpack.c.l.b16 %v343
      %v424 = vunpack.c.l.b16 %v344
      %v425 = vunpack.c.l.b16 %v345
      %v426 = vunpack.c.l.b16 %v346
      %v427 = vunpack.c.l.b16 %v347
      %v428 = vunpack.c.l.b16 %v348
      %v429 = vunpack.c.l.b16 %v349
      %v430 = vunpack.c.l.b16 %v350
      %v431 = vunpack.c.l.b16 %v351
      %v432 = vunpack.c.l.b16 %v352
      %v433 = vunpack.c.l.b16 %v353
      %v434 = vunpack.c.l.b16 %v354
      %v435 = vunpack.c.l.b16 %v355
      %v436 = vunpack.c.l.b16 %v356
      %v437 = vunpack.c.l.b16 %v357
      %v438 = vunpack.c.l.b16 %v358
      %v439 = vunpack.c.l.b16 %v359
      %v440 = vpack.c.b16 %v409, %v408
      %v441 = vpack.c.b16 %v411, %v410
      %v442 = vpack.c.b16 %v413, %v412
      %v443 = vpack.c.b16 %v415, %v414
      %v444 = vpack.c.b16 %v417, %v416
      %v445 = vpack.c.b16 %v419, %v418
      %v446 = vpack.c.b16 %v421, %v420
      %v447 = vpack.c.b16 %v423, %v422
      %v448 = vpack.c.b16 %v425, %v424
      %v449 = vpack.c.b16 %v427, %v426
      %v450 = vpack.c.b16 %v429, %v428
      %v451 = vpack.c.b16 %v431, %v430
      %v452 = vpack.c.b16 %v433, %v432
      %v453 = vpack.c.b16 %v435, %v434
      %v454 = vpack.c.b16 %v437, %v436
      %v455 = vpack.c.b16 %v439, %v438
      %v488 = vunpack.c.l.b16 %v360
      %v489 = vunpack.c.l.b16 %v361
      %v490 = vunpack.c.l.b16 %v362
      %v491 = vunpack.c.l.b16 %v363
      %v492 = vunpack.c.l.b16 %v364
      %v493 = vunpack.c.l.b16 %v365
      %v494 = vunpack.c.l.b16 %v366
      %v495 = vunpack.c.l.b16 %v367
      %v496 = vunpack.c.l.b16 %v368
      %v497 = vunpack.c.l.b16 %v369
      %v498 = vunpack.c.l.b16 %v370
      %v499 = vunpack.c.l.b16 %v371
      %v500 = vunpack.c.l.b16 %v372
      %v501 = vunpack.c.l.b16 %v373
      %v502 = vunpack.c.l.b16 %v374
      %v503 = vunpack.c.l.b16 %v375
      %v504 = vpack.c.b16 %v489, %v488
      %v505 = vpack.c.b16 %v491, %v490
      %v506 = vpack.c.b16 %v493, %v492
      %v507 = vpack.c.b16 %v495, %v494
      %v508 = vpack.c.b16 %v497, %v496
      %v509 = vpack.c.b16 %v499, %v498
      %v510 = vpack.c.b16 %v501, %v500
      %v511 = vpack.c.b16 %v503, %v502
      %520 = vmatprep.subr.bf16.mxu0 0
      %521 = vmatpush1.bf16.msra.mxu0 %v504
      %522 = vmatprep.subr.bf16.mxu0 0
      %523 = vmatpush1.bf16.msra.mxu0 %v505
      %524 = vmatprep.subr.bf16.mxu0 0
      %525 = vmatpush1.bf16.msra.mxu0 %v506
      %526 = vmatprep.subr.bf16.mxu0 0
      %527 = vmatpush1.bf16.msra.mxu0 %v507
      %528 = vmatprep.subr.bf16.mxu0 0
      %529 = vmatpush1.bf16.msra.mxu0 %v508
      %530 = vmatprep.subr.bf16.mxu0 0
      %531 = vmatpush1.bf16.msra.mxu0 %v509
      %532 = vmatprep.subr.bf16.mxu0 0
      %533 = vmatpush1.bf16.msra.mxu0 %v510
      %534 = vmatprep.subr.bf16.mxu0 0
      %535 = vmatpush1.bf16.msra.mxu0 %v511
      %536 = vmatprep.subr.bf16.mxu0 0
      %537 = vmatpush1.bf16.msra.mxu0 0
      %538 = vmatprep.subr.bf16.mxu0 0
      %539 = vmatpush1.bf16.msra.mxu0 0
      %540 = vmatprep.subr.bf16.mxu0 0
      %541 = vmatpush1.bf16.msra.mxu0 0
      %542 = vmatprep.subr.bf16.mxu0 0
      %543 = vmatpush1.bf16.msra.mxu0 0
      %544 = vmatprep.subr.bf16.mxu0 0
      %545 = vmatpush1.bf16.msra.mxu0 0
      %546 = vmatprep.subr.bf16.mxu0 0
      %547 = vmatpush1.bf16.msra.mxu0 0
      %548 = vmatprep.subr.bf16.mxu0 0
      %549 = vmatpush1.bf16.msra.mxu0 0
      %550 = vmatprep.subr.bf16.mxu0 0
      %551 = vmatpush1.bf16.msra.mxu0 0
      %552 = vmatprep.mubr.bf16.mxu0 0
      %553 = vmatmul.mubr.bf16.gmra.mrb[0].mxu0 %v440
      %v554 = vpop.f32.mrb[0].mxu0
      %v555 = vadd.f32 0.0, %v554
      %v556 = vpop.f32.mrb[0].mxu0
      %v557 = vpop.f32.mrb[0].mxu0
      %v558 = vadd.f32 0.0, %v557
      %v559 = vpop.f32.mrb[0].mxu0
      %560 = vmatprep.mubr.bf16.mxu0 0
      %561 = vmatmul.mubr.bf16.gmra.mrb[0].mxu0 %v441
      %v562 = vpop.f32.mrb[0].mxu0
      %v563 = vadd.f32 0.0, %v562
      %v564 = vpop.f32.mrb[0].mxu0
      %v565 = vpop.f32.mrb[0].mxu0
      %v566 = vadd.f32 0.0, %v565
      %v567 = vpop.f32.mrb[0].mxu0
      %568 = vmatprep.mubr.bf16.mxu0 0
      %569 = vmatmul.mubr.bf16.gmra.mrb[0].mxu0 %v442
      %v570 = vpop.f32.mrb[0].mxu0
      %v571 = vadd.f32 0.0, %v570
      %v572 = vpop.f32.mrb[0].mxu0
      %v573 = vpop.f32.mrb[0].mxu0
      %v574 = vadd.f32 0.0, %v573
      %v575 = vpop.f32.mrb[0].mxu0
      %576 = vmatprep.mubr.bf16.mxu0 0
      %577 = vmatmul.mubr.bf16.gmra.mrb[0].mxu0 %v443
      %v578 = vpop.f32.mrb[0].mxu0
      %v579 = vadd.f32 0.0, %v578
      %v580 = vpop.f32.mrb[0].mxu0
      %v581 = vpop.f32.mrb[0].mxu0
      %v582 = vadd.f32 0.0, %v581
      %v583 = vpop.f32.mrb[0].mxu0
      %584 = vmatprep.mubr.bf16.mxu0 0
      %585 = vmatmul.mubr.bf16.gmra.mrb[0].mxu0 %v444
      %v586 = vpop.f32.mrb[0].mxu0
      %v587 = vadd.f32 0.0, %v586
      %v588 = vpop.f32.mrb[0].mxu0
      %v589 = vpop.f32.mrb[0].mxu0
      %v590 = vadd.f32 0.0, %v589
      %v591 = vpop.f32.mrb[0].mxu0
      %592 = vmatprep.mubr.bf16.mxu0 0
      %593 = vmatmul.mubr.bf16.gmra.mrb[0].mxu0 %v445
      %v594 = vpop.f32.mrb[0].mxu0
      %v595 = vadd.f32 0.0, %v594
      %v596 = vpop.f32.mrb[0].mxu0
      %v597 = vpop.f32.mrb[0].mxu0
      %v598 = vadd.f32 0.0, %v597
      %v599 = vpop.f32.mrb[0].mxu0
      %600 = vmatprep.mubr.bf16.mxu0 0
      %601 = vmatmul.mubr.bf16.gmra.mrb[0].mxu0 %v446
      %v602 = vpop.f32.mrb[0].mxu0
      %v603 = vadd.f32 0.0, %v602
      %v604 = vpop.f32.mrb[0].mxu0
      %v605 = vpop.f32.mrb[0].mxu0
      %v606 = vadd.f32 0.0, %v605
      %v607 = vpop.f32.mrb[0].mxu0
      %608 = vmatprep.mubr.bf16.mxu0 0
      %609 = vmatmul.mubr.bf16.gmra.mrb[0].mxu0 %v447
      %v610 = vpop.f32.mrb[0].mxu0
      %v611 = vadd.f32 0.0, %v610
      %v612 = vpop.f32.mrb[0].mxu0
      %v613 = vpop.f32.mrb[0].mxu0
      %v614 = vadd.f32 0.0, %v613
      %v615 = vpop.f32.mrb[0].mxu0
      %616 = vmatprep.mubr.bf16.mxu0 0
      %617 = vmatmul.mubr.bf16.gmra.mrb[0].mxu0 %v448
      %v618 = vpop.f32.mrb[0].mxu0
      %v619 = vadd.f32 0.0, %v618
      %v620 = vpop.f32.mrb[0].mxu0
      %v621 = vpop.f32.mrb[0].mxu0
      %v622 = vadd.f32 0.0, %v621
      %v623 = vpop.f32.mrb[0].mxu0
      %624 = vmatprep.mubr.bf16.mxu0 0
      %625 = vmatmul.mubr.bf16.gmra.mrb[0].mxu0 %v449
      %v626 = vpop.f32.mrb[0].mxu0
      %v627 = vadd.f32 0.0, %v626
      %v628 = vpop.f32.mrb[0].mxu0
      %v629 = vpop.f32.mrb[0].mxu0
      %v630 = vadd.f32 0.0, %v629
      %v631 = vpop.f32.mrb[0].mxu0
      %632 = vmatprep.mubr.bf16.mxu0 0
      %633 = vmatmul.mubr.bf16.gmra.mrb[0].mxu0 %v450
      %v634 = vpop.f32.mrb[0].mxu0
      %v635 = vadd.f32 0.0, %v634
      %v636 = vpop.f32.mrb[0].mxu0
      %v637 = vpop.f32.mrb[0].mxu0
      %v638 = vadd.f32 0.0, %v637
      %v639 = vpop.f32.mrb[0].mxu0
      %640 = vmatprep.mubr.bf16.mxu0 0
      %641 = vmatmul.mubr.bf16.gmra.mrb[0].mxu0 %v451
      %v642 = vpop.f32.mrb[0].mxu0
      %v643 = vadd.f32 0.0, %v642
      %v644 = vpop.f32.mrb[0].mxu0
      %v645 = vpop.f32.mrb[0].mxu0
      %v646 = vadd.f32 0.0, %v645
      %v647 = vpop.f32.mrb[0].mxu0
      %648 = vmatprep.mubr.bf16.mxu0 0
      %649 = vmatmul.mubr.bf16.gmra.mrb[0].mxu0 %v452
      %v650 = vpop.f32.mrb[0].mxu0
      %v651 = vadd.f32 0.0, %v650
      %v652 = vpop.f32.mrb[0].mxu0
      %v653 = vpop.f32.mrb[0].mxu0
      %v654 = vadd.f32 0.0, %v653
      %v655 = vpop.f32.mrb[0].mxu0
      %656 = vmatprep.mubr.bf16.mxu0 0
      %657 = vmatmul.mubr.bf16.gmra.mrb[0].mxu0 %v453
      %v658 = vpop.f32.mrb[0].mxu0
      %v659 = vadd.f32 0.0, %v658
      %v660 = vpop.f32.mrb[0].mxu0
      %v661 = vpop.f32.mrb[0].mxu0
      %v662 = vadd.f32 0.0, %v661
      %v663 = vpop.f32.mrb[0].mxu0
      %664 = vmatprep.mubr.bf16.mxu0 0
      %665 = vmatmul.mubr.bf16.gmra.mrb[0].mxu0 %v454
      %v666 = vpop.f32.mrb[0].mxu0
      %v667 = vadd.f32 0.0, %v666
      %v668 = vpop.f32.mrb[0].mxu0
      %v669 = vpop.f32.mrb[0].mxu0
      %v670 = vadd.f32 0.0, %v669
      %v671 = vpop.f32.mrb[0].mxu0
      %672 = vmatprep.mubr.bf16.mxu0 0
      %673 = vmatmul.mubr.bf16.gmra.mrb[0].mxu0 %v455
      %v674 = vpop.f32.mrb[0].mxu0
      %v675 = vadd.f32 0.0, %v674
      %v676 = vpop.f32.mrb[0].mxu0
      %v677 = vpop.f32.mrb[0].mxu0
      %v678 = vadd.f32 0.0, %v677
      %v679 = vpop.f32.mrb[0].mxu0
      %680 = vdwg.mxu0
      %v681 = vadd.f32 %v296, %v555
      %v682 = vadd.f32 %v297, %v558
      %v683 = vadd.f32 %v298, %v563
      %v684 = vadd.f32 %v299, %v566
      %v685 = vadd.f32 %v300, %v571
      %v686 = vadd.f32 %v301, %v574
      %v687 = vadd.f32 %v302, %v579
      %v688 = vadd.f32 %v303, %v582
      %v689 = vadd.f32 %v304, %v587
      %v690 = vadd.f32 %v305, %v590
      %v691 = vadd.f32 %v306, %v595
      %v692 = vadd.f32 %v307, %v598
      %v693 = vadd.f32 %v308, %v603
      %v694 = vadd.f32 %v309, %v606
      %v695 = vadd.f32 %v310, %v611
      %v696 = vadd.f32 %v311, %v614
      %v697 = vadd.f32 %v312, %v619
      %v698 = vadd.f32 %v313, %v622
      %v699 = vadd.f32 %v314, %v627
      %v700 = vadd.f32 %v315, %v630
      %v701 = vadd.f32 %v316, %v635
      %v702 = vadd.f32 %v317, %v638
      %v703 = vadd.f32 %v318, %v643
      %v704 = vadd.f32 %v319, %v646
      %v705 = vadd.f32 %v320, %v651
      %v706 = vadd.f32 %v321, %v654
      %v707 = vadd.f32 %v322, %v659
      %v708 = vadd.f32 %v323, %v662
      %v709 = vadd.f32 %v324, %v667
      %v710 = vadd.f32 %v325, %v670
      %v711 = vadd.f32 %v326, %v675
      %v712 = vadd.f32 %v327, %v678
      %713 = vst [vmem:[#allocation2] sm:$0xff] %v681
      %714 = vst [vmem:[#allocation2 + $0x8] sm:$0xff] %v682
      %715 = vst [vmem:[#allocation2 + $0x10] sm:$0xff] %v683
      %716 = vst [vmem:[#allocation2 + $0x18] sm:$0xff] %v684
      %717 = vst [vmem:[#allocation2 + $0x20] sm:$0xff] %v685
      %718 = vst [vmem:[#allocation2 + $0x28] sm:$0xff] %v686
      %719 = vst [vmem:[#allocation2 + $0x30] sm:$0xff] %v687
      %720 = vst [vmem:[#allocation2 + $0x38] sm:$0xff] %v688
      %721 = vst [vmem:[#allocation2 + $0x40] sm:$0xff] %v689
      %722 = vst [vmem:[#allocation2 + $0x48] sm:$0xff] %v690
      %723 = vst [vmem:[#allocation2 + $0x50] sm:$0xff] %v691
      %724 = vst [vmem:[#allocation2 + $0x58] sm:$0xff] %v692
      %725 = vst [vmem:[#allocation2 + $0x60] sm:$0xff] %v693
      %726 = vst [vmem:[#allocation2 + $0x68] sm:$0xff] %v694
      %727 = vst [vmem:[#allocation2 + $0x70] sm:$0xff] %v695
      %728 = vst [vmem:[#allocation2 + $0x78] sm:$0xff] %v696
      %729 = vst [vmem:[#allocation2 + $0x80] sm:$0xff] %v697
      %730 = vst [vmem:[#allocation2 + $0x88] sm:$0xff] %v698
      %731 = vst [vmem:[#allocation2 + $0x90] sm:$0xff] %v699
      %732 = vst [vmem:[#allocation2 + $0x98] sm:$0xff] %v700
      %733 = vst [vmem:[#allocation2 + $0xa0] sm:$0xff] %v701
      %734 = vst [vmem:[#allocation2 + $0xa8] sm:$0xff] %v702
      %735 = vst [vmem:[#allocation2 + $0xb0] sm:$0xff] %v703
      %736 = vst [vmem:[#allocation2 + $0xb8] sm:$0xff] %v704
      %737 = vst [vmem:[#allocation2 + $0xc0] sm:$0xff] %v705
      %738 = vst [vmem:[#allocation2 + $0xc8] sm:$0xff] %v706
      %739 = vst [vmem:[#allocation2 + $0xd0] sm:$0xff] %v707
      %740 = vst [vmem:[#allocation2 + $0xd8] sm:$0xff] %v708
      %741 = vst [vmem:[#allocation2 + $0xe0] sm:$0xff] %v709
      %742 = vst [vmem:[#allocation2 + $0xe8] sm:$0xff] %v710
      %743 = vst [vmem:[#allocation2 + $0xf0] sm:$0xff] %v711
      %744 = vst [vmem:[#allocation2 + $0xf8] sm:$0xff] %v712
      // Predicated region
      $region37: #{bottleneck_forward.4} parent=31 // pred_check
        %p745 = pneg %p260
      $region38: #{bottleneck_forward.4} parent=31 // pred_check_branch
        %747 = sbr.rel (%p745) target = $region40
      $region39: #{bottleneck_forward.4} parent=31 // pred_region
        %v748 = vld [vmem:[#allocation2] sm:$0xff]
        %v749 = vld [vmem:[#allocation2 + $0x8] sm:$0xff]
        %v750 = vld [vmem:[#allocation2 + $0x10] sm:$0xff]
        %v751 = vld [vmem:[#allocation2 + $0x18] sm:$0xff]
        %v752 = vld [vmem:[#allocation2 + $0x20] sm:$0xff]
        %v753 = vld [vmem:[#allocation2 + $0x28] sm:$0xff]
        %v754 = vld [vmem:[#allocation2 + $0x30] sm:$0xff]
        %v755 = vld [vmem:[#allocation2 + $0x38] sm:$0xff]
        %v756 = vld [vmem:[#allocation2 + $0x40] sm:$0xff]
        %v757 = vld [vmem:[#allocation2 + $0x48] sm:$0xff]
        %v758 = vld [vmem:[#allocation2 + $0x50] sm:$0xff]
        %v759 = vld [vmem:[#allocation2 + $0x58] sm:$0xff]
        %v760 = vld [vmem:[#allocation2 + $0x60] sm:$0xff]
        %v761 = vld [vmem:[#allocation2 + $0x68] sm:$0xff]
        %v762 = vld [vmem:[#allocation2 + $0x70] sm:$0xff]
        %v763 = vld [vmem:[#allocation2 + $0x78] sm:$0xff]
        %v764 = vld [vmem:[#allocation2 + $0x80] sm:$0xff]
        %v765 = vld [vmem:[#allocation2 + $0x88] sm:$0xff]
        %v766 = vld [vmem:[#allocation2 + $0x90] sm:$0xff]
        %v767 = vld [vmem:[#allocation2 + $0x98] sm:$0xff]
        %v768 = vld [vmem:[#allocation2 + $0xa0] sm:$0xff]
        %v769 = vld [vmem:[#allocation2 + $0xa8] sm:$0xff]
        %v770 = vld [vmem:[#allocation2 + $0xb0] sm:$0xff]
        %v771 = vld [vmem:[#allocation2 + $0xb8] sm:$0xff]
        %v772 = vld [vmem:[#allocation2 + $0xc0] sm:$0xff]
        %v773 = vld [vmem:[#allocation2 + $0xc8] sm:$0xff]
        %v774 = vld [vmem:[#allocation2 + $0xd0] sm:$0xff]
        %v775 = vld [vmem:[#allocation2 + $0xd8] sm:$0xff]
        %v776 = vld [vmem:[#allocation2 + $0xe0] sm:$0xff]
        %v777 = vld [vmem:[#allocation2 + $0xe8] sm:$0xff]
        %v778 = vld [vmem:[#allocation2 + $0xf0] sm:$0xff]
        %v779 = vld [vmem:[#allocation2 + $0xf8] sm:$0xff]
        %v780 = vld [vmem:[%s249] sm:$0x1]
        %v782 = vlaneseq
        %v783 = vshrl.u32 %v782, 7
        %v784 = vsub.s32 0, %v783
        %v785 = vrot.slane %v780, %v784
        %v787 = vadd.f32 %v748, %v785
        %v788 = vadd.f32 %v749, %v785
        %v789 = vadd.f32 %v750, %v785
        %v790 = vadd.f32 %v751, %v785
        %v791 = vadd.f32 %v752, %v785
        %v792 = vadd.f32 %v753, %v785
        %v793 = vadd.f32 %v754, %v785
        %v794 = vadd.f32 %v755, %v785
        %v795 = vadd.f32 %v756, %v785
        %v796 = vadd.f32 %v757, %v785
        %v797 = vadd.f32 %v758, %v785
        %v798 = vadd.f32 %v759, %v785
        %v799 = vadd.f32 %v760, %v785
        %v800 = vadd.f32 %v761, %v785
        %v801 = vadd.f32 %v762, %v785
        %v802 = vadd.f32 %v763, %v785
        %v803 = vadd.f32 %v764, %v785
        %v804 = vadd.f32 %v765, %v785
        %v805 = vadd.f32 %v766, %v785
        %v806 = vadd.f32 %v767, %v785
        %v807 = vadd.f32 %v768, %v785
        %v808 = vadd.f32 %v769, %v785
        %v809 = vadd.f32 %v770, %v785
        %v810 = vadd.f32 %v771, %v785
        %v811 = vadd.f32 %v772, %v785
        %v812 = vadd.f32 %v773, %v785
        %v813 = vadd.f32 %v774, %v785
        %v814 = vadd.f32 %v775, %v785
        %v815 = vadd.f32 %v776, %v785
        %v816 = vadd.f32 %v777, %v785
        %v817 = vadd.f32 %v778, %v785
        %v818 = vadd.f32 %v779, %v785
        %v819 = vmax.f32 %v787, 0.0
        %v820 = vmax.f32 %v788, 0.0
        %v821 = vmax.f32 %v789, 0.0
        %v822 = vmax.f32 %v790, 0.0
        %v823 = vmax.f32 %v791, 0.0
        %v824 = vmax.f32 %v792, 0.0
        %v825 = vmax.f32 %v793, 0.0
        %v826 = vmax.f32 %v794, 0.0
        %v827 = vmax.f32 %v795, 0.0
        %v828 = vmax.f32 %v796, 0.0
        %v829 = vmax.f32 %v797, 0.0
        %v830 = vmax.f32 %v798, 0.0
        %v831 = vmax.f32 %v799, 0.0
        %v832 = vmax.f32 %v800, 0.0
        %v833 = vmax.f32 %v801, 0.0
        %v834 = vmax.f32 %v802, 0.0
        %v835 = vmax.f32 %v803, 0.0
        %v836 = vmax.f32 %v804, 0.0
        %v837 = vmax.f32 %v805, 0.0
        %v838 = vmax.f32 %v806, 0.0
        %v839 = vmax.f32 %v807, 0.0
        %v840 = vmax.f32 %v808, 0.0
        %v841 = vmax.f32 %v809, 0.0
        %v842 = vmax.f32 %v810, 0.0
        %v843 = vmax.f32 %v811, 0.0
        %v844 = vmax.f32 %v812, 0.0
        %v845 = vmax.f32 %v813, 0.0
        %v846 = vmax.f32 %v814, 0.0
        %v847 = vmax.f32 %v815, 0.0
        %v848 = vmax.f32 %v816, 0.0
        %v849 = vmax.f32 %v817, 0.0
        %v850 = vmax.f32 %v818, 0.0
        %v851 = vpack.c.bf16 %v820, %v819
        %v852 = vpack.c.bf16 %v822, %v821
        %v853 = vpack.c.bf16 %v824, %v823
        %v854 = vpack.c.bf16 %v826, %v825
        %v855 = vpack.c.bf16 %v828, %v827
        %v856 = vpack.c.bf16 %v830, %v829
        %v857 = vpack.c.bf16 %v832, %v831
        %v858 = vpack.c.bf16 %v834, %v833
        %v859 = vpack.c.bf16 %v836, %v835
        %v860 = vpack.c.bf16 %v838, %v837
        %v861 = vpack.c.bf16 %v840, %v839
        %v862 = vpack.c.bf16 %v842, %v841
        %v863 = vpack.c.bf16 %v844, %v843
        %v864 = vpack.c.bf16 %v846, %v845
        %v865 = vpack.c.bf16 %v848, %v847
        %v866 = vpack.c.bf16 %v850, %v849
        %v883 = vunpack.c.l.b16 %v851
        %v884 = vunpack.c.h.b16 %v851
        %v885 = vunpack.c.l.b16 %v852
        %v886 = vunpack.c.h.b16 %v852
        %v887 = vunpack.c.l.b16 %v853
        %v888 = vunpack.c.h.b16 %v853
        %v889 = vunpack.c.l.b16 %v854
        %v890 = vunpack.c.h.b16 %v854
        %v891 = vunpack.c.l.b16 %v855
        %v892 = vunpack.c.h.b16 %v855
        %v893 = vunpack.c.l.b16 %v856
        %v894 = vunpack.c.h.b16 %v856
        %v895 = vunpack.c.l.b16 %v857
        %v896 = vunpack.c.h.b16 %v857
        %v897 = vunpack.c.l.b16 %v858
        %v898 = vunpack.c.h.b16 %v858
        %v899 = vunpack.c.l.b16 %v859
        %v900 = vunpack.c.h.b16 %v859
        %v901 = vunpack.c.l.b16 %v860
        %v902 = vunpack.c.h.b16 %v860
        %v903 = vunpack.c.l.b16 %v861
        %v904 = vunpack.c.h.b16 %v861
        %v905 = vunpack.c.l.b16 %v862
        %v906 = vunpack.c.h.b16 %v862
        %v907 = vunpack.c.l.b16 %v863
        %v908 = vunpack.c.h.b16 %v863
        %v909 = vunpack.c.l.b16 %v864
        %v910 = vunpack.c.h.b16 %v864
        %v911 = vunpack.c.l.b16 %v865
        %v912 = vunpack.c.h.b16 %v865
        %v913 = vunpack.c.l.b16 %v866
        %v914 = vunpack.c.h.b16 %v866
        %v915 = vpack.c.b16 %v883, %v883
        %v916 = vpack.c.b16 %v884, %v884
        %v917 = vpack.c.b16 %v885, %v885
        %v918 = vpack.c.b16 %v886, %v886
        %v919 = vpack.c.b16 %v887, %v887
        %v920 = vpack.c.b16 %v888, %v888
        %v921 = vpack.c.b16 %v889, %v889
        %v922 = vpack.c.b16 %v890, %v890
        %v923 = vpack.c.b16 %v891, %v891
        %v924 = vpack.c.b16 %v892, %v892
        %v925 = vpack.c.b16 %v893, %v893
        %v926 = vpack.c.b16 %v894, %v894
        %v927 = vpack.c.b16 %v895, %v895
        %v928 = vpack.c.b16 %v896, %v896
        %v929 = vpack.c.b16 %v897, %v897
        %v930 = vpack.c.b16 %v898, %v898
        %v931 = vpack.c.b16 %v899, %v899
        %v932 = vpack.c.b16 %v900, %v900
        %v933 = vpack.c.b16 %v901, %v901
        %v934 = vpack.c.b16 %v902, %v902
        %v935 = vpack.c.b16 %v903, %v903
        %v936 = vpack.c.b16 %v904, %v904
        %v937 = vpack.c.b16 %v905, %v905
        %v938 = vpack.c.b16 %v906, %v906
        %v939 = vpack.c.b16 %v907, %v907
        %v940 = vpack.c.b16 %v908, %v908
        %v941 = vpack.c.b16 %v909, %v909
        %v942 = vpack.c.b16 %v910, %v910
        %v943 = vpack.c.b16 %v911, %v911
        %v944 = vpack.c.b16 %v912, %v912
        %v945 = vpack.c.b16 %v913, %v913
        %v946 = vpack.c.b16 %v914, %v914
        %979 = vst [vmem:[%s257] sm:$0xf] %v915
        %980 = vst [vmem:[%s257 + $0x4] sm:$0xf] %v916
        %981 = vst [vmem:[%s257 + $0x8] sm:$0xf] %v917
        %982 = vst [vmem:[%s257 + $0xc] sm:$0xf] %v918
        %983 = vst [vmem:[%s257 + $0x10] sm:$0xf] %v919
        %984 = vst [vmem:[%s257 + $0x14] sm:$0xf] %v920
        %985 = vst [vmem:[%s257 + $0x18] sm:$0xf] %v921
        %986 = vst [vmem:[%s257 + $0x1c] sm:$0xf] %v922
        %987 = vst [vmem:[%s257 + $0x20] sm:$0xf] %v923
        %988 = vst [vmem:[%s257 + $0x24] sm:$0xf] %v924
        %989 = vst [vmem:[%s257 + $0x28] sm:$0xf] %v925
        %990 = vst [vmem:[%s257 + $0x2c] sm:$0xf] %v926
        %991 = vst [vmem:[%s257 + $0x30] sm:$0xf] %v927
        %992 = vst [vmem:[%s257 + $0x34] sm:$0xf] %v928
        %993 = vst [vmem:[%s257 + $0x38] sm:$0xf] %v929
        %994 = vst [vmem:[%s257 + $0x3c] sm:$0xf] %v930
        %995 = vst [vmem:[%s257 + $0x40] sm:$0xf] %v931
        %996 = vst [vmem:[%s257 + $0x44] sm:$0xf] %v932
        %997 = vst [vmem:[%s257 + $0x48] sm:$0xf] %v933
        %998 = vst [vmem:[%s257 + $0x4c] sm:$0xf] %v934
        %999 = vst [vmem:[%s257 + $0x50] sm:$0xf] %v935
        %1000 = vst [vmem:[%s257 + $0x54] sm:$0xf] %v936
        %1001 = vst [vmem:[%s257 + $0x58] sm:$0xf] %v937
        %1002 = vst [vmem:[%s257 + $0x5c] sm:$0xf] %v938
        %1003 = vst [vmem:[%s257 + $0x60] sm:$0xf] %v939
        %1004 = vst [vmem:[%s257 + $0x64] sm:$0xf] %v940
        %1005 = vst [vmem:[%s257 + $0x68] sm:$0xf] %v941
        %1006 = vst [vmem:[%s257 + $0x6c] sm:$0xf] %v942
        %1007 = vst [vmem:[%s257 + $0x70] sm:$0xf] %v943
        %1008 = vst [vmem:[%s257 + $0x74] sm:$0xf] %v944
        %1009 = vst [vmem:[%s257 + $0x78] sm:$0xf] %v945
        %1010 = vst [vmem:[%s257 + $0x7c] sm:$0xf] %v946
      $region40: #{bottleneck_forward.4} parent=31 // pred_fallthru
        _
      %s1011 = smul.u32 32, %s19
      %p1012 = scmp.lt.s32.totalorder %s1011, 63
      %s1013 = scalar_select %p1012, %s1011, 63
      %p1014 = scmp.lt.s32.totalorder %s20, 0
      %s1015 = scalar_select %p1014, %s20, 0
      %s1016 = sadd.s32 %s1015, %s1013
      %s1017 = smul.addr %s1016, 4
      %s1018 = scalar_lea.vmem %s3, %s1017
      // Predicated region
      $region41: #{bottleneck_forward.4} parent=31 // pred_check
        %p1019 = pneg %p135
      $region42: #{bottleneck_forward.4} parent=31 // pred_check_branch
        %1021 = sbr.rel (%p1019) target = $region44
      $region43: #{bottleneck_forward.4} parent=31 // pred_region
        %s1022 = smul.u32 32, %s19
      $region44: #{bottleneck_forward.4} parent=31 // pred_fallthru
        _
    $region32: #{bottleneck_forward.4} parent=5 // pred_fallthru
      _
    %p1023 = scmp.le.s32.totalorder 2, %s9
    // Predicated region
    $region45: #{bottleneck_forward.4} parent=5 // pred_check
      %p1024 = pneg %p1023
    $region46: #{bottleneck_forward.4} parent=5 // pred_check_branch
      %1026 = sbr.rel (%p1024) target = $region48
    $region47: #{bottleneck_forward.4} parent=5 // pred_region
      %s1027 = ssub.s32 %s9, 2
      // Predicated region
      $region49: #{bottleneck_forward.4} parent=47 // pred_check
        %p1028 = pneg %p141
      $region50: #{bottleneck_forward.4} parent=47 // pred_check_branch
        %1030 = sbr.rel (%p1028) target = $region52
      $region51: #{bottleneck_forward.4} parent=47 // pred_region
        %s1031 = smul.u32 32, %s22
        %p1032 = scmp.lt.s32.totalorder %s1031, 63
        %s1033 = scalar_select %p1032, %s1031, 63
        %p1034 = scmp.lt.s32.totalorder %s23, 0
        %s1035 = scalar_select %p1034, %s23, 0
        %s1036 = sadd.s32 %s1035, %s1033
        %s1037 = smul.addr %s1036, 4
        %s1038 = scalar_lea.vmem %s3, %s1037
      $region52: #{bottleneck_forward.4} parent=47 // pred_fallthru
        _
    $region48: #{bottleneck_forward.4} parent=5 // pred_fallthru
      _
  $region6: #{bottleneck_forward.4} parent=0 // loop_footer
    %s13 = sadd.s32 1, %s9
  $region7: #{bottleneck_forward.4} parent=0 // loop_footer_branch
    %8 = sbr.rel target = $region3
  $region8: #{bottleneck_forward.4} parent=0 // loop_exit
    _

// kernel: bottleneck_forward.7
$region0: #{bottleneck_forward.7}
  #allocation0 [shape = 'u32[]', space=smem, size = 0x4, offset = 0x4, fixed_abs, tag = 'smem constant byte address 0x4 - core index']
  #allocation1 [shape = 'u32[144,128]{1,0:T(1,128)}', space=vmem, size = 0x12000, scoped, tag = 'internal scratch']
  %s0 = inlined_call_operand.vmem [shape: bf16[2,64,128], index: 0, kind: input, shape index: {}]
  %s1 = inlined_call_operand.hbm [shape: f32[2,1,128], index: 1, kind: output, shape index: {}]
  %s2 = sld [smem:[#allocation0]]
  $region37: #{bottleneck_forward.7} parent=0
    _
  %s4 = ssub.s32 1, %s2
  %s5 = scalar_select 0, %s4, %s2
  $region1: #{bottleneck_forward.7} parent=0
    #allocation2 [shape = 'u8[1024]{0}', space=vmem, size = 0x400, scoped, tag = 'output window, operand 0']
    #allocation3 [shape = 's32[2]{0}', space=sflag, size = 0x8, scoped, tag = 'scoped memory for bottleneck_forward.7']
    %6 = vsyncpa [#allocation3], 0
    %s7 = scalar_lea.sflag [#allocation3], 1
    %8 = vsyncpa %s7, 0
    loop: start=0, step=1, limit=4
    $region2: #{bottleneck_forward.7} parent=1 // loop_pre_header
      _
    $region3: #{bottleneck_forward.7} parent=1 // loop_header
      %s10 = sphi 0, %s14
      %p11 = scmp.ge.s32.totalorder %s10, 4
      %s17 = sphi 0, %s29
      %s18 = sphi 0, %s25
      %s19 = sphi 0, %s17
      %s20 = sphi 0, %s18
      %s21 = sphi 0, %s19
      %s22 = sphi 0, %s20
      %s34 = sphi 0, %s36
      %s37 = sphi 0, %s34
      %s38 = sphi 0, %s37
      %s54 = sphi 0, %s38
      %s62 = sphi 0, %s64
      %s65 = sphi 0, %s62
      %s66 = sphi 0, %s65
      %s82 = sphi 0, %s66
    $region4: #{bottleneck_forward.7} parent=1 // loop_header_branch
      %13 = sbr.rel (%p11) target = $region8
    $region5: #{bottleneck_forward.7} parent=1 // loop_body
      %s15 = ssub.s32 %s10, 1
      %s16 = ssub.s32 %s10, 2
      %s23 = sadd.s32 1, %s18
      %p24 = scmp.ge.s32.totalorder %s23, 1
      %s25 = scalar_select %p24, 0, %s23
      %s26 = sadd.s32 1, %s17
      %s27 = scalar_select %p24, %s26, %s17
      %p28 = scmp.ge.s32.totalorder %s27, 2
      %s29 = scalar_select %p28, 0, %s27
      %s30 = ssub.s32 %s17, %s29
      %s31 = ssub.s32 %s18, %s25
      %s32 = sor.u32 %s30, %s31
      %p33 = scmp.eq.s32.totalorder %s32, 0
      %s35 = sadd.s32 %s34, 1
      %s36 = scalar_select %p33, %s34, %s35
      %p39 = pneg %p33
      %p40 = scmp.eq.s32.totalorder %s10, 1
      %p41 = por %p39, %p40
      %p42 = scmp.ne.s32.totalorder %s34, %s37
      %p43 = scmp.eq.s32.totalorder %s10, 0
      %p44 = por %p42, %p43
      %p45 = scmp.ne.s32.totalorder %s34, %s37
      %p46 = scmp.eq.s32.totalorder %s15, 1
      %p47 = por %p45, %p46
      %p48 = scmp.ne.s32.totalorder %s37, %s38
      %p49 = scmp.eq.s32.totalorder %s15, 0
      %p50 = por %p48, %p49
      %p51 = scmp.ne.s32.totalorder %s37, %s38
      %p52 = scmp.eq.s32.totalorder %s16, 1
      %p53 = por %p51, %p52
      %p55 = scmp.ne.s32.totalorder %s38, %s54
      %p56 = scmp.eq.s32.totalorder %s16, 0
      %p57 = por %p55, %p56
      %s58 = ssub.s32 %s17, %s29
      %s59 = ssub.s32 %s18, %s25
      %s60 = sor.u32 %s58, %s59
      %p61 = scmp.eq.s32.totalorder %s60, 0
      %s63 = sadd.s32 %s62, 1
      %s64 = scalar_select %p61, %s62, %s63
      %p67 = pneg %p61
      %p68 = scmp.eq.s32.totalorder %s10, 1
      %p69 = por %p67, %p68
      %p70 = scmp.ne.s32.totalorder %s62, %s65
      %p71 = scmp.eq.s32.totalorder %s10, 0
      %p72 = por %p70, %p71
      %p73 = scmp.ne.s32.totalorder %s62, %s65
      %p74 = scmp.eq.s32.totalorder %s15, 1
      %p75 = por %p73, %p74
      %p76 = scmp.ne.s32.totalorder %s65, %s66
      %p77 = scmp.eq.s32.totalorder %s15, 0
      %p78 = por %p76, %p77
      %p79 = scmp.ne.s32.totalorder %s65, %s66
      %p80 = scmp.eq.s32.totalorder %s16, 1
      %p81 = por %p79, %p80
      %p83 = scmp.ne.s32.totalorder %s66, %s82
      %p84 = scmp.eq.s32.totalorder %s16, 0
      %p85 = por %p83, %p84
      %p86 = scmp.le.s32.totalorder 1, %s10
      %p87 = scmp.lt.s32.totalorder %s10, 3
      %p88 = pnand %p86, %p87
      %p89 = pneg %p88
      // Predicated region
      $region9: #{bottleneck_forward.7} parent=5 // pred_check
        _
      $region10: #{bottleneck_forward.7} parent=5 // pred_check_branch
        %91 = sbr.rel (%p88) target = $region12
      $region11: #{bottleneck_forward.7} parent=5 // pred_region
        %s92 = ssub.s32 %s10, 1
      $region12: #{bottleneck_forward.7} parent=5 // pred_fallthru
        _
      %p93 = scmp.lt.s32.totalorder %s10, 2
      // Predicated region
      $region13: #{bottleneck_forward.7} parent=5 // pred_check
        %p94 = pneg %p93
      $region14: #{bottleneck_forward.7} parent=5 // pred_check_branch
        %96 = sbr.rel (%p94) target = $region16
      $region15: #{bottleneck_forward.7} parent=5 // pred_region
        // Predicated region
        $region17: #{bottleneck_forward.7} parent=15 // pred_check
          %p97 = pneg %p44
        $region18: #{bottleneck_forward.7} parent=15 // pred_check_branch
          %99 = sbr.rel (%p97) target = $region20
        $region19: #{bottleneck_forward.7} parent=15 // pred_region
          %p100 = scmp.lt.s32.totalorder %s17, 1
          %s101 = scalar_select %p100, %s17, 1
          %p102 = scmp.lt.s32.totalorder %s18, 0
          %s103 = scalar_select %p102, %s18, 0
          %s104 = smul.addr %s101, 8
          %s105 = sadd.s32 %s103, %s104
          %s106 = smul.addr %s105, 4
          %s107 = scalar_lea.vmem %s0, %s106
        $region20: #{bottleneck_forward.7} parent=15 // pred_fallthru
          _
      $region16: #{bottleneck_forward.7} parent=5 // pred_fallthru
        _
      %p108 = scmp.le.s32.totalorder 1, %s10
      %p109 = scmp.lt.s32.totalorder %s10, 3
      %p110 = pnand %p108, %p109
      %p111 = pneg %p110
      // Predicated region
      $region21: #{bottleneck_forward.7} parent=5 // pred_check
        _
      $region22: #{bottleneck_forward.7} parent=5 // pred_check_branch
        %113 = sbr.rel (%p110) target = $region24
      $region23: #{bottleneck_forward.7} parent=5 // pred_region
        %s114 = ssub.s32 %s10, 1
        %p115 = scmp.lt.s32.totalorder %s19, 1
        %s116 = scalar_select %p115, %s19, 1
        %p117 = scmp.lt.s32.totalorder %s20, 0
        %s118 = scalar_select %p117, %s20, 0
        %s119 = smul.addr %s116, 8
        %s120 = sadd.s32 %s118, %s119
        %s121 = smul.addr %s120, 4
        %s122 = scalar_lea.vmem %s0, %s121
        %p123 = pneg %p50
        %p124 = pneg %p47
        %p125 = pneg %p78
        %p126 = pneg %p75
        %s127 = sand.u32 %s65, 1
        %s128 = scalar_lea.sflag [#allocation3], %s127
        %s129 = sand.u32 %s65, 1
        %s130 = scalar_lea.vmem [#allocation2], %s129
        %p131 = scmp.lt.s32.totalorder %s19, 1
        %s132 = scalar_select %p131, %s19, 1
        %p133 = scmp.lt.s32.totalorder %s20, 0
        %s134 = scalar_select %p133, %s20, 0
        %s135 = smul.addr %s132, 8
        %s136 = sadd.s32 %s134, %s135
        %s137 = smul.addr %s136, 4
        %s138 = scalar_lea.vmem %s0, %s137
        %v139 = vld [vmem:[%s138] sm:$0xf]
        %v140 = vld [vmem:[%s138 + $0x4] sm:$0xf]
        %v141 = vld [vmem:[%s138 + $0x8] sm:$0xf]
        %v142 = vld [vmem:[%s138 + $0xc] sm:$0xf]
        %v143 = vld [vmem:[%s138 + $0x10] sm:$0xf]
        %v144 = vld [vmem:[%s138 + $0x14] sm:$0xf]
        %v145 = vld [vmem:[%s138 + $0x18] sm:$0xf]
        %v146 = vld [vmem:[%s138 + $0x1c] sm:$0xf]
        %v147 = vunpack.c.l.bf16 %v139
        %v148 = vunpack.c.l.bf16 %v140
        %v149 = vunpack.c.l.bf16 %v141
        %v150 = vunpack.c.l.bf16 %v142
        %v151 = vunpack.c.l.bf16 %v143
        %v152 = vunpack.c.l.bf16 %v144
        %v153 = vunpack.c.l.bf16 %v145
        %v154 = vunpack.c.l.bf16 %v146
        %v155 = vadd.f32 %v147, %v148
        %v156 = vadd.f32 %v155, %v149
        %v157 = vadd.f32 %v156, %v150
        %v158 = vadd.f32 %v157, %v151
        %v159 = vadd.f32 %v158, %v152
        %v160 = vadd.f32 %v159, %v153
        %v161 = vadd.f32 %v160, %v154
        %v162 = vrot.slane %v161, 4
        %v163 = vadd.f32 %v161, %v162
        %v164 = vrot.slane %v163, 2
        %v165 = vadd.f32 %v163, %v164
        %v166 = vrot.slane %v165, 1
        %v167 = vadd.f32 %v165, %v166
        %v168 = vmul.f32 %v167, 0.015625
        %169 = vst [vmem:[%s130] sm:$0x1] %v168
        %s170 = sand.u32 %s65, 1
        %s171 = scalar_lea.sflag [#allocation3], %s170
        %s172 = sand.u32 %s65, 1
        %s173 = scalar_lea.vmem [#allocation2], %s172
        // Predicated region
        $region25: #{bottleneck_forward.7} parent=23 // pred_check
          %p174 = pneg %p75
        $region26: #{bottleneck_forward.7} parent=23 // pred_check_branch
          %176 = sbr.rel (%p174) target = $region28
        $region27: #{bottleneck_forward.7} parent=23 // pred_region
          %s178 = ssub.s32 16, 16
          %179 = vsyncadd %s171, %s178
          %s180 = sadd.s32 %s20, %s19
          %s181 = smul.addr %s180, 16
          %s182 = scalar_lea.hbm %s1, %s181
          %s184 = sshll.u32 %s173, 4
          %s185 = int_to_ptr.vmem [resolvable:$true] %s184
          %187 = dma.vmem_to_hbm [thread:$0]  %s185, 16, %s182, %s171
        $region28: #{bottleneck_forward.7} parent=23 // pred_fallthru
          _
      $region24: #{bottleneck_forward.7} parent=5 // pred_fallthru
        _
      %p188 = scmp.le.s32.totalorder 2, %s10
      // Predicated region
      $region29: #{bottleneck_forward.7} parent=5 // pred_check
        %p189 = pneg %p188
      $region30: #{bottleneck_forward.7} parent=5 // pred_check_branch
        %191 = sbr.rel (%p189) target = $region32
      $region31: #{bottleneck_forward.7} parent=5 // pred_region
        %s192 = ssub.s32 %s10, 2
        // Predicated region
        $region33: #{bottleneck_forward.7} parent=31 // pred_check
          %p193 = pneg %p81
        $region34: #{bottleneck_forward.7} parent=31 // pred_check_branch
          %195 = sbr.rel (%p193) target = $region36
        $region35: #{bottleneck_forward.7} parent=31 // pred_region
          %s196 = sand.u32 %s66, 1
          %s197 = scalar_lea.sflag [#allocation3], %s196
          %s198 = sand.u32 %s66, 1
          %s199 = scalar_lea.vmem [#allocation2], %s198
          %200 = dma.done %s197, 16
        $region36: #{bottleneck_forward.7} parent=31 // pred_fallthru
          _
      $region32: #{bottleneck_forward.7} parent=5 // pred_fallthru
        _
    $region6: #{bottleneck_forward.7} parent=1 // loop_footer
      %s14 = sadd.s32 1, %s10
    $region7: #{bottleneck_forward.7} parent=1 // loop_footer_branch
      %9 = sbr.rel target = $region3
    $region8: #{bottleneck_forward.7} parent=1 // loop_exit
      _
    %201 = vsyncpa [#allocation3], 1
    %s202 = scalar_lea.sflag [#allocation3], 1
    %203 = vsyncpa %s202, 1

// kernel: bottleneck_forward.6
$region0: #{bottleneck_forward.6}
  #allocation0 [shape = 'u32[]', space=smem, size = 0x4, offset = 0x4, fixed_abs, tag = 'smem constant byte address 0x4 - core index']
  #allocation1 [shape = 'u32[144,128]{1,0:T(1,128)}', space=vmem, size = 0x12000, scoped, tag = 'internal scratch']
  #allocation2 [shape = 'f32[128,128]{1,0:T(8,128)}', space=vmem, size = 0x10000, scoped, tag = 'scratch operand']
  %s0 = inlined_call_operand.vmem [shape: bf16[128,128], index: 0, kind: input, shape index: {}]
  %s1 = inlined_call_operand.vmem [shape: bf16[128,128], index: 1, kind: input, shape index: {}]
  %s2 = inlined_call_operand.vmem [shape: f32[1,128], index: 2, kind: input, shape index: {}]
  %s3 = inlined_call_operand.vmem [shape: bf16[128,128], index: 3, kind: output, shape index: {}]
  %s4 = sld [smem:[#allocation0]]
  $region30: #{bottleneck_forward.6} parent=0
    _
  %s6 = ssub.s32 1, %s4
  %s7 = scalar_select 0, %s6, %s4
  // Predicated region
  $region2: #{bottleneck_forward.6} parent=0 // pred_check
    _
  $region3: #{bottleneck_forward.6} parent=0 // pred_check_branch
    %9 = sbr.rel (0) target = $region5
  $region4: #{bottleneck_forward.6} parent=0 // pred_region
    _
  $region5: #{bottleneck_forward.6} parent=0 // pred_fallthru
    _
  // Predicated region
  $region6: #{bottleneck_forward.6} parent=0 // pred_check
    _
  $region7: #{bottleneck_forward.6} parent=0 // pred_check_branch
    %11 = sbr.rel (0) target = $region9
  $region8: #{bottleneck_forward.6} parent=0 // pred_region
    _
  $region9: #{bottleneck_forward.6} parent=0 // pred_fallthru
    _
  // Predicated region
  $region10: #{bottleneck_forward.6} parent=0 // pred_check
    _
  $region11: #{bottleneck_forward.6} parent=0 // pred_check_branch
    %13 = sbr.rel (0) target = $region13
  $region12: #{bottleneck_forward.6} parent=0 // pred_region
    _
  $region13: #{bottleneck_forward.6} parent=0 // pred_fallthru
    _
  %p15 = scmp.eq.s32.totalorder 0, 0
  // Predicated region
  $region14: #{bottleneck_forward.6} parent=0 // pred_check
    %p16 = pneg %p15
  $region15: #{bottleneck_forward.6} parent=0 // pred_check_branch
    %18 = sbr.rel (%p16) target = $region17
  $region16: #{bottleneck_forward.6} parent=0 // pred_region
    %19 = vst [vmem:[#allocation2] sm:$0xff] 0.0
    %20 = vst [vmem:[#allocation2 + $0x8] sm:$0xff] 0.0
    %21 = vst [vmem:[#allocation2 + $0x10] sm:$0xff] 0.0
    %22 = vst [vmem:[#allocation2 + $0x18] sm:$0xff] 0.0
    %23 = vst [vmem:[#allocation2 + $0x20] sm:$0xff] 0.0
    %24 = vst [vmem:[#allocation2 + $0x28] sm:$0xff] 0.0
    %25 = vst [vmem:[#allocation2 + $0x30] sm:$0xff] 0.0
    %26 = vst [vmem:[#allocation2 + $0x38] sm:$0xff] 0.0
    %27 = vst [vmem:[#allocation2 + $0x40] sm:$0xff] 0.0
    %28 = vst [vmem:[#allocation2 + $0x48] sm:$0xff] 0.0
    %29 = vst [vmem:[#allocation2 + $0x50] sm:$0xff] 0.0
    %30 = vst [vmem:[#allocation2 + $0x58] sm:$0xff] 0.0
    %31 = vst [vmem:[#allocation2 + $0x60] sm:$0xff] 0.0
    %32 = vst [vmem:[#allocation2 + $0x68] sm:$0xff] 0.0
    %33 = vst [vmem:[#allocation2 + $0x70] sm:$0xff] 0.0
    %34 = vst [vmem:[#allocation2 + $0x78] sm:$0xff] 0.0
  $region17: #{bottleneck_forward.6} parent=0 // pred_fallthru
    _
  %v35 = vld [vmem:[#allocation2] sm:$0xff]
  %v36 = vld [vmem:[#allocation2 + $0x8] sm:$0xff]
  %v37 = vld [vmem:[#allocation2 + $0x10] sm:$0xff]
  %v38 = vld [vmem:[#allocation2 + $0x18] sm:$0xff]
  %v39 = vld [vmem:[#allocation2 + $0x20] sm:$0xff]
  %v40 = vld [vmem:[#allocation2 + $0x28] sm:$0xff]
  %v41 = vld [vmem:[#allocation2 + $0x30] sm:$0xff]
  %v42 = vld [vmem:[#allocation2 + $0x38] sm:$0xff]
  %v43 = vld [vmem:[#allocation2 + $0x40] sm:$0xff]
  %v44 = vld [vmem:[#allocation2 + $0x48] sm:$0xff]
  %v45 = vld [vmem:[#allocation2 + $0x50] sm:$0xff]
  %v46 = vld [vmem:[#allocation2 + $0x58] sm:$0xff]
  %v47 = vld [vmem:[#allocation2 + $0x60] sm:$0xff]
  %v48 = vld [vmem:[#allocation2 + $0x68] sm:$0xff]
  %v49 = vld [vmem:[#allocation2 + $0x70] sm:$0xff]
  %v50 = vld [vmem:[#allocation2 + $0x78] sm:$0xff]
  %v51 = vld [vmem:[%s0] sm:$0xf]
  %v52 = vld [vmem:[%s0 + $0x4] sm:$0xf]
  %v53 = vld [vmem:[%s0 + $0x8] sm:$0xf]
  %v54 = vld [vmem:[%s0 + $0xc] sm:$0xf]
  %v55 = vld [vmem:[%s0 + $0x10] sm:$0xf]
  %v56 = vld [vmem:[%s0 + $0x14] sm:$0xf]
  %v57 = vld [vmem:[%s0 + $0x18] sm:$0xf]
  %v58 = vld [vmem:[%s0 + $0x1c] sm:$0xf]
  %v59 = vld [vmem:[%s0 + $0x20] sm:$0xf]
  %v60 = vld [vmem:[%s0 + $0x24] sm:$0xf]
  %v61 = vld [vmem:[%s0 + $0x28] sm:$0xf]
  %v62 = vld [vmem:[%s0 + $0x2c] sm:$0xf]
  %v63 = vld [vmem:[%s0 + $0x30] sm:$0xf]
  %v64 = vld [vmem:[%s0 + $0x34] sm:$0xf]
  %v65 = vld [vmem:[%s0 + $0x38] sm:$0xf]
  %v66 = vld [vmem:[%s0 + $0x3c] sm:$0xf]
  %v67 = vld [vmem:[%s1] sm:$0xf]
  %v68 = vld [vmem:[%s1 + $0x4] sm:$0xf]
  %v69 = vld [vmem:[%s1 + $0x8] sm:$0xf]
  %v70 = vld [vmem:[%s1 + $0xc] sm:$0xf]
  %v71 = vld [vmem:[%s1 + $0x10] sm:$0xf]
  %v72 = vld [vmem:[%s1 + $0x14] sm:$0xf]
  %v73 = vld [vmem:[%s1 + $0x18] sm:$0xf]
  %v74 = vld [vmem:[%s1 + $0x1c] sm:$0xf]
  %v75 = vld [vmem:[%s1 + $0x20] sm:$0xf]
  %v76 = vld [vmem:[%s1 + $0x24] sm:$0xf]
  %v77 = vld [vmem:[%s1 + $0x28] sm:$0xf]
  %v78 = vld [vmem:[%s1 + $0x2c] sm:$0xf]
  %v79 = vld [vmem:[%s1 + $0x30] sm:$0xf]
  %v80 = vld [vmem:[%s1 + $0x34] sm:$0xf]
  %v81 = vld [vmem:[%s1 + $0x38] sm:$0xf]
  %v82 = vld [vmem:[%s1 + $0x3c] sm:$0xf]
  %v99 = vunpack.c.l.b16 %v51
  %v100 = vunpack.c.l.b16 %v52
  %v101 = vunpack.c.l.b16 %v53
  %v102 = vunpack.c.l.b16 %v54
  %v103 = vunpack.c.l.b16 %v55
  %v104 = vunpack.c.l.b16 %v56
  %v105 = vunpack.c.l.b16 %v57
  %v106 = vunpack.c.l.b16 %v58
  %v107 = vunpack.c.l.b16 %v59
  %v108 = vunpack.c.l.b16 %v60
  %v109 = vunpack.c.l.b16 %v61
  %v110 = vunpack.c.l.b16 %v62
  %v111 = vunpack.c.l.b16 %v63
  %v112 = vunpack.c.l.b16 %v64
  %v113 = vunpack.c.l.b16 %v65
  %v114 = vunpack.c.l.b16 %v66
  %v115 = vpack.c.b16 %v100, %v99
  %v116 = vpack.c.b16 %v102, %v101
  %v117 = vpack.c.b16 %v104, %v103
  %v118 = vpack.c.b16 %v106, %v105
  %v119 = vpack.c.b16 %v108, %v107
  %v120 = vpack.c.b16 %v110, %v109
  %v121 = vpack.c.b16 %v112, %v111
  %v122 = vpack.c.b16 %v114, %v113
  %v147 = vunpack.c.l.b16 %v67
  %v148 = vunpack.c.l.b16 %v68
  %v149 = vunpack.c.l.b16 %v69
  %v150 = vunpack.c.l.b16 %v70
  %v151 = vunpack.c.l.b16 %v71
  %v152 = vunpack.c.l.b16 %v72
  %v153 = vunpack.c.l.b16 %v73
  %v154 = vunpack.c.l.b16 %v74
  %v155 = vunpack.c.l.b16 %v75
  %v156 = vunpack.c.l.b16 %v76
  %v157 = vunpack.c.l.b16 %v77
  %v158 = vunpack.c.l.b16 %v78
  %v159 = vunpack.c.l.b16 %v79
  %v160 = vunpack.c.l.b16 %v80
  %v161 = vunpack.c.l.b16 %v81
  %v162 = vunpack.c.l.b16 %v82
  %v163 = vpack.c.b16 %v148, %v147
  %v164 = vpack.c.b16 %v150, %v149
  %v165 = vpack.c.b16 %v152, %v151
  %v166 = vpack.c.b16 %v154, %v153
  %v167 = vpack.c.b16 %v156, %v155
  %v168 = vpack.c.b16 %v158, %v157
  %v169 = vpack.c.b16 %v160, %v159
  %v170 = vpack.c.b16 %v162, %v161
  %179 = vmatprep.subr.bf16.mxu0 0
  %180 = vmatpush1.bf16.msra.mxu0 %v163
  %181 = vmatprep.subr.bf16.mxu0 0
  %182 = vmatpush1.bf16.msra.mxu0 %v164
  %183 = vmatprep.subr.bf16.mxu0 0
  %184 = vmatpush1.bf16.msra.mxu0 %v165
  %185 = vmatprep.subr.bf16.mxu0 0
  %186 = vmatpush1.bf16.msra.mxu0 %v166
  %187 = vmatprep.subr.bf16.mxu0 0
  %188 = vmatpush1.bf16.msra.mxu0 %v167
  %189 = vmatprep.subr.bf16.mxu0 0
  %190 = vmatpush1.bf16.msra.mxu0 %v168
  %191 = vmatprep.subr.bf16.mxu0 0
  %192 = vmatpush1.bf16.msra.mxu0 %v169
  %193 = vmatprep.subr.bf16.mxu0 0
  %194 = vmatpush1.bf16.msra.mxu0 %v170
  %195 = vmatprep.subr.bf16.mxu0 0
  %196 = vmatpush1.bf16.msra.mxu0 0
  %197 = vmatprep.subr.bf16.mxu0 0
  %198 = vmatpush1.bf16.msra.mxu0 0
  %199 = vmatprep.subr.bf16.mxu0 0
  %200 = vmatpush1.bf16.msra.mxu0 0
  %201 = vmatprep.subr.bf16.mxu0 0
  %202 = vmatpush1.bf16.msra.mxu0 0
  %203 = vmatprep.subr.bf16.mxu0 0
  %204 = vmatpush1.bf16.msra.mxu0 0
  %205 = vmatprep.subr.bf16.mxu0 0
  %206 = vmatpush1.bf16.msra.mxu0 0
  %207 = vmatprep.subr.bf16.mxu0 0
  %208 = vmatpush1.bf16.msra.mxu0 0
  %209 = vmatprep.subr.bf16.mxu0 0
  %210 = vmatpush1.bf16.msra.mxu0 0
  %211 = vmatprep.mubr.bf16.mxu0 0
  %212 = vmatmul.mubr.bf16.gmra.mrb[0].mxu0 %v115
  %v213 = vpop.f32.mrb[0].mxu0
  %v214 = vadd.f32 0.0, %v213
  %v215 = vpop.f32.mrb[0].mxu0
  %v216 = vpop.f32.mrb[0].mxu0
  %v217 = vadd.f32 0.0, %v216
  %v218 = vpop.f32.mrb[0].mxu0
  %219 = vmatprep.mubr.bf16.mxu0 0
  %220 = vmatmul.mubr.bf16.gmra.mrb[0].mxu0 %v116
  %v221 = vpop.f32.mrb[0].mxu0
  %v222 = vadd.f32 0.0, %v221
  %v223 = vpop.f32.mrb[0].mxu0
  %v224 = vpop.f32.mrb[0].mxu0
  %v225 = vadd.f32 0.0, %v224
  %v226 = vpop.f32.mrb[0].mxu0
  %227 = vmatprep.mubr.bf16.mxu0 0
  %228 = vmatmul.mubr.bf16.gmra.mrb[0].mxu0 %v117
  %v229 = vpop.f32.mrb[0].mxu0
  %v230 = vadd.f32 0.0, %v229
  %v231 = vpop.f32.mrb[0].mxu0
  %v232 = vpop.f32.mrb[0].mxu0
  %v233 = vadd.f32 0.0, %v232
  %v234 = vpop.f32.mrb[0].mxu0
  %235 = vmatprep.mubr.bf16.mxu0 0
  %236 = vmatmul.mubr.bf16.gmra.mrb[0].mxu0 %v118
  %v237 = vpop.f32.mrb[0].mxu0
  %v238 = vadd.f32 0.0, %v237
  %v239 = vpop.f32.mrb[0].mxu0
  %v240 = vpop.f32.mrb[0].mxu0
  %v241 = vadd.f32 0.0, %v240
  %v242 = vpop.f32.mrb[0].mxu0
  %243 = vmatprep.mubr.bf16.mxu0 0
  %244 = vmatmul.mubr.bf16.gmra.mrb[0].mxu0 %v119
  %v245 = vpop.f32.mrb[0].mxu0
  %v246 = vadd.f32 0.0, %v245
  %v247 = vpop.f32.mrb[0].mxu0
  %v248 = vpop.f32.mrb[0].mxu0
  %v249 = vadd.f32 0.0, %v248
  %v250 = vpop.f32.mrb[0].mxu0
  %251 = vmatprep.mubr.bf16.mxu0 0
  %252 = vmatmul.mubr.bf16.gmra.mrb[0].mxu0 %v120
  %v253 = vpop.f32.mrb[0].mxu0
  %v254 = vadd.f32 0.0, %v253
  %v255 = vpop.f32.mrb[0].mxu0
  %v256 = vpop.f32.mrb[0].mxu0
  %v257 = vadd.f32 0.0, %v256
  %v258 = vpop.f32.mrb[0].mxu0
  %259 = vmatprep.mubr.bf16.mxu0 0
  %260 = vmatmul.mubr.bf16.gmra.mrb[0].mxu0 %v121
  %v261 = vpop.f32.mrb[0].mxu0
  %v262 = vadd.f32 0.0, %v261
  %v263 = vpop.f32.mrb[0].mxu0
  %v264 = vpop.f32.mrb[0].mxu0
  %v265 = vadd.f32 0.0, %v264
  %v266 = vpop.f32.mrb[0].mxu0
  %267 = vmatprep.mubr.bf16.mxu0 0
  %268 = vmatmul.mubr.bf16.gmra.mrb[0].mxu0 %v122
  %v269 = vpop.f32.mrb[0].mxu0
  %v270 = vadd.f32 0.0, %v269
  %v271 = vpop.f32.mrb[0].mxu0
  %v272 = vpop.f32.mrb[0].mxu0
  %v273 = vadd.f32 0.0, %v272
  %v274 = vpop.f32.mrb[0].mxu0
  %275 = vdwg.mxu0
  %v276 = vadd.f32 %v35, %v214
  %v277 = vadd.f32 %v36, %v217
  %v278 = vadd.f32 %v37, %v222
  %v279 = vadd.f32 %v38, %v225
  %v280 = vadd.f32 %v39, %v230
  %v281 = vadd.f32 %v40, %v233
  %v282 = vadd.f32 %v41, %v238
  %v283 = vadd.f32 %v42, %v241
  %v284 = vadd.f32 %v43, %v246
  %v285 = vadd.f32 %v44, %v249
  %v286 = vadd.f32 %v45, %v254
  %v287 = vadd.f32 %v46, %v257
  %v288 = vadd.f32 %v47, %v262
  %v289 = vadd.f32 %v48, %v265
  %v290 = vadd.f32 %v49, %v270
  %v291 = vadd.f32 %v50, %v273
  %292 = vst [vmem:[#allocation2] sm:$0xff] %v276
  %293 = vst [vmem:[#allocation2 + $0x8] sm:$0xff] %v277
  %294 = vst [vmem:[#allocation2 + $0x10] sm:$0xff] %v278
  %295 = vst [vmem:[#allocation2 + $0x18] sm:$0xff] %v279
  %296 = vst [vmem:[#allocation2 + $0x20] sm:$0xff] %v280
  %297 = vst [vmem:[#allocation2 + $0x28] sm:$0xff] %v281
  %298 = vst [vmem:[#allocation2 + $0x30] sm:$0xff] %v282
  %299 = vst [vmem:[#allocation2 + $0x38] sm:$0xff] %v283
  %300 = vst [vmem:[#allocation2 + $0x40] sm:$0xff] %v284
  %301 = vst [vmem:[#allocation2 + $0x48] sm:$0xff] %v285
  %302 = vst [vmem:[#allocation2 + $0x50] sm:$0xff] %v286
  %303 = vst [vmem:[#allocation2 + $0x58] sm:$0xff] %v287
  %304 = vst [vmem:[#allocation2 + $0x60] sm:$0xff] %v288
  %305 = vst [vmem:[#allocation2 + $0x68] sm:$0xff] %v289
  %306 = vst [vmem:[#allocation2 + $0x70] sm:$0xff] %v290
  %307 = vst [vmem:[#allocation2 + $0x78] sm:$0xff] %v291
  // Predicated region
  $region18: #{bottleneck_forward.6} parent=0 // pred_check
    %p308 = pneg %p15
  $region19: #{bottleneck_forward.6} parent=0 // pred_check_branch
    %310 = sbr.rel (%p308) target = $region21
  $region20: #{bottleneck_forward.6} parent=0 // pred_region
    %v311 = vld [vmem:[#allocation2] sm:$0xff]
    %v312 = vld [vmem:[#allocation2 + $0x8] sm:$0xff]
    %v313 = vld [vmem:[#allocation2 + $0x10] sm:$0xff]
    %v314 = vld [vmem:[#allocation2 + $0x18] sm:$0xff]
    %v315 = vld [vmem:[#allocation2 + $0x20] sm:$0xff]
    %v316 = vld [vmem:[#allocation2 + $0x28] sm:$0xff]
    %v317 = vld [vmem:[#allocation2 + $0x30] sm:$0xff]
    %v318 = vld [vmem:[#allocation2 + $0x38] sm:$0xff]
    %v319 = vld [vmem:[#allocation2 + $0x40] sm:$0xff]
    %v320 = vld [vmem:[#allocation2 + $0x48] sm:$0xff]
    %v321 = vld [vmem:[#allocation2 + $0x50] sm:$0xff]
    %v322 = vld [vmem:[#allocation2 + $0x58] sm:$0xff]
    %v323 = vld [vmem:[#allocation2 + $0x60] sm:$0xff]
    %v324 = vld [vmem:[#allocation2 + $0x68] sm:$0xff]
    %v325 = vld [vmem:[#allocation2 + $0x70] sm:$0xff]
    %v326 = vld [vmem:[#allocation2 + $0x78] sm:$0xff]
    %v327 = vld [vmem:[%s2] sm:$0x1]
    %v329 = vlaneseq
    %v330 = vshrl.u32 %v329, 7
    %v331 = vsub.s32 0, %v330
    %v332 = vrot.slane %v327, %v331
    %v334 = vadd.f32 %v311, %v332
    %v335 = vadd.f32 %v312, %v332
    %v336 = vadd.f32 %v313, %v332
    %v337 = vadd.f32 %v314, %v332
    %v338 = vadd.f32 %v315, %v332
    %v339 = vadd.f32 %v316, %v332
    %v340 = vadd.f32 %v317, %v332
    %v341 = vadd.f32 %v318, %v332
    %v342 = vadd.f32 %v319, %v332
    %v343 = vadd.f32 %v320, %v332
    %v344 = vadd.f32 %v321, %v332
    %v345 = vadd.f32 %v322, %v332
    %v346 = vadd.f32 %v323, %v332
    %v347 = vadd.f32 %v324, %v332
    %v348 = vadd.f32 %v325, %v332
    %v349 = vadd.f32 %v326, %v332
    %v350 = vmax.f32 %v334, 0.0
    %v351 = vmax.f32 %v335, 0.0
    %v352 = vmax.f32 %v336, 0.0
    %v353 = vmax.f32 %v337, 0.0
    %v354 = vmax.f32 %v338, 0.0
    %v355 = vmax.f32 %v339, 0.0
    %v356 = vmax.f32 %v340, 0.0
    %v357 = vmax.f32 %v341, 0.0
    %v358 = vmax.f32 %v342, 0.0
    %v359 = vmax.f32 %v343, 0.0
    %v360 = vmax.f32 %v344, 0.0
    %v361 = vmax.f32 %v345, 0.0
    %v362 = vmax.f32 %v346, 0.0
    %v363 = vmax.f32 %v347, 0.0
    %v364 = vmax.f32 %v348, 0.0
    %v365 = vmax.f32 %v349, 0.0
    %v366 = vpack.c.bf16 %v351, %v350
    %v367 = vpack.c.bf16 %v353, %v352
    %v368 = vpack.c.bf16 %v355, %v354
    %v369 = vpack.c.bf16 %v357, %v356
    %v370 = vpack.c.bf16 %v359, %v358
    %v371 = vpack.c.bf16 %v361, %v360
    %v372 = vpack.c.bf16 %v363, %v362
    %v373 = vpack.c.bf16 %v365, %v364
    %v382 = vunpack.c.l.b16 %v366
    %v383 = vunpack.c.h.b16 %v366
    %v384 = vunpack.c.l.b16 %v367
    %v385 = vunpack.c.h.b16 %v367
    %v386 = vunpack.c.l.b16 %v368
    %v387 = vunpack.c.h.b16 %v368
    %v388 = vunpack.c.l.b16 %v369
    %v389 = vunpack.c.h.b16 %v369
    %v390 = vunpack.c.l.b16 %v370
    %v391 = vunpack.c.h.b16 %v370
    %v392 = vunpack.c.l.b16 %v371
    %v393 = vunpack.c.h.b16 %v371
    %v394 = vunpack.c.l.b16 %v372
    %v395 = vunpack.c.h.b16 %v372
    %v396 = vunpack.c.l.b16 %v373
    %v397 = vunpack.c.h.b16 %v373
    %v398 = vpack.c.b16 %v382, %v382
    %v399 = vpack.c.b16 %v383, %v383
    %v400 = vpack.c.b16 %v384, %v384
    %v401 = vpack.c.b16 %v385, %v385
    %v402 = vpack.c.b16 %v386, %v386
    %v403 = vpack.c.b16 %v387, %v387
    %v404 = vpack.c.b16 %v388, %v388
    %v405 = vpack.c.b16 %v389, %v389
    %v406 = vpack.c.b16 %v390, %v390
    %v407 = vpack.c.b16 %v391, %v391
    %v408 = vpack.c.b16 %v392, %v392
    %v409 = vpack.c.b16 %v393, %v393
    %v410 = vpack.c.b16 %v394, %v394
    %v411 = vpack.c.b16 %v395, %v395
    %v412 = vpack.c.b16 %v396, %v396
    %v413 = vpack.c.b16 %v397, %v397
    %430 = vst [vmem:[%s3] sm:$0xf] %v398
    %431 = vst [vmem:[%s3 + $0x4] sm:$0xf] %v399
    %432 = vst [vmem:[%s3 + $0x8] sm:$0xf] %v400
    %433 = vst [vmem:[%s3 + $0xc] sm:$0xf] %v401
    %434 = vst [vmem:[%s3 + $0x10] sm:$0xf] %v402
    %435 = vst [vmem:[%s3 + $0x14] sm:$0xf] %v403
    %436 = vst [vmem:[%s3 + $0x18] sm:$0xf] %v404
    %437 = vst [vmem:[%s3 + $0x1c] sm:$0xf] %v405
    %438 = vst [vmem:[%s3 + $0x20] sm:$0xf] %v406
    %439 = vst [vmem:[%s3 + $0x24] sm:$0xf] %v407
    %440 = vst [vmem:[%s3 + $0x28] sm:$0xf] %v408
    %441 = vst [vmem:[%s3 + $0x2c] sm:$0xf] %v409
    %442 = vst [vmem:[%s3 + $0x30] sm:$0xf] %v410
    %443 = vst [vmem:[%s3 + $0x34] sm:$0xf] %v411
    %444 = vst [vmem:[%s3 + $0x38] sm:$0xf] %v412
    %445 = vst [vmem:[%s3 + $0x3c] sm:$0xf] %v413
  $region21: #{bottleneck_forward.6} parent=0 // pred_fallthru
    _
  // Predicated region
  $region22: #{bottleneck_forward.6} parent=0 // pred_check
    _
  $region23: #{bottleneck_forward.6} parent=0 // pred_check_branch
    %447 = sbr.rel (0) target = $region25
  $region24: #{bottleneck_forward.6} parent=0 // pred_region
    _
  $region25: #{bottleneck_forward.6} parent=0 // pred_fallthru
    _
  // Predicated region
  $region26: #{bottleneck_forward.6} parent=0 // pred_check
    _
  $region27: #{bottleneck_forward.6} parent=0 // pred_check_branch
    %449 = sbr.rel (0) target = $region29
  $region28: #{bottleneck_forward.6} parent=0 // pred_region
    _
  $region29: #{bottleneck_forward.6} parent=0 // pred_fallthru
    _

// kernel: bottleneck_forward.5
$region0: #{bottleneck_forward.5}
  #allocation0 [shape = 'u32[]', space=smem, size = 0x4, offset = 0x4, fixed_abs, tag = 'smem constant byte address 0x4 - core index']
  #allocation1 [shape = 'u32[144,128]{1,0:T(1,128)}', space=vmem, size = 0x12000, scoped, tag = 'internal scratch']
  %s0 = inlined_call_operand.vmem [shape: bf16[8,9,9,32], index: 0, kind: input, shape index: {}]
  %s1 = inlined_call_operand.vmem [shape: bf16[9,32,128], index: 1, kind: input, shape index: {}]
  %s2 = inlined_call_operand.vmem [shape: f32[1,128], index: 2, kind: input, shape index: {}]
  %s3 = inlined_call_operand.vmem [shape: bf16[2,64,128], index: 3, kind: output, shape index: {}]
  %s4 = sld [smem:[#allocation0]]
  $region45: #{bottleneck_forward.5} parent=0
    _
  %s6 = ssub.s32 1, %s4
  %s7 = scalar_select 0, %s6, %s4
  loop: start=0, step=1, limit=4
  $region2: #{bottleneck_forward.5} parent=0 // loop_pre_header
    _
  $region3: #{bottleneck_forward.5} parent=0 // loop_header
    %s9 = sphi 0, %s13
    %p10 = scmp.ge.s32.totalorder %s9, 4
    %s16 = sphi 0, %s28
    %s17 = sphi 0, %s24
    %s18 = sphi 0, %s16
    %s19 = sphi 0, %s17
    %s20 = sphi 0, %s18
    %s21 = sphi 0, %s19
    %s31 = sphi 0, %s33
    %s34 = sphi 0, %s31
    %s35 = sphi 0, %s34
    %s51 = sphi 0, %s35
    %s57 = sphi 0, %s59
    %s60 = sphi 0, %s57
    %s61 = sphi 0, %s60
    %s77 = sphi 0, %s61
    %s83 = sphi 0, %s85
    %s86 = sphi 0, %s83
    %s87 = sphi 0, %s86
    %s103 = sphi 0, %s87
    %s111 = sphi 0, %s113
    %s114 = sphi 0, %s111
    %s115 = sphi 0, %s114
    %s131 = sphi 0, %s115
  $region4: #{bottleneck_forward.5} parent=0 // loop_header_branch
    %12 = sbr.rel (%p10) target = $region8
  $region5: #{bottleneck_forward.5} parent=0 // loop_body
    %s14 = ssub.s32 %s9, 1
    %s15 = ssub.s32 %s9, 2
    %s22 = sadd.s32 1, %s17
    %p23 = scmp.ge.s32.totalorder %s22, 1
    %s24 = scalar_select %p23, 0, %s22
    %s25 = sadd.s32 1, %s16
    %s26 = scalar_select %p23, %s25, %s16
    %p27 = scmp.ge.s32.totalorder %s26, 2
    %s28 = scalar_select %p27, 0, %s26
    %s29 = ssub.s32 %s16, %s28
    %p30 = scmp.eq.s32.totalorder %s29, 0
    %s32 = sadd.s32 %s31, 1
    %s33 = scalar_select %p30, %s31, %s32
    %p36 = pneg %p30
    %p37 = scmp.eq.s32.totalorder %s9, 1
    %p38 = por %p36, %p37
    %p39 = scmp.ne.s32.totalorder %s31, %s34
    %p40 = scmp.eq.s32.totalorder %s9, 0
    %p41 = por %p39, %p40
    %p42 = scmp.ne.s32.totalorder %s31, %s34
    %p43 = scmp.eq.s32.totalorder %s14, 1
    %p44 = por %p42, %p43
    %p45 = scmp.ne.s32.totalorder %s34, %s35
    %p46 = scmp.eq.s32.totalorder %s14, 0
    %p47 = por %p45, %p46
    %p48 = scmp.ne.s32.totalorder %s34, %s35
    %p49 = scmp.eq.s32.totalorder %s15, 1
    %p50 = por %p48, %p49
    %p52 = scmp.ne.s32.totalorder %s35, %s51
    %p53 = scmp.eq.s32.totalorder %s15, 0
    %p54 = por %p52, %p53
    %s55 = ssub.s32 %s17, %s24
    %p56 = scmp.eq.s32.totalorder %s55, 0
    %s58 = sadd.s32 %s57, 1
    %s59 = scalar_select %p56, %s57, %s58
    %p62 = pneg %p56
    %p63 = scmp.eq.s32.totalorder %s9, 1
    %p64 = por %p62, %p63
    %p65 = scmp.ne.s32.totalorder %s57, %s60
    %p66 = scmp.eq.s32.totalorder %s9, 0
    %p67 = por %p65, %p66
    %p68 = scmp.ne.s32.totalorder %s57, %s60
    %p69 = scmp.eq.s32.totalorder %s14, 1
    %p70 = por %p68, %p69
    %p71 = scmp.ne.s32.totalorder %s60, %s61
    %p72 = scmp.eq.s32.totalorder %s14, 0
    %p73 = por %p71, %p72
    %p74 = scmp.ne.s32.totalorder %s60, %s61
    %p75 = scmp.eq.s32.totalorder %s15, 1
    %p76 = por %p74, %p75
    %p78 = scmp.ne.s32.totalorder %s61, %s77
    %p79 = scmp.eq.s32.totalorder %s15, 0
    %p80 = por %p78, %p79
    %s81 = ssub.s32 %s17, %s24
    %p82 = scmp.eq.s32.totalorder %s81, 0
    %s84 = sadd.s32 %s83, 1
    %s85 = scalar_select %p82, %s83, %s84
    %p88 = pneg %p82
    %p89 = scmp.eq.s32.totalorder %s9, 1
    %p90 = por %p88, %p89
    %p91 = scmp.ne.s32.totalorder %s83, %s86
    %p92 = scmp.eq.s32.totalorder %s9, 0
    %p93 = por %p91, %p92
    %p94 = scmp.ne.s32.totalorder %s83, %s86
    %p95 = scmp.eq.s32.totalorder %s14, 1
    %p96 = por %p94, %p95
    %p97 = scmp.ne.s32.totalorder %s86, %s87
    %p98 = scmp.eq.s32.totalorder %s14, 0
    %p99 = por %p97, %p98
    %p100 = scmp.ne.s32.totalorder %s86, %s87
    %p101 = scmp.eq.s32.totalorder %s15, 1
    %p102 = por %p100, %p101
    %p104 = scmp.ne.s32.totalorder %s87, %s103
    %p105 = scmp.eq.s32.totalorder %s15, 0
    %p106 = por %p104, %p105
    %s107 = ssub.s32 %s16, %s28
    %s108 = ssub.s32 %s17, %s24
    %s109 = sor.u32 %s107, %s108
    %p110 = scmp.eq.s32.totalorder %s109, 0
    %s112 = sadd.s32 %s111, 1
    %s113 = scalar_select %p110, %s111, %s112
    %p116 = pneg %p110
    %p117 = scmp.eq.s32.totalorder %s9, 1
    %p118 = por %p116, %p117
    %p119 = scmp.ne.s32.totalorder %s111, %s114
    %p120 = scmp.eq.s32.totalorder %s9, 0
    %p121 = por %p119, %p120
    %p122 = scmp.ne.s32.totalorder %s111, %s114
    %p123 = scmp.eq.s32.totalorder %s14, 1
    %p124 = por %p122, %p123
    %p125 = scmp.ne.s32.totalorder %s114, %s115
    %p126 = scmp.eq.s32.totalorder %s14, 0
    %p127 = por %p125, %p126
    %p128 = scmp.ne.s32.totalorder %s114, %s115
    %p129 = scmp.eq.s32.totalorder %s15, 1
    %p130 = por %p128, %p129
    %p132 = scmp.ne.s32.totalorder %s115, %s131
    %p133 = scmp.eq.s32.totalorder %s15, 0
    %p134 = por %p132, %p133
    %p135 = scmp.le.s32.totalorder 1, %s9
    %p136 = scmp.lt.s32.totalorder %s9, 3
    %p137 = pnand %p135, %p136
    %p138 = pneg %p137
    // Predicated region
    $region9: #{bottleneck_forward.5} parent=5 // pred_check
      _
    $region10: #{bottleneck_forward.5} parent=5 // pred_check_branch
      %140 = sbr.rel (%p137) target = $region12
    $region11: #{bottleneck_forward.5} parent=5 // pred_region
      %s141 = ssub.s32 %s9, 1
      // Predicated region
      $region13: #{bottleneck_forward.5} parent=11 // pred_check
        %p142 = pneg %p73
      $region14: #{bottleneck_forward.5} parent=11 // pred_check_branch
        %144 = sbr.rel (%p142) target = $region16
      $region15: #{bottleneck_forward.5} parent=11 // pred_region
        %p145 = scmp.lt.s32.totalorder %s19, 0
        %s146 = scalar_select %p145, %s19, 0
        %s147 = smul.addr %s146, 4
        %s148 = scalar_lea.vmem %s1, %s147
      $region16: #{bottleneck_forward.5} parent=11 // pred_fallthru
        _
      // Predicated region
      $region17: #{bottleneck_forward.5} parent=11 // pred_check
        %p149 = pneg %p99
      $region18: #{bottleneck_forward.5} parent=11 // pred_check_branch
        %151 = sbr.rel (%p149) target = $region20
      $region19: #{bottleneck_forward.5} parent=11 // pred_region
        %p152 = scmp.lt.s32.totalorder %s19, 0
        %s153 = scalar_select %p152, %s19, 0
        %s154 = scalar_lea.vmem %s2, %s153
      $region20: #{bottleneck_forward.5} parent=11 // pred_fallthru
        _
    $region12: #{bottleneck_forward.5} parent=5 // pred_fallthru
      _
    %p155 = scmp.lt.s32.totalorder %s9, 2
    // Predicated region
    $region21: #{bottleneck_forward.5} parent=5 // pred_check
      %p156 = pneg %p155
    $region22: #{bottleneck_forward.5} parent=5 // pred_check_branch
      %158 = sbr.rel (%p156) target = $region24
    $region23: #{bottleneck_forward.5} parent=5 // pred_region
      // Predicated region
      $region25: #{bottleneck_forward.5} parent=23 // pred_check
        %p159 = pneg %p41
      $region26: #{bottleneck_forward.5} parent=23 // pred_check_branch
        %161 = sbr.rel (%p159) target = $region28
      $region27: #{bottleneck_forward.5} parent=23 // pred_region
        %s162 = smul.u32 4, %s16
        %p163 = scmp.lt.s32.totalorder %s162, 7
        %s164 = scalar_select %p163, %s162, 7
        %s165 = smul.addr %s164, 18
        %s166 = smul.addr %s165, 4
        %s167 = scalar_lea.vmem %s0, %s166
        %s168 = smul.u32 4, %s16
      $region28: #{bottleneck_forward.5} parent=23 // pred_fallthru
        _
    $region24: #{bottleneck_forward.5} parent=5 // pred_fallthru
      _
    %p169 = scmp.le.s32.totalorder 1, %s9
    %p170 = scmp.lt.s32.totalorder %s9, 3
    %p171 = pnand %p169, %p170
    %p172 = pneg %p171
    // Predicated region
    $region29: #{bottleneck_forward.5} parent=5 // pred_check
      _
    $region30: #{bottleneck_forward.5} parent=5 // pred_check_branch
      %174 = sbr.rel (%p171) target = $region32
    $region31: #{bottleneck_forward.5} parent=5 // pred_region
      %s175 = ssub.s32 %s9, 1
      %s176 = smul.u32 4, %s18
      %p177 = scmp.lt.s32.totalorder %s176, 7
      %s178 = scalar_select %p177, %s176, 7
      %s179 = smul.addr %s178, 18
      %s180 = smul.addr %s179, 4
      %s181 = scalar_lea.vmem %s0, %s180
      %p182 = pneg %p47
      %p183 = pneg %p44
      %p184 = scmp.lt.s32.totalorder %s19, 0
      %s185 = scalar_select %p184, %s19, 0
      %s186 = smul.addr %s185, 4
      %s187 = scalar_lea.vmem %s1, %s186
      %p188 = pneg %p73
      %p189 = pneg %p70
      %p190 = scmp.lt.s32.totalorder %s19, 0
      %s191 = scalar_select %p190, %s19, 0
      %s192 = scalar_lea.vmem %s2, %s191
      %p193 = pneg %p99
      %p194 = pneg %p96
      %p195 = pneg %p127
      %p196 = pneg %p124
      %p197 = scmp.lt.s32.totalorder %s18, 1
      %s198 = scalar_select %p197, %s18, 1
      %p199 = scmp.lt.s32.totalorder %s19, 0
      %s200 = scalar_select %p199, %s19, 0
      %s201 = smul.addr %s198, 8
      %s202 = sadd.s32 %s200, %s201
      %s203 = smul.addr %s202, 4
      %s204 = scalar_lea.vmem %s3, %s203
      %s205 = smul.u32 4, %s18
      %p206 = scmp.lt.s32.totalorder %s205, 7
      %s207 = scalar_select %p206, %s205, 7
      %s208 = smul.addr %s207, 18
      %s209 = smul.addr %s208, 4
      %s210 = scalar_lea.vmem %s0, %s209
      %s211 = smul.u32 4, %s18
      %p212 = scmp.lt.s32.totalorder %s19, 0
      %s213 = scalar_select %p212, %s19, 0
      %s214 = smul.addr %s213, 4
      %s215 = scalar_lea.vmem %s1, %s214
      %p216 = scmp.lt.s32.totalorder %s19, 0
      %s217 = scalar_select %p216, %s19, 0
      %s218 = scalar_lea.vmem %s2, %s217
      %p219 = scmp.lt.s32.totalorder %s18, 1
      %s220 = scalar_select %p219, %s18, 1
      %p221 = scmp.lt.s32.totalorder %s19, 0
      %s222 = scalar_select %p221, %s19, 0
      %s223 = smul.addr %s220, 8
      %s224 = sadd.s32 %s222, %s223
      %s225 = smul.addr %s224, 4
      %s226 = scalar_lea.vmem %s3, %s225
      %v228 = vld [vmem:[%s210] sm:$0xf]
      %v229 = vld [vmem:[%s210 + $0x4] sm:$0x1]
      %v230 = vld [vmem:[%s210 + $0x8] sm:$0xf]
      %v231 = vld [vmem:[%s210 + $0xc] sm:$0x1]
      %v232 = vld [vmem:[%s210 + $0x10] sm:$0xf]
      %v233 = vld [vmem:[%s210 + $0x14] sm:$0x1]
      %v234 = vld [vmem:[%s210 + $0x18] sm:$0xf]
      %v235 = vld [vmem:[%s210 + $0x1c] sm:$0x1]
      %v236 = vld [vmem:[%s210 + $0x20] sm:$0xf]
      %v237 = vld [vmem:[%s210 + $0x24] sm:$0x1]
      %v238 = vld [vmem:[%s210 + $0x28] sm:$0xf]
      %v239 = vld [vmem:[%s210 + $0x2c] sm:$0x1]
      %v240 = vld [vmem:[%s210 + $0x30] sm:$0xf]
      %v241 = vld [vmem:[%s210 + $0x34] sm:$0x1]
      %v242 = vld [vmem:[%s210 + $0x38] sm:$0xf]
      %v243 = vld [vmem:[%s210 + $0x3c] sm:$0x1]
      %v244 = vld [vmem:[%s210 + $0x40] sm:$0xf]
      %v245 = vld [vmem:[%s210 + $0x44] sm:$0x1]
      %v246 = vld [vmem:[%s215] sm:$0xf]
      %v247 = vld [vmem:[%s215 + $0x4] sm:$0xf]
      %v248 = vld [vmem:[%s215 + $0x8] sm:$0xf]
      %v249 = vld [vmem:[%s215 + $0xc] sm:$0xf]
      %s250 = scalar_lea.vmem %s210, 72
      %v251 = vld [vmem:[%s250] sm:$0xf]
      %v252 = vld [vmem:[%s250 + $0x8] sm:$0xf]
      %v253 = vld [vmem:[%s250 + $0x10] sm:$0xf]
      %v254 = vld [vmem:[%s250 + $0x18] sm:$0xf]
      %v255 = vld [vmem:[%s250 + $0x20] sm:$0xf]
      %v256 = vld [vmem:[%s250 + $0x28] sm:$0xf]
      %v257 = vld [vmem:[%s250 + $0x30] sm:$0xf]
      %v258 = vld [vmem:[%s250 + $0x38] sm:$0xf]
      %v259 = vld [vmem:[%s250 + $0x40] sm:$0xf]
      %s260 = scalar_lea.vmem %s215, 16
      %v261 = vld [vmem:[%s260] sm:$0xf]
      %v262 = vld [vmem:[%s260 + $0x4] sm:$0xf]
      %v263 = vld [vmem:[%s260 + $0x8] sm:$0xf]
      %v264 = vld [vmem:[%s260 + $0xc] sm:$0xf]
      %v273 = vunpack.c.l.b16 %v251
      %v274 = vunpack.c.l.b16 %v252
      %v275 = vunpack.c.l.b16 %v253
      %v276 = vunpack.c.l.b16 %v254
      %v277 = vunpack.c.l.b16 %v255
      %v278 = vunpack.c.l.b16 %v256
      %v279 = vunpack.c.l.b16 %v257
      %v280 = vunpack.c.l.b16 %v258
      %v281 = vpack.c.b16 %v274, %v273
      %v282 = vpack.c.b16 %v276, %v275
      %v283 = vpack.c.b16 %v278, %v277
      %v284 = vpack.c.b16 %v280, %v279
      %v289 = vunpack.c.l.b16 %v261
      %v290 = vunpack.c.l.b16 %v262
      %v291 = vunpack.c.l.b16 %v263
      %v292 = vunpack.c.l.b16 %v264
      %v293 = vpack.c.b16 %v290, %v289
      %v294 = vpack.c.b16 %v292, %v291
      %vm297 = vcmask 261120
      %v299 = vsel %vm297, %v281, 0
      %v302 = vsel %vm297, %v282, 0
      %v305 = vsel %vm297, %v283, 0
      %v308 = vsel %vm297, %v284, 0
      %310 = vmatprep.subr.bf16.mxu0 0
      %311 = vmatpush1.bf16.msra.mxu0 %v293
      %312 = vmatprep.subr.bf16.mxu0 0
      %313 = vmatpush1.bf16.msra.mxu0 %v294
      %314 = vmatprep.subr.bf16.mxu0 0
      %315 = vmatpush1.bf16.msra.mxu0 0
      %316 = vmatprep.subr.bf16.mxu0 0
      %317 = vmatpush1.bf16.msra.mxu0 0
      %318 = vmatprep.subr.bf16.mxu0 0
      %319 = vmatpush1.bf16.msra.mxu0 0
      %320 = vmatprep.subr.bf16.mxu0 0
      %321 = vmatpush1.bf16.msra.mxu0 0
      %322 = vmatprep.subr.bf16.mxu0 0
      %323 = vmatpush1.bf16.msra.mxu0 0
      %324 = vmatprep.subr.bf16.mxu0 0
      %325 = vmatpush1.bf16.msra.mxu0 0
      %326 = vmatprep.subr.bf16.mxu0 0
      %327 = vmatpush1.bf16.msra.mxu0 0
      %328 = vmatprep.subr.bf16.mxu0 0
      %329 = vmatpush1.bf16.msra.mxu0 0
      %330 = vmatprep.subr.bf16.mxu0 0
      %331 = vmatpush1.bf16.msra.mxu0 0
      %332 = vmatprep.subr.bf16.mxu0 0
      %333 = vmatpush1.bf16.msra.mxu0 0
      %334 = vmatprep.subr.bf16.mxu0 0
      %335 = vmatpush1.bf16.msra.mxu0 0
      %336 = vmatprep.subr.bf16.mxu0 0
      %337 = vmatpush1.bf16.msra.mxu0 0
      %338 = vmatprep.subr.bf16.mxu0 0
      %339 = vmatpush1.bf16.msra.mxu0 0
      %340 = vmatprep.subr.bf16.mxu0 0
      %341 = vmatpush1.bf16.msra.mxu0 0
      %342 = vmatprep.mubr.bf16.mxu0 0
      %343 = vmatmul.mubr.bf16.gmra.mrb[0].mxu0 %v299
      %v344 = vpop.f32.mrb[0].mxu0
      %v345 = vadd.f32 0.0, %v344
      %v346 = vpop.f32.mrb[0].mxu0
      %v347 = vpop.f32.mrb[0].mxu0
      %v348 = vadd.f32 0.0, %v347
      %v349 = vpop.f32.mrb[0].mxu0
      %350 = vmatprep.mubr.bf16.mxu0 0
      %351 = vmatmul.mubr.bf16.gmra.mrb[0].mxu0 %v302
      %v352 = vpop.f32.mrb[0].mxu0
      %v353 = vadd.f32 0.0, %v352
      %v354 = vpop.f32.mrb[0].mxu0
      %v355 = vpop.f32.mrb[0].mxu0
      %v356 = vadd.f32 0.0, %v355
      %v357 = vpop.f32.mrb[0].mxu0
      %358 = vmatprep.mubr.bf16.mxu0 0
      %359 = vmatmul.mubr.bf16.gmra.mrb[0].mxu0 %v305
      %v360 = vpop.f32.mrb[0].mxu0
      %v361 = vadd.f32 0.0, %v360
      %v362 = vpop.f32.mrb[0].mxu0
      %v363 = vpop.f32.mrb[0].mxu0
      %v364 = vadd.f32 0.0, %v363
      %v365 = vpop.f32.mrb[0].mxu0
      %366 = vmatprep.mubr.bf16.mxu0 0
      %367 = vmatmul.mubr.bf16.gmra.mrb[0].mxu0 %v308
      %v368 = vpop.f32.mrb[0].mxu0
      %v369 = vadd.f32 0.0, %v368
      %v370 = vpop.f32.mrb[0].mxu0
      %v371 = vpop.f32.mrb[0].mxu0
      %v372 = vadd.f32 0.0, %v371
      %v373 = vpop.f32.mrb[0].mxu0
      %374 = vdwg.mxu0
      %v383 = vunpack.c.l.b16 %v228
      %v384 = vunpack.c.l.b16 %v230
      %v385 = vunpack.c.l.b16 %v232
      %v386 = vunpack.c.l.b16 %v234
      %v387 = vunpack.c.l.b16 %v236
      %v388 = vunpack.c.l.b16 %v238
      %v389 = vunpack.c.l.b16 %v240
      %v390 = vunpack.c.l.b16 %v242
      %v391 = vpack.c.b16 %v384, %v383
      %v392 = vpack.c.b16 %v386, %v385
      %v393 = vpack.c.b16 %v388, %v387
      %v394 = vpack.c.b16 %v390, %v389
      %v399 = vunpack.c.l.b16 %v246
      %v400 = vunpack.c.l.b16 %v247
      %v401 = vunpack.c.l.b16 %v248
      %v402 = vunpack.c.l.b16 %v249
      %v403 = vpack.c.b16 %v400, %v399
      %v404 = vpack.c.b16 %v402, %v401
      %v408 = vsel %vm297, %v391, 0
      %v411 = vsel %vm297, %v392, 0
      %v414 = vsel %vm297, %v393, 0
      %v417 = vsel %vm297, %v394, 0
      %419 = vmatprep.subr.bf16.mxu0 0
      %420 = vmatpush1.bf16.msra.mxu0 %v403
      %421 = vmatprep.subr.bf16.mxu0 0
      %422 = vmatpush1.bf16.msra.mxu0 %v404
      %423 = vmatprep.subr.bf16.mxu0 0
      %424 = vmatpush1.bf16.msra.mxu0 0
      %425 = vmatprep.subr.bf16.mxu0 0
      %426 = vmatpush1.bf16.msra.mxu0 0
      %427 = vmatprep.subr.bf16.mxu0 0
      %428 = vmatpush1.bf16.msra.mxu0 0
      %429 = vmatprep.subr.bf16.mxu0 0
      %430 = vmatpush1.bf16.msra.mxu0 0
      %431 = vmatprep.subr.bf16.mxu0 0
      %432 = vmatpush1.bf16.msra.mxu0 0
      %433 = vmatprep.subr.bf16.mxu0 0
      %434 = vmatpush1.bf16.msra.mxu0 0
      %435 = vmatprep.subr.bf16.mxu0 0
      %436 = vmatpush1.bf16.msra.mxu0 0
      %437 = vmatprep.subr.bf16.mxu0 0
      %438 = vmatpush1.bf16.msra.mxu0 0
      %439 = vmatprep.subr.bf16.mxu0 0
      %440 = vmatpush1.bf16.msra.mxu0 0
      %441 = vmatprep.subr.bf16.mxu0 0
      %442 = vmatpush1.bf16.msra.mxu0 0
      %443 = vmatprep.subr.bf16.mxu0 0
      %444 = vmatpush1.bf16.msra.mxu0 0
      %445 = vmatprep.subr.bf16.mxu0 0
      %446 = vmatpush1.bf16.msra.mxu0 0
      %447 = vmatprep.subr.bf16.mxu0 0
      %448 = vmatpush1.bf16.msra.mxu0 0
      %449 = vmatprep.subr.bf16.mxu0 0
      %450 = vmatpush1.bf16.msra.mxu0 0
      %451 = vmatprep.mubr.bf16.mxu0 0
      %452 = vmatmul.mubr.bf16.gmra.mrb[0].mxu0 %v408
      %v453 = vpop.f32.mrb[0].mxu0
      %v454 = vadd.f32 %v345, %v453
      %v455 = vpop.f32.mrb[0].mxu0
      %v456 = vpop.f32.mrb[0].mxu0
      %v457 = vadd.f32 %v348, %v456
      %v458 = vpop.f32.mrb[0].mxu0
      %459 = vmatprep.mubr.bf16.mxu0 0
      %460 = vmatmul.mubr.bf16.gmra.mrb[0].mxu0 %v411
      %v461 = vpop.f32.mrb[0].mxu0
      %v462 = vadd.f32 %v353, %v461
      %v463 = vpop.f32.mrb[0].mxu0
      %v464 = vpop.f32.mrb[0].mxu0
      %v465 = vadd.f32 %v356, %v464
      %v466 = vpop.f32.mrb[0].mxu0
      %467 = vmatprep.mubr.bf16.mxu0 0
      %468 = vmatmul.mubr.bf16.gmra.mrb[0].mxu0 %v414
      %v469 = vpop.f32.mrb[0].mxu0
      %v470 = vadd.f32 %v361, %v469
      %v471 = vpop.f32.mrb[0].mxu0
      %v472 = vpop.f32.mrb[0].mxu0
      %v473 = vadd.f32 %v364, %v472
      %v474 = vpop.f32.mrb[0].mxu0
      %475 = vmatprep.mubr.bf16.mxu0 0
      %476 = vmatmul.mubr.bf16.gmra.mrb[0].mxu0 %v417
      %v477 = vpop.f32.mrb[0].mxu0
      %v478 = vadd.f32 %v369, %v477
      %v479 = vpop.f32.mrb[0].mxu0
      %v480 = vpop.f32.mrb[0].mxu0
      %v481 = vadd.f32 %v372, %v480
      %v482 = vpop.f32.mrb[0].mxu0
      %483 = vdwg.mxu0
      %vm484 = vsmask.f32 3328
      %vm485 = vsmask.f32 7440
      %vm486 = vmor %vm484, %vm485
      %v488 = vshrl.u32 %v228, 16
      %v490 = vrot.slane %v488, 4
      %v491 = vshll.u32 %v228, 16
      %v493 = vrot.slane %v491, 5
      %v494 = vor.u32 %v490, %v493
      %v495 = vrot.slane %v494, 4
      %v497 = vshll.u32 %v229, 16
      %v499 = vrot.slane %v497, 5
      %v500 = vsel %vm486, %v495, %v499
      %v502 = vshrl.u32 %v230, 16
      %v504 = vrot.slane %v502, 4
      %v505 = vshll.u32 %v230, 16
      %v507 = vrot.slane %v505, 5
      %v508 = vor.u32 %v504, %v507
      %v509 = vrot.slane %v508, 4
      %v511 = vshll.u32 %v231, 16
      %v513 = vrot.slane %v511, 5
      %v514 = vsel %vm486, %v509, %v513
      %v516 = vshrl.u32 %v232, 16
      %v518 = vrot.slane %v516, 4
      %v519 = vshll.u32 %v232, 16
      %v521 = vrot.slane %v519, 5
      %v522 = vor.u32 %v518, %v521
      %v523 = vrot.slane %v522, 4
      %v525 = vshll.u32 %v233, 16
      %v527 = vrot.slane %v525, 5
      %v528 = vsel %vm486, %v523, %v527
      %v530 = vshrl.u32 %v234, 16
      %v532 = vrot.slane %v530, 4
      %v533 = vshll.u32 %v234, 16
      %v535 = vrot.slane %v533, 5
      %v536 = vor.u32 %v532, %v535
      %v537 = vrot.slane %v536, 4
      %v539 = vshll.u32 %v235, 16
      %v541 = vrot.slane %v539, 5
      %v542 = vsel %vm486, %v537, %v541
      %v544 = vshrl.u32 %v236, 16
      %v546 = vrot.slane %v544, 4
      %v547 = vshll.u32 %v236, 16
      %v549 = vrot.slane %v547, 5
      %v550 = vor.u32 %v546, %v549
      %v551 = vrot.slane %v550, 4
      %v553 = vshll.u32 %v237, 16
      %v555 = vrot.slane %v553, 5
      %v556 = vsel %vm486, %v551, %v555
      %v558 = vshrl.u32 %v238, 16
      %v560 = vrot.slane %v558, 4
      %v561 = vshll.u32 %v238, 16
      %v563 = vrot.slane %v561, 5
      %v564 = vor.u32 %v560, %v563
      %v565 = vrot.slane %v564, 4
      %v567 = vshll.u32 %v239, 16
      %v569 = vrot.slane %v567, 5
      %v570 = vsel %vm486, %v565, %v569
      %v572 = vshrl.u32 %v240, 16
      %v574 = vrot.slane %v572, 4
      %v575 = vshll.u32 %v240, 16
      %v577 = vrot.slane %v575, 5
      %v578 = vor.u32 %v574, %v577
      %v579 = vrot.slane %v578, 4
      %v581 = vshll.u32 %v241, 16
      %v583 = vrot.slane %v581, 5
      %v584 = vsel %vm486, %v579, %v583
      %v586 = vshrl.u32 %v242, 16
      %v588 = vrot.slane %v586, 4
      %v589 = vshll.u32 %v242, 16
      %v591 = vrot.slane %v589, 5
      %v592 = vor.u32 %v588, %v591
      %v593 = vrot.slane %v592, 4
      %v595 = vshll.u32 %v243, 16
      %v597 = vrot.slane %v595, 5
      %v598 = vsel %vm486, %v593, %v597
      %s599 = scalar_lea.vmem %s215, 32
      %v600 = vld [vmem:[%s599] sm:$0xf]
      %v601 = vld [vmem:[%s599 + $0x4] sm:$0xf]
      %v602 = vld [vmem:[%s599 + $0x8] sm:$0xf]
      %v603 = vld [vmem:[%s599 + $0xc] sm:$0xf]
      %v604 = vunpack.c.l.b16 %v500
      %v605 = vunpack.c.l.b16 %v514
      %v606 = vunpack.c.l.b16 %v528
      %v607 = vunpack.c.l.b16 %v542
      %v608 = vunpack.c.l.b16 %v556
      %v609 = vunpack.c.l.b16 %v570
      %v610 = vunpack.c.l.b16 %v584
      %v611 = vunpack.c.l.b16 %v598
      %v612 = vpack.c.b16 %v605, %v604
      %v613 = vpack.c.b16 %v607, %v606
      %v614 = vpack.c.b16 %v609, %v608
      %v615 = vpack.c.b16 %v611, %v610
      %v620 = vunpack.c.l.b16 %v600
      %v621 = vunpack.c.l.b16 %v601
      %v622 = vunpack.c.l.b16 %v602
      %v623 = vunpack.c.l.b16 %v603
      %v624 = vpack.c.b16 %v621, %v620
      %v625 = vpack.c.b16 %v623, %v622
      %v629 = vsel %vm297, %v612, 0
      %v632 = vsel %vm297, %v613, 0
      %v635 = vsel %vm297, %v614, 0
      %v638 = vsel %vm297, %v615, 0
      %640 = vmatprep.subr.bf16.mxu0 0
      %641 = vmatpush1.bf16.msra.mxu0 %v624
      %642 = vmatprep.subr.bf16.mxu0 0
      %643 = vmatpush1.bf16.msra.mxu0 %v625
      %644 = vmatprep.subr.bf16.mxu0 0
      %645 = vmatpush1.bf16.msra.mxu0 0
      %646 = vmatprep.subr.bf16.mxu0 0
      %647 = vmatpush1.bf16.msra.mxu0 0
      %648 = vmatprep.subr.bf16.mxu0 0
      %649 = vmatpush1.bf16.msra.mxu0 0
      %650 = vmatprep.subr.bf16.mxu0 0
      %651 = vmatpush1.bf16.msra.mxu0 0
      %652 = vmatprep.subr.bf16.mxu0 0
      %653 = vmatpush1.bf16.msra.mxu0 0
      %654 = vmatprep.subr.bf16.mxu0 0
      %655 = vmatpush1.bf16.msra.mxu0 0
      %656 = vmatprep.subr.bf16.mxu0 0
      %657 = vmatpush1.bf16.msra.mxu0 0
      %658 = vmatprep.subr.bf16.mxu0 0
      %659 = vmatpush1.bf16.msra.mxu0 0
      %660 = vmatprep.subr.bf16.mxu0 0
      %661 = vmatpush1.bf16.msra.mxu0 0
      %662 = vmatprep.subr.bf16.mxu0 0
      %663 = vmatpush1.bf16.msra.mxu0 0
      %664 = vmatprep.subr.bf16.mxu0 0
      %665 = vmatpush1.bf16.msra.mxu0 0
      %666 = vmatprep.subr.bf16.mxu0 0
      %667 = vmatpush1.bf16.msra.mxu0 0
      %668 = vmatprep.subr.bf16.mxu0 0
      %669 = vmatpush1.bf16.msra.mxu0 0
      %670 = vmatprep.subr.bf16.mxu0 0
      %671 = vmatpush1.bf16.msra.mxu0 0
      %672 = vmatprep.mubr.bf16.mxu0 0
      %673 = vmatmul.mubr.bf16.gmra.mrb[0].mxu0 %v629
      %v674 = vpop.f32.mrb[0].mxu0
      %v675 = vadd.f32 0.0, %v674
      %v676 = vpop.f32.mrb[0].mxu0
      %v677 = vpop.f32.mrb[0].mxu0
      %v678 = vadd.f32 0.0, %v677
      %v679 = vpop.f32.mrb[0].mxu0
      %680 = vmatprep.mubr.bf16.mxu0 0
      %681 = vmatmul.mubr.bf16.gmra.mrb[0].mxu0 %v632
      %v682 = vpop.f32.mrb[0].mxu0
      %v683 = vadd.f32 0.0, %v682
      %v684 = vpop.f32.mrb[0].mxu0
      %v685 = vpop.f32.mrb[0].mxu0
      %v686 = vadd.f32 0.0, %v685
      %v687 = vpop.f32.mrb[0].mxu0
      %688 = vmatprep.mubr.bf16.mxu0 0
      %689 = vmatmul.mubr.bf16.gmra.mrb[0].mxu0 %v635
      %v690 = vpop.f32.mrb[0].mxu0
      %v691 = vadd.f32 0.0, %v690
      %v692 = vpop.f32.mrb[0].mxu0
      %v693 = vpop.f32.mrb[0].mxu0
      %v694 = vadd.f32 0.0, %v693
      %v695 = vpop.f32.mrb[0].mxu0
      %696 = vmatprep.mubr.bf16.mxu0 0
      %697 = vmatmul.mubr.bf16.gmra.mrb[0].mxu0 %v638
      %v698 = vpop.f32.mrb[0].mxu0
      %v699 = vadd.f32 0.0, %v698
      %v700 = vpop.f32.mrb[0].mxu0
      %v701 = vpop.f32.mrb[0].mxu0
      %v702 = vadd.f32 0.0, %v701
      %v703 = vpop.f32.mrb[0].mxu0
      %704 = vdwg.mxu0
      %v705 = vadd.f32 %v454, %v675
      %v706 = vadd.f32 %v457, %v678
      %v707 = vadd.f32 %v462, %v683
      %v708 = vadd.f32 %v465, %v686
      %v709 = vadd.f32 %v470, %v691
      %v710 = vadd.f32 %v473, %v694
      %v711 = vadd.f32 %v478, %v699
      %v712 = vadd.f32 %v481, %v702
      %s713 = scalar_lea.vmem %s210, 144
      %v714 = vld [vmem:[%s713] sm:$0xf]
      %v715 = vld [vmem:[%s713 + $0x4] sm:$0x1]
      %v716 = vld [vmem:[%s713 + $0x8] sm:$0xf]
      %v717 = vld [vmem:[%s713 + $0xc] sm:$0x1]
      %v718 = vld [vmem:[%s713 + $0x10] sm:$0xf]
      %v719 = vld [vmem:[%s713 + $0x14] sm:$0x1]
      %v720 = vld [vmem:[%s713 + $0x18] sm:$0xf]
      %v721 = vld [vmem:[%s713 + $0x1c] sm:$0x1]
      %v722 = vld [vmem:[%s713 + $0x20] sm:$0xf]
      %v723 = vld [vmem:[%s713 + $0x24] sm:$0x1]
      %v724 = vld [vmem:[%s713 + $0x28] sm:$0xf]
      %v725 = vld [vmem:[%s713 + $0x2c] sm:$0x1]
      %v726 = vld [vmem:[%s713 + $0x30] sm:$0xf]
      %v727 = vld [vmem:[%s713 + $0x34] sm:$0x1]
      %v728 = vld [vmem:[%s713 + $0x38] sm:$0xf]
      %v729 = vld [vmem:[%s713 + $0x3c] sm:$0x1]
      %s730 = scalar_lea.vmem %s215, 48
      %v731 = vld [vmem:[%s730] sm:$0xf]
      %v732 = vld [vmem:[%s730 + $0x4] sm:$0xf]
      %v733 = vld [vmem:[%s730 + $0x8] sm:$0xf]
      %v734 = vld [vmem:[%s730 + $0xc] sm:$0xf]
      %v743 = vunpack.c.l.b16 %v714
      %v744 = vunpack.c.l.b16 %v716
      %v745 = vunpack.c.l.b16 %v718
      %v746 = vunpack.c.l.b16 %v720
      %v747 = vunpack.c.l.b16 %v722
      %v748 = vunpack.c.l.b16 %v724
      %v749 = vunpack.c.l.b16 %v726
      %v750 = vunpack.c.l.b16 %v728
      %v751 = vpack.c.b16 %v744, %v743
      %v752 = vpack.c.b16 %v746, %v745
      %v753 = vpack.c.b16 %v748, %v747
      %v754 = vpack.c.b16 %v750, %v749
      %v759 = vunpack.c.l.b16 %v731
      %v760 = vunpack.c.l.b16 %v732
      %v761 = vunpack.c.l.b16 %v733
      %v762 = vunpack.c.l.b16 %v734
      %v763 = vpack.c.b16 %v760, %v759
      %v764 = vpack.c.b16 %v762, %v761
      %v768 = vsel %vm297, %v751, 0
      %v771 = vsel %vm297, %v752, 0
      %v774 = vsel %vm297, %v753, 0
      %v777 = vsel %vm297, %v754, 0
      %779 = vmatprep.subr.bf16.mxu0 0
      %780 = vmatpush1.bf16.msra.mxu0 %v763
      %781 = vmatprep.subr.bf16.mxu0 0
      %782 = vmatpush1.bf16.msra.mxu0 %v764
      %783 = vmatprep.subr.bf16.mxu0 0
      %784 = vmatpush1.bf16.msra.mxu0 0
      %785 = vmatprep.subr.bf16.mxu0 0
      %786 = vmatpush1.bf16.msra.mxu0 0
      %787 = vmatprep.subr.bf16.mxu0 0
      %788 = vmatpush1.bf16.msra.mxu0 0
      %789 = vmatprep.subr.bf16.mxu0 0
      %790 = vmatpush1.bf16.msra.mxu0 0
      %791 = vmatprep.subr.bf16.mxu0 0
      %792 = vmatpush1.bf16.msra.mxu0 0
      %793 = vmatprep.subr.bf16.mxu0 0
      %794 = vmatpush1.bf16.msra.mxu0 0
      %795 = vmatprep.subr.bf16.mxu0 0
      %796 = vmatpush1.bf16.msra.mxu0 0
      %797 = vmatprep.subr.bf16.mxu0 0
      %798 = vmatpush1.bf16.msra.mxu0 0
      %799 = vmatprep.subr.bf16.mxu0 0
      %800 = vmatpush1.bf16.msra.mxu0 0
      %801 = vmatprep.subr.bf16.mxu0 0
      %802 = vmatpush1.bf16.msra.mxu0 0
      %803 = vmatprep.subr.bf16.mxu0 0
      %804 = vmatpush1.bf16.msra.mxu0 0
      %805 = vmatprep.subr.bf16.mxu0 0
      %806 = vmatpush1.bf16.msra.mxu0 0
      %807 = vmatprep.subr.bf16.mxu0 0
      %808 = vmatpush1.bf16.msra.mxu0 0
      %809 = vmatprep.subr.bf16.mxu0 0
      %810 = vmatpush1.bf16.msra.mxu0 0
      %811 = vmatprep.mubr.bf16.mxu0 0
      %812 = vmatmul.mubr.bf16.gmra.mrb[0].mxu0 %v768
      %v813 = vpop.f32.mrb[0].mxu0
      %v814 = vadd.f32 0.0, %v813
      %v815 = vpop.f32.mrb[0].mxu0
      %v816 = vpop.f32.mrb[0].mxu0
      %v817 = vadd.f32 0.0, %v816
      %v818 = vpop.f32.mrb[0].mxu0
      %819 = vmatprep.mubr.bf16.mxu0 0
      %820 = vmatmul.mubr.bf16.gmra.mrb[0].mxu0 %v771
      %v821 = vpop.f32.mrb[0].mxu0
      %v822 = vadd.f32 0.0, %v821
      %v823 = vpop.f32.mrb[0].mxu0
      %v824 = vpop.f32.mrb[0].mxu0
      %v825 = vadd.f32 0.0, %v824
      %v826 = vpop.f32.mrb[0].mxu0
      %827 = vmatprep.mubr.bf16.mxu0 0
      %828 = vmatmul.mubr.bf16.gmra.mrb[0].mxu0 %v774
      %v829 = vpop.f32.mrb[0].mxu0
      %v830 = vadd.f32 0.0, %v829
      %v831 = vpop.f32.mrb[0].mxu0
      %v832 = vpop.f32.mrb[0].mxu0
      %v833 = vadd.f32 0.0, %v832
      %v834 = vpop.f32.mrb[0].mxu0
      %835 = vmatprep.mubr.bf16.mxu0 0
      %836 = vmatmul.mubr.bf16.gmra.mrb[0].mxu0 %v777
      %v837 = vpop.f32.mrb[0].mxu0
      %v838 = vadd.f32 0.0, %v837
      %v839 = vpop.f32.mrb[0].mxu0
      %v840 = vpop.f32.mrb[0].mxu0
      %v841 = vadd.f32 0.0, %v840
      %v842 = vpop.f32.mrb[0].mxu0
      %843 = vdwg.mxu0
      %v844 = vadd.f32 %v705, %v814
      %v845 = vadd.f32 %v706, %v817
      %v846 = vadd.f32 %v707, %v822
      %v847 = vadd.f32 %v708, %v825
      %v848 = vadd.f32 %v709, %v830
      %v849 = vadd.f32 %v710, %v833
      %v850 = vadd.f32 %v711, %v838
      %v851 = vadd.f32 %v712, %v841
      %s852 = scalar_lea.vmem %s210, 216
      %v853 = vld [vmem:[%s852] sm:$0xf]
      %v854 = vld [vmem:[%s852 + $0x8] sm:$0xf]
      %v855 = vld [vmem:[%s852 + $0x10] sm:$0xf]
      %v856 = vld [vmem:[%s852 + $0x18] sm:$0xf]
      %v857 = vld [vmem:[%s852 + $0x20] sm:$0xf]
      %v858 = vld [vmem:[%s852 + $0x28] sm:$0xf]
      %v859 = vld [vmem:[%s852 + $0x30] sm:$0xf]
      %v860 = vld [vmem:[%s852 + $0x38] sm:$0xf]
      %s861 = scalar_lea.vmem %s215, 64
      %v862 = vld [vmem:[%s861] sm:$0xf]
      %v863 = vld [vmem:[%s861 + $0x4] sm:$0xf]
      %v864 = vld [vmem:[%s861 + $0x8] sm:$0xf]
      %v865 = vld [vmem:[%s861 + $0xc] sm:$0xf]
      %v874 = vunpack.c.l.b16 %v853
      %v875 = vunpack.c.l.b16 %v854
      %v876 = vunpack.c.l.b16 %v855
      %v877 = vunpack.c.l.b16 %v856
      %v878 = vunpack.c.l.b16 %v857
      %v879 = vunpack.c.l.b16 %v858
      %v880 = vunpack.c.l.b16 %v859
      %v881 = vunpack.c.l.b16 %v860
      %v882 = vpack.c.b16 %v875, %v874
      %v883 = vpack.c.b16 %v877, %v876
      %v884 = vpack.c.b16 %v879, %v878
      %v885 = vpack.c.b16 %v881, %v880
      %v890 = vunpack.c.l.b16 %v862
      %v891 = vunpack.c.l.b16 %v863
      %v892 = vunpack.c.l.b16 %v864
      %v893 = vunpack.c.l.b16 %v865
      %v894 = vpack.c.b16 %v891, %v890
      %v895 = vpack.c.b16 %v893, %v892
      %v899 = vsel %vm297, %v882, 0
      %v902 = vsel %vm297, %v883, 0
      %v905 = vsel %vm297, %v884, 0
      %v908 = vsel %vm297, %v885, 0
      %910 = vmatprep.subr.bf16.mxu0 0
      %911 = vmatpush1.bf16.msra.mxu0 %v894
      %912 = vmatprep.subr.bf16.mxu0 0
      %913 = vmatpush1.bf16.msra.mxu0 %v895
      %914 = vmatprep.subr.bf16.mxu0 0
      %915 = vmatpush1.bf16.msra.mxu0 0
      %916 = vmatprep.subr.bf16.mxu0 0
      %917 = vmatpush1.bf16.msra.mxu0 0
      %918 = vmatprep.subr.bf16.mxu0 0
      %919 = vmatpush1.bf16.msra.mxu0 0
      %920 = vmatprep.subr.bf16.mxu0 0
      %921 = vmatpush1.bf16.msra.mxu0 0
      %922 = vmatprep.subr.bf16.mxu0 0
      %923 = vmatpush1.bf16.msra.mxu0 0
      %924 = vmatprep.subr.bf16.mxu0 0
      %925 = vmatpush1.bf16.msra.mxu0 0
      %926 = vmatprep.subr.bf16.mxu0 0
      %927 = vmatpush1.bf16.msra.mxu0 0
      %928 = vmatprep.subr.bf16.mxu0 0
      %929 = vmatpush1.bf16.msra.mxu0 0
      %930 = vmatprep.subr.bf16.mxu0 0
      %931 = vmatpush1.bf16.msra.mxu0 0
      %932 = vmatprep.subr.bf16.mxu0 0
      %933 = vmatpush1.bf16.msra.mxu0 0
      %934 = vmatprep.subr.bf16.mxu0 0
      %935 = vmatpush1.bf16.msra.mxu0 0
      %936 = vmatprep.subr.bf16.mxu0 0
      %937 = vmatpush1.bf16.msra.mxu0 0
      %938 = vmatprep.subr.bf16.mxu0 0
      %939 = vmatpush1.bf16.msra.mxu0 0
      %940 = vmatprep.subr.bf16.mxu0 0
      %941 = vmatpush1.bf16.msra.mxu0 0
      %942 = vmatprep.mubr.bf16.mxu0 0
      %943 = vmatmul.mubr.bf16.gmra.mrb[0].mxu0 %v899
      %v944 = vpop.f32.mrb[0].mxu0
      %v945 = vadd.f32 0.0, %v944
      %v946 = vpop.f32.mrb[0].mxu0
      %v947 = vpop.f32.mrb[0].mxu0
      %v948 = vadd.f32 0.0, %v947
      %v949 = vpop.f32.mrb[0].mxu0
      %950 = vmatprep.mubr.bf16.mxu0 0
      %951 = vmatmul.mubr.bf16.gmra.mrb[0].mxu0 %v902
      %v952 = vpop.f32.mrb[0].mxu0
      %v953 = vadd.f32 0.0, %v952
      %v954 = vpop.f32.mrb[0].mxu0
      %v955 = vpop.f32.mrb[0].mxu0
      %v956 = vadd.f32 0.0, %v955
      %v957 = vpop.f32.mrb[0].mxu0
      %958 = vmatprep.mubr.bf16.mxu0 0
      %959 = vmatmul.mubr.bf16.gmra.mrb[0].mxu0 %v905
      %v960 = vpop.f32.mrb[0].mxu0
      %v961 = vadd.f32 0.0, %v960
      %v962 = vpop.f32.mrb[0].mxu0
      %v963 = vpop.f32.mrb[0].mxu0
      %v964 = vadd.f32 0.0, %v963
      %v965 = vpop.f32.mrb[0].mxu0
      %966 = vmatprep.mubr.bf16.mxu0 0
      %967 = vmatmul.mubr.bf16.gmra.mrb[0].mxu0 %v908
      %v968 = vpop.f32.mrb[0].mxu0
      %v969 = vadd.f32 0.0, %v968
      %v970 = vpop.f32.mrb[0].mxu0
      %v971 = vpop.f32.mrb[0].mxu0
      %v972 = vadd.f32 0.0, %v971
      %v973 = vpop.f32.mrb[0].mxu0
      %974 = vdwg.mxu0
      %v975 = vadd.f32 %v844, %v945
      %v976 = vadd.f32 %v845, %v948
      %v977 = vadd.f32 %v846, %v953
      %v978 = vadd.f32 %v847, %v956
      %v979 = vadd.f32 %v848, %v961
      %v980 = vadd.f32 %v849, %v964
      %v981 = vadd.f32 %v850, %v969
      %v982 = vadd.f32 %v851, %v972
      %v984 = vshrl.u32 %v714, 16
      %v986 = vrot.slane %v984, 4
      %v987 = vshll.u32 %v714, 16
      %v989 = vrot.slane %v987, 5
      %v990 = vor.u32 %v986, %v989
      %v991 = vrot.slane %v990, 4
      %v993 = vshll.u32 %v715, 16
      %v995 = vrot.slane %v993, 5
      %v996 = vsel %vm486, %v991, %v995
      %v998 = vshrl.u32 %v716, 16
      %v1000 = vrot.slane %v998, 4
      %v1001 = vshll.u32 %v716, 16
      %v1003 = vrot.slane %v1001, 5
      %v1004 = vor.u32 %v1000, %v1003
      %v1005 = vrot.slane %v1004, 4
      %v1007 = vshll.u32 %v717, 16
      %v1009 = vrot.slane %v1007, 5
      %v1010 = vsel %vm486, %v1005, %v1009
      %v1012 = vshrl.u32 %v718, 16
      %v1014 = vrot.slane %v1012, 4
      %v1015 = vshll.u32 %v718, 16
      %v1017 = vrot.slane %v1015, 5
      %v1018 = vor.u32 %v1014, %v1017
      %v1019 = vrot.slane %v1018, 4
      %v1021 = vshll.u32 %v719, 16
      %v1023 = vrot.slane %v1021, 5
      %v1024 = vsel %vm486, %v1019, %v1023
      %v1026 = vshrl.u32 %v720, 16
      %v1028 = vrot.slane %v1026, 4
      %v1029 = vshll.u32 %v720, 16
      %v1031 = vrot.slane %v1029, 5
      %v1032 = vor.u32 %v1028, %v1031
      %v1033 = vrot.slane %v1032, 4
      %v1035 = vshll.u32 %v721, 16
      %v1037 = vrot.slane %v1035, 5
      %v1038 = vsel %vm486, %v1033, %v1037
      %v1040 = vshrl.u32 %v722, 16
      %v1042 = vrot.slane %v1040, 4
      %v1043 = vshll.u32 %v722, 16
      %v1045 = vrot.slane %v1043, 5
      %v1046 = vor.u32 %v1042, %v1045
      %v1047 = vrot.slane %v1046, 4
      %v1049 = vshll.u32 %v723, 16
      %v1051 = vrot.slane %v1049, 5
      %v1052 = vsel %vm486, %v1047, %v1051
      %v1054 = vshrl.u32 %v724, 16
      %v1056 = vrot.slane %v1054, 4
      %v1057 = vshll.u32 %v724, 16
      %v1059 = vrot.slane %v1057, 5
      %v1060 = vor.u32 %v1056, %v1059
      %v1061 = vrot.slane %v1060, 4
      %v1063 = vshll.u32 %v725, 16
      %v1065 = vrot.slane %v1063, 5
      %v1066 = vsel %vm486, %v1061, %v1065
      %v1068 = vshrl.u32 %v726, 16
      %v1070 = vrot.slane %v1068, 4
      %v1071 = vshll.u32 %v726, 16
      %v1073 = vrot.slane %v1071, 5
      %v1074 = vor.u32 %v1070, %v1073
      %v1075 = vrot.slane %v1074, 4
      %v1077 = vshll.u32 %v727, 16
      %v1079 = vrot.slane %v1077, 5
      %v1080 = vsel %vm486, %v1075, %v1079
      %v1082 = vshrl.u32 %v728, 16
      %v1084 = vrot.slane %v1082, 4
      %v1085 = vshll.u32 %v728, 16
      %v1087 = vrot.slane %v1085, 5
      %v1088 = vor.u32 %v1084, %v1087
      %v1089 = vrot.slane %v1088, 4
      %v1091 = vshll.u32 %v729, 16
      %v1093 = vrot.slane %v1091, 5
      %v1094 = vsel %vm486, %v1089, %v1093
      %s1095 = scalar_lea.vmem %s215, 80
      %v1096 = vld [vmem:[%s1095] sm:$0xf]
      %v1097 = vld [vmem:[%s1095 + $0x4] sm:$0xf]
      %v1098 = vld [vmem:[%s1095 + $0x8] sm:$0xf]
      %v1099 = vld [vmem:[%s1095 + $0xc] sm:$0xf]
      %v1100 = vunpack.c.l.b16 %v996
      %v1101 = vunpack.c.l.b16 %v1010
      %v1102 = vunpack.c.l.b16 %v1024
      %v1103 = vunpack.c.l.b16 %v1038
      %v1104 = vunpack.c.l.b16 %v1052
      %v1105 = vunpack.c.l.b16 %v1066
      %v1106 = vunpack.c.l.b16 %v1080
      %v1107 = vunpack.c.l.b16 %v1094
      %v1108 = vpack.c.b16 %v1101, %v1100
      %v1109 = vpack.c.b16 %v1103, %v1102
      %v1110 = vpack.c.b16 %v1105, %v1104
      %v1111 = vpack.c.b16 %v1107, %v1106
      %v1116 = vunpack.c.l.b16 %v1096
      %v1117 = vunpack.c.l.b16 %v1097
      %v1118 = vunpack.c.l.b16 %v1098
      %v1119 = vunpack.c.l.b16 %v1099
      %v1120 = vpack.c.b16 %v1117, %v1116
      %v1121 = vpack.c.b16 %v1119, %v1118
      %v1125 = vsel %vm297, %v1108, 0
      %v1128 = vsel %vm297, %v1109, 0
      %v1131 = vsel %vm297, %v1110, 0
      %v1134 = vsel %vm297, %v1111, 0
      %1136 = vmatprep.subr.bf16.mxu0 0
      %1137 = vmatpush1.bf16.msra.mxu0 %v1120
      %1138 = vmatprep.subr.bf16.mxu0 0
      %1139 = vmatpush1.bf16.msra.mxu0 %v1121
      %1140 = vmatprep.subr.bf16.mxu0 0
      %1141 = vmatpush1.bf16.msra.mxu0 0
      %1142 = vmatprep.subr.bf16.mxu0 0
      %1143 = vmatpush1.bf16.msra.mxu0 0
      %1144 = vmatprep.subr.bf16.mxu0 0
      %1145 = vmatpush1.bf16.msra.mxu0 0
      %1146 = vmatprep.subr.bf16.mxu0 0
      %1147 = vmatpush1.bf16.msra.mxu0 0
      %1148 = vmatprep.subr.bf16.mxu0 0
      %1149 = vmatpush1.bf16.msra.mxu0 0
      %1150 = vmatprep.subr.bf16.mxu0 0
      %1151 = vmatpush1.bf16.msra.mxu0 0
      %1152 = vmatprep.subr.bf16.mxu0 0
      %1153 = vmatpush1.bf16.msra.mxu0 0
      %1154 = vmatprep.subr.bf16.mxu0 0
      %1155 = vmatpush1.bf16.msra.mxu0 0
      %1156 = vmatprep.subr.bf16.mxu0 0
      %1157 = vmatpush1.bf16.msra.mxu0 0
      %1158 = vmatprep.subr.bf16.mxu0 0
      %1159 = vmatpush1.bf16.msra.mxu0 0
      %1160 = vmatprep.subr.bf16.mxu0 0
      %1161 = vmatpush1.bf16.msra.mxu0 0
      %1162 = vmatprep.subr.bf16.mxu0 0
      %1163 = vmatpush1.bf16.msra.mxu0 0
      %1164 = vmatprep.subr.bf16.mxu0 0
      %1165 = vmatpush1.bf16.msra.mxu0 0
      %1166 = vmatprep.subr.bf16.mxu0 0
      %1167 = vmatpush1.bf16.msra.mxu0 0
      %1168 = vmatprep.mubr.bf16.mxu0 0
      %1169 = vmatmul.mubr.bf16.gmra.mrb[0].mxu0 %v1125
      %v1170 = vpop.f32.mrb[0].mxu0
      %v1171 = vadd.f32 0.0, %v1170
      %v1172 = vpop.f32.mrb[0].mxu0
      %v1173 = vpop.f32.mrb[0].mxu0
      %v1174 = vadd.f32 0.0, %v1173
      %v1175 = vpop.f32.mrb[0].mxu0
      %1176 = vmatprep.mubr.bf16.mxu0 0
      %1177 = vmatmul.mubr.bf16.gmra.mrb[0].mxu0 %v1128
      %v1178 = vpop.f32.mrb[0].mxu0
      %v1179 = vadd.f32 0.0, %v1178
      %v1180 = vpop.f32.mrb[0].mxu0
      %v1181 = vpop.f32.mrb[0].mxu0
      %v1182 = vadd.f32 0.0, %v1181
      %v1183 = vpop.f32.mrb[0].mxu0
      %1184 = vmatprep.mubr.bf16.mxu0 0
      %1185 = vmatmul.mubr.bf16.gmra.mrb[0].mxu0 %v1131
      %v1186 = vpop.f32.mrb[0].mxu0
      %v1187 = vadd.f32 0.0, %v1186
      %v1188 = vpop.f32.mrb[0].mxu0
      %v1189 = vpop.f32.mrb[0].mxu0
      %v1190 = vadd.f32 0.0, %v1189
      %v1191 = vpop.f32.mrb[0].mxu0
      %1192 = vmatprep.mubr.bf16.mxu0 0
      %1193 = vmatmul.mubr.bf16.gmra.mrb[0].mxu0 %v1134
      %v1194 = vpop.f32.mrb[0].mxu0
      %v1195 = vadd.f32 0.0, %v1194
      %v1196 = vpop.f32.mrb[0].mxu0
      %v1197 = vpop.f32.mrb[0].mxu0
      %v1198 = vadd.f32 0.0, %v1197
      %v1199 = vpop.f32.mrb[0].mxu0
      %1200 = vdwg.mxu0
      %v1201 = vadd.f32 %v975, %v1171
      %v1202 = vadd.f32 %v976, %v1174
      %v1203 = vadd.f32 %v977, %v1179
      %v1204 = vadd.f32 %v978, %v1182
      %v1205 = vadd.f32 %v979, %v1187
      %v1206 = vadd.f32 %v980, %v1190
      %v1207 = vadd.f32 %v981, %v1195
      %v1208 = vadd.f32 %v982, %v1198
      %s1209 = scalar_lea.vmem %s215, 96
      %v1210 = vld [vmem:[%s1209] sm:$0xf]
      %v1211 = vld [vmem:[%s1209 + $0x4] sm:$0xf]
      %v1212 = vld [vmem:[%s1209 + $0x8] sm:$0xf]
      %v1213 = vld [vmem:[%s1209 + $0xc] sm:$0xf]
      %v1215 = vunpack.c.l.b16 %v244
      %v1216 = vpack.c.b16 %v385, %v384
      %v1217 = vpack.c.b16 %v387, %v386
      %v1218 = vpack.c.b16 %v389, %v388
      %v1219 = vpack.c.b16 %v1215, %v390
      %v1224 = vunpack.c.l.b16 %v1210
      %v1225 = vunpack.c.l.b16 %v1211
      %v1226 = vunpack.c.l.b16 %v1212
      %v1227 = vunpack.c.l.b16 %v1213
      %v1228 = vpack.c.b16 %v1225, %v1224
      %v1229 = vpack.c.b16 %v1227, %v1226
      %v1233 = vsel %vm297, %v1216, 0
      %v1236 = vsel %vm297, %v1217, 0
      %v1239 = vsel %vm297, %v1218, 0
      %v1242 = vsel %vm297, %v1219, 0
      %1244 = vmatprep.subr.bf16.mxu0 0
      %1245 = vmatpush1.bf16.msra.mxu0 %v1228
      %1246 = vmatprep.subr.bf16.mxu0 0
      %1247 = vmatpush1.bf16.msra.mxu0 %v1229
      %1248 = vmatprep.subr.bf16.mxu0 0
      %1249 = vmatpush1.bf16.msra.mxu0 0
      %1250 = vmatprep.subr.bf16.mxu0 0
      %1251 = vmatpush1.bf16.msra.mxu0 0
      %1252 = vmatprep.subr.bf16.mxu0 0
      %1253 = vmatpush1.bf16.msra.mxu0 0
      %1254 = vmatprep.subr.bf16.mxu0 0
      %1255 = vmatpush1.bf16.msra.mxu0 0
      %1256 = vmatprep.subr.bf16.mxu0 0
      %1257 = vmatpush1.bf16.msra.mxu0 0
      %1258 = vmatprep.subr.bf16.mxu0 0
      %1259 = vmatpush1.bf16.msra.mxu0 0
      %1260 = vmatprep.subr.bf16.mxu0 0
      %1261 = vmatpush1.bf16.msra.mxu0 0
      %1262 = vmatprep.subr.bf16.mxu0 0
      %1263 = vmatpush1.bf16.msra.mxu0 0
      %1264 = vmatprep.subr.bf16.mxu0 0
      %1265 = vmatpush1.bf16.msra.mxu0 0
      %1266 = vmatprep.subr.bf16.mxu0 0
      %1267 = vmatpush1.bf16.msra.mxu0 0
      %1268 = vmatprep.subr.bf16.mxu0 0
      %1269 = vmatpush1.bf16.msra.mxu0 0
      %1270 = vmatprep.subr.bf16.mxu0 0
      %1271 = vmatpush1.bf16.msra.mxu0 0
      %1272 = vmatprep.subr.bf16.mxu0 0
      %1273 = vmatpush1.bf16.msra.mxu0 0
      %1274 = vmatprep.subr.bf16.mxu0 0
      %1275 = vmatpush1.bf16.msra.mxu0 0
      %1276 = vmatprep.mubr.bf16.mxu0 0
      %1277 = vmatmul.mubr.bf16.gmra.mrb[0].mxu0 %v1233
      %v1278 = vpop.f32.mrb[0].mxu0
      %v1279 = vadd.f32 0.0, %v1278
      %v1280 = vpop.f32.mrb[0].mxu0
      %v1281 = vpop.f32.mrb[0].mxu0
      %v1282 = vadd.f32 0.0, %v1281
      %v1283 = vpop.f32.mrb[0].mxu0
      %1284 = vmatprep.mubr.bf16.mxu0 0
      %1285 = vmatmul.mubr.bf16.gmra.mrb[0].mxu0 %v1236
      %v1286 = vpop.f32.mrb[0].mxu0
      %v1287 = vadd.f32 0.0, %v1286
      %v1288 = vpop.f32.mrb[0].mxu0
      %v1289 = vpop.f32.mrb[0].mxu0
      %v1290 = vadd.f32 0.0, %v1289
      %v1291 = vpop.f32.mrb[0].mxu0
      %1292 = vmatprep.mubr.bf16.mxu0 0
      %1293 = vmatmul.mubr.bf16.gmra.mrb[0].mxu0 %v1239
      %v1294 = vpop.f32.mrb[0].mxu0
      %v1295 = vadd.f32 0.0, %v1294
      %v1296 = vpop.f32.mrb[0].mxu0
      %v1297 = vpop.f32.mrb[0].mxu0
      %v1298 = vadd.f32 0.0, %v1297
      %v1299 = vpop.f32.mrb[0].mxu0
      %1300 = vmatprep.mubr.bf16.mxu0 0
      %1301 = vmatmul.mubr.bf16.gmra.mrb[0].mxu0 %v1242
      %v1302 = vpop.f32.mrb[0].mxu0
      %v1303 = vadd.f32 0.0, %v1302
      %v1304 = vpop.f32.mrb[0].mxu0
      %v1305 = vpop.f32.mrb[0].mxu0
      %v1306 = vadd.f32 0.0, %v1305
      %v1307 = vpop.f32.mrb[0].mxu0
      %1308 = vdwg.mxu0
      %v1309 = vadd.f32 %v1201, %v1279
      %v1310 = vadd.f32 %v1202, %v1282
      %v1311 = vadd.f32 %v1203, %v1287
      %v1312 = vadd.f32 %v1204, %v1290
      %v1313 = vadd.f32 %v1205, %v1295
      %v1314 = vadd.f32 %v1206, %v1298
      %v1315 = vadd.f32 %v1207, %v1303
      %v1316 = vadd.f32 %v1208, %v1306
      %s1317 = scalar_lea.vmem %s215, 112
      %v1318 = vld [vmem:[%s1317] sm:$0xf]
      %v1319 = vld [vmem:[%s1317 + $0x4] sm:$0xf]
      %v1320 = vld [vmem:[%s1317 + $0x8] sm:$0xf]
      %v1321 = vld [vmem:[%s1317 + $0xc] sm:$0xf]
      %v1323 = vunpack.c.l.b16 %v259
      %v1324 = vpack.c.b16 %v275, %v274
      %v1325 = vpack.c.b16 %v277, %v276
      %v1326 = vpack.c.b16 %v279, %v278
      %v1327 = vpack.c.b16 %v1323, %v280
      %v1332 = vunpack.c.l.b16 %v1318
      %v1333 = vunpack.c.l.b16 %v1319
      %v1334 = vunpack.c.l.b16 %v1320
      %v1335 = vunpack.c.l.b16 %v1321
      %v1336 = vpack.c.b16 %v1333, %v1332
      %v1337 = vpack.c.b16 %v1335, %v1334
      %v1341 = vsel %vm297, %v1324, 0
      %v1344 = vsel %vm297, %v1325, 0
      %v1347 = vsel %vm297, %v1326, 0
      %v1350 = vsel %vm297, %v1327, 0
      %1352 = vmatprep.subr.bf16.mxu0 0
      %1353 = vmatpush1.bf16.msra.mxu0 %v1336
      %1354 = vmatprep.subr.bf16.mxu0 0
      %1355 = vmatpush1.bf16.msra.mxu0 %v1337
      %1356 = vmatprep.subr.bf16.mxu0 0
      %1357 = vmatpush1.bf16.msra.mxu0 0
      %1358 = vmatprep.subr.bf16.mxu0 0
      %1359 = vmatpush1.bf16.msra.mxu0 0
      %1360 = vmatprep.subr.bf16.mxu0 0
      %1361 = vmatpush1.bf16.msra.mxu0 0
      %1362 = vmatprep.subr.bf16.mxu0 0
      %1363 = vmatpush1.bf16.msra.mxu0 0
      %1364 = vmatprep.subr.bf16.mxu0 0
      %1365 = vmatpush1.bf16.msra.mxu0 0
      %1366 = vmatprep.subr.bf16.mxu0 0
      %1367 = vmatpush1.bf16.msra.mxu0 0
      %1368 = vmatprep.subr.bf16.mxu0 0
      %1369 = vmatpush1.bf16.msra.mxu0 0
      %1370 = vmatprep.subr.bf16.mxu0 0
      %1371 = vmatpush1.bf16.msra.mxu0 0
      %1372 = vmatprep.subr.bf16.mxu0 0
      %1373 = vmatpush1.bf16.msra.mxu0 0
      %1374 = vmatprep.subr.bf16.mxu0 0
      %1375 = vmatpush1.bf16.msra.mxu0 0
      %1376 = vmatprep.subr.bf16.mxu0 0
      %1377 = vmatpush1.bf16.msra.mxu0 0
      %1378 = vmatprep.subr.bf16.mxu0 0
      %1379 = vmatpush1.bf16.msra.mxu0 0
      %1380 = vmatprep.subr.bf16.mxu0 0
      %1381 = vmatpush1.bf16.msra.mxu0 0
      %1382 = vmatprep.subr.bf16.mxu0 0
      %1383 = vmatpush1.bf16.msra.mxu0 0
      %1384 = vmatprep.mubr.bf16.mxu0 0
      %1385 = vmatmul.mubr.bf16.gmra.mrb[0].mxu0 %v1341
      %v1386 = vpop.f32.mrb[0].mxu0
      %v1387 = vadd.f32 0.0, %v1386
      %v1388 = vpop.f32.mrb[0].mxu0
      %v1389 = vpop.f32.mrb[0].mxu0
      %v1390 = vadd.f32 0.0, %v1389
      %v1391 = vpop.f32.mrb[0].mxu0
      %1392 = vmatprep.mubr.bf16.mxu0 0
      %1393 = vmatmul.mubr.bf16.gmra.mrb[0].mxu0 %v1344
      %v1394 = vpop.f32.mrb[0].mxu0
      %v1395 = vadd.f32 0.0, %v1394
      %v1396 = vpop.f32.mrb[0].mxu0
      %v1397 = vpop.f32.mrb[0].mxu0
      %v1398 = vadd.f32 0.0, %v1397
      %v1399 = vpop.f32.mrb[0].mxu0
      %1400 = vmatprep.mubr.bf16.mxu0 0
      %1401 = vmatmul.mubr.bf16.gmra.mrb[0].mxu0 %v1347
      %v1402 = vpop.f32.mrb[0].mxu0
      %v1403 = vadd.f32 0.0, %v1402
      %v1404 = vpop.f32.mrb[0].mxu0
      %v1405 = vpop.f32.mrb[0].mxu0
      %v1406 = vadd.f32 0.0, %v1405
      %v1407 = vpop.f32.mrb[0].mxu0
      %1408 = vmatprep.mubr.bf16.mxu0 0
      %1409 = vmatmul.mubr.bf16.gmra.mrb[0].mxu0 %v1350
      %v1410 = vpop.f32.mrb[0].mxu0
      %v1411 = vadd.f32 0.0, %v1410
      %v1412 = vpop.f32.mrb[0].mxu0
      %v1413 = vpop.f32.mrb[0].mxu0
      %v1414 = vadd.f32 0.0, %v1413
      %v1415 = vpop.f32.mrb[0].mxu0
      %1416 = vdwg.mxu0
      %v1417 = vadd.f32 %v1309, %v1387
      %v1418 = vadd.f32 %v1310, %v1390
      %v1419 = vadd.f32 %v1311, %v1395
      %v1420 = vadd.f32 %v1312, %v1398
      %v1421 = vadd.f32 %v1313, %v1403
      %v1422 = vadd.f32 %v1314, %v1406
      %v1423 = vadd.f32 %v1315, %v1411
      %v1424 = vadd.f32 %v1316, %v1414
      %v1426 = vshrl.u32 %v244, 16
      %v1428 = vrot.slane %v1426, 4
      %v1429 = vshll.u32 %v244, 16
      %v1431 = vrot.slane %v1429, 5
      %v1432 = vor.u32 %v1428, %v1431
      %v1433 = vrot.slane %v1432, 4
      %v1435 = vshll.u32 %v245, 16
      %v1437 = vrot.slane %v1435, 5
      %v1438 = vsel %vm486, %v1433, %v1437
      %s1439 = scalar_lea.vmem %s215, 128
      %v1440 = vld [vmem:[%s1439] sm:$0xf]
      %v1441 = vld [vmem:[%s1439 + $0x4] sm:$0xf]
      %v1442 = vld [vmem:[%s1439 + $0x8] sm:$0xf]
      %v1443 = vld [vmem:[%s1439 + $0xc] sm:$0xf]
      %v1444 = vunpack.c.l.b16 %v1438
      %v1445 = vpack.c.b16 %v606, %v605
      %v1446 = vpack.c.b16 %v608, %v607
      %v1447 = vpack.c.b16 %v610, %v609
      %v1448 = vpack.c.b16 %v1444, %v611
      %v1453 = vunpack.c.l.b16 %v1440
      %v1454 = vunpack.c.l.b16 %v1441
      %v1455 = vunpack.c.l.b16 %v1442
      %v1456 = vunpack.c.l.b16 %v1443
      %v1457 = vpack.c.b16 %v1454, %v1453
      %v1458 = vpack.c.b16 %v1456, %v1455
      %v1462 = vsel %vm297, %v1445, 0
      %v1465 = vsel %vm297, %v1446, 0
      %v1468 = vsel %vm297, %v1447, 0
      %v1471 = vsel %vm297, %v1448, 0
      %1473 = vmatprep.subr.bf16.mxu0 0
      %1474 = vmatpush1.bf16.msra.mxu0 %v1457
      %1475 = vmatprep.subr.bf16.mxu0 0
      %1476 = vmatpush1.bf16.msra.mxu0 %v1458
      %1477 = vmatprep.subr.bf16.mxu0 0
      %1478 = vmatpush1.bf16.msra.mxu0 0
      %1479 = vmatprep.subr.bf16.mxu0 0
      %1480 = vmatpush1.bf16.msra.mxu0 0
      %1481 = vmatprep.subr.bf16.mxu0 0
      %1482 = vmatpush1.bf16.msra.mxu0 0
      %1483 = vmatprep.subr.bf16.mxu0 0
      %1484 = vmatpush1.bf16.msra.mxu0 0
      %1485 = vmatprep.subr.bf16.mxu0 0
      %1486 = vmatpush1.bf16.msra.mxu0 0
      %1487 = vmatprep.subr.bf16.mxu0 0
      %1488 = vmatpush1.bf16.msra.mxu0 0
      %1489 = vmatprep.subr.bf16.mxu0 0
      %1490 = vmatpush1.bf16.msra.mxu0 0
      %1491 = vmatprep.subr.bf16.mxu0 0
      %1492 = vmatpush1.bf16.msra.mxu0 0
      %1493 = vmatprep.subr.bf16.mxu0 0
      %1494 = vmatpush1.bf16.msra.mxu0 0
      %1495 = vmatprep.subr.bf16.mxu0 0
      %1496 = vmatpush1.bf16.msra.mxu0 0
      %1497 = vmatprep.subr.bf16.mxu0 0
      %1498 = vmatpush1.bf16.msra.mxu0 0
      %1499 = vmatprep.subr.bf16.mxu0 0
      %1500 = vmatpush1.bf16.msra.mxu0 0
      %1501 = vmatprep.subr.bf16.mxu0 0
      %1502 = vmatpush1.bf16.msra.mxu0 0
      %1503 = vmatprep.subr.bf16.mxu0 0
      %1504 = vmatpush1.bf16.msra.mxu0 0
      %1505 = vmatprep.mubr.bf16.mxu0 0
      %1506 = vmatmul.mubr.bf16.gmra.mrb[0].mxu0 %v1462
      %v1507 = vpop.f32.mrb[0].mxu0
      %v1508 = vadd.f32 0.0, %v1507
      %v1509 = vpop.f32.mrb[0].mxu0
      %v1510 = vpop.f32.mrb[0].mxu0
      %v1511 = vadd.f32 0.0, %v1510
      %v1512 = vpop.f32.mrb[0].mxu0
      %1513 = vmatprep.mubr.bf16.mxu0 0
      %1514 = vmatmul.mubr.bf16.gmra.mrb[0].mxu0 %v1465
      %v1515 = vpop.f32.mrb[0].mxu0
      %v1516 = vadd.f32 0.0, %v1515
      %v1517 = vpop.f32.mrb[0].mxu0
      %v1518 = vpop.f32.mrb[0].mxu0
      %v1519 = vadd.f32 0.0, %v1518
      %v1520 = vpop.f32.mrb[0].mxu0
      %1521 = vmatprep.mubr.bf16.mxu0 0
      %1522 = vmatmul.mubr.bf16.gmra.mrb[0].mxu0 %v1468
      %v1523 = vpop.f32.mrb[0].mxu0
      %v1524 = vadd.f32 0.0, %v1523
      %v1525 = vpop.f32.mrb[0].mxu0
      %v1526 = vpop.f32.mrb[0].mxu0
      %v1527 = vadd.f32 0.0, %v1526
      %v1528 = vpop.f32.mrb[0].mxu0
      %1529 = vmatprep.mubr.bf16.mxu0 0
      %1530 = vmatmul.mubr.bf16.gmra.mrb[0].mxu0 %v1471
      %v1531 = vpop.f32.mrb[0].mxu0
      %v1532 = vadd.f32 0.0, %v1531
      %v1533 = vpop.f32.mrb[0].mxu0
      %v1534 = vpop.f32.mrb[0].mxu0
      %v1535 = vadd.f32 0.0, %v1534
      %v1536 = vpop.f32.mrb[0].mxu0
      %1537 = vdwg.mxu0
      %v1538 = vadd.f32 %v1417, %v1508
      %v1539 = vadd.f32 %v1418, %v1511
      %v1540 = vadd.f32 %v1419, %v1516
      %v1541 = vadd.f32 %v1420, %v1519
      %v1542 = vadd.f32 %v1421, %v1524
      %v1543 = vadd.f32 %v1422, %v1527
      %v1544 = vadd.f32 %v1423, %v1532
      %v1545 = vadd.f32 %v1424, %v1535
      %v1546 = vld [vmem:[%s218] sm:$0x1]
      %v1548 = vlaneseq
      %v1549 = vshrl.u32 %v1548, 7
      %v1550 = vsub.s32 0, %v1549
      %v1551 = vrot.slane %v1546, %v1550
      %v1553 = vadd.f32 %v1538, %v1551
      %v1554 = vadd.f32 %v1539, %v1551
      %v1555 = vadd.f32 %v1540, %v1551
      %v1556 = vadd.f32 %v1541, %v1551
      %v1557 = vadd.f32 %v1542, %v1551
      %v1558 = vadd.f32 %v1543, %v1551
      %v1559 = vadd.f32 %v1544, %v1551
      %v1560 = vadd.f32 %v1545, %v1551
      %v1561 = vmax.f32 %v1553, 0.0
      %v1562 = vmax.f32 %v1554, 0.0
      %v1563 = vmax.f32 %v1555, 0.0
      %v1564 = vmax.f32 %v1556, 0.0
      %v1565 = vmax.f32 %v1557, 0.0
      %v1566 = vmax.f32 %v1558, 0.0
      %v1567 = vmax.f32 %v1559, 0.0
      %v1568 = vmax.f32 %v1560, 0.0
      %v1569 = vpack.c.bf16 %v1562, %v1561
      %v1570 = vpack.c.bf16 %v1564, %v1563
      %v1571 = vpack.c.bf16 %v1566, %v1565
      %v1572 = vpack.c.bf16 %v1568, %v1567
      %v1577 = vunpack.c.l.b16 %v1569
      %v1578 = vunpack.c.h.b16 %v1569
      %v1579 = vunpack.c.l.b16 %v1570
      %v1580 = vunpack.c.h.b16 %v1570
      %v1581 = vunpack.c.l.b16 %v1571
      %v1582 = vunpack.c.h.b16 %v1571
      %v1583 = vunpack.c.l.b16 %v1572
      %v1584 = vunpack.c.h.b16 %v1572
      %v1585 = vpack.c.b16 %v1577, %v1577
      %v1586 = vpack.c.b16 %v1578, %v1578
      %v1587 = vpack.c.b16 %v1579, %v1579
      %v1588 = vpack.c.b16 %v1580, %v1580
      %v1589 = vpack.c.b16 %v1581, %v1581
      %v1590 = vpack.c.b16 %v1582, %v1582
      %v1591 = vpack.c.b16 %v1583, %v1583
      %v1592 = vpack.c.b16 %v1584, %v1584
      %1601 = vst [vmem:[%s226] sm:$0xf] %v1585
      %1602 = vst [vmem:[%s226 + $0x4] sm:$0xf] %v1586
      %1603 = vst [vmem:[%s226 + $0x8] sm:$0xf] %v1587
      %1604 = vst [vmem:[%s226 + $0xc] sm:$0xf] %v1588
      %1605 = vst [vmem:[%s226 + $0x10] sm:$0xf] %v1589
      %1606 = vst [vmem:[%s226 + $0x14] sm:$0xf] %v1590
      %1607 = vst [vmem:[%s226 + $0x18] sm:$0xf] %v1591
      %1608 = vst [vmem:[%s226 + $0x1c] sm:$0xf] %v1592
      %p1609 = scmp.lt.s32.totalorder %s18, 1
      %s1610 = scalar_select %p1609, %s18, 1
      %p1611 = scmp.lt.s32.totalorder %s19, 0
      %s1612 = scalar_select %p1611, %s19, 0
      %s1613 = smul.addr %s1610, 8
      %s1614 = sadd.s32 %s1612, %s1613
      %s1615 = smul.addr %s1614, 4
      %s1616 = scalar_lea.vmem %s3, %s1615
      // Predicated region
      $region33: #{bottleneck_forward.5} parent=31 // pred_check
        %p1617 = pneg %p124
      $region34: #{bottleneck_forward.5} parent=31 // pred_check_branch
        %1619 = sbr.rel (%p1617) target = $region36
      $region35: #{bottleneck_forward.5} parent=31 // pred_region
        _
      $region36: #{bottleneck_forward.5} parent=31 // pred_fallthru
        _
    $region32: #{bottleneck_forward.5} parent=5 // pred_fallthru
      _
    %p1620 = scmp.le.s32.totalorder 2, %s9
    // Predicated region
    $region37: #{bottleneck_forward.5} parent=5 // pred_check
      %p1621 = pneg %p1620
    $region38: #{bottleneck_forward.5} parent=5 // pred_check_branch
      %1623 = sbr.rel (%p1621) target = $region40
    $region39: #{bottleneck_forward.5} parent=5 // pred_region
      %s1624 = ssub.s32 %s9, 2
      // Predicated region
      $region41: #{bottleneck_forward.5} parent=39 // pred_check
        %p1625 = pneg %p130
      $region42: #{bottleneck_forward.5} parent=39 // pred_check_branch
        %1627 = sbr.rel (%p1625) target = $region44
      $region43: #{bottleneck_forward.5} parent=39 // pred_region
        %p1628 = scmp.lt.s32.totalorder %s20, 1
        %s1629 = scalar_select %p1628, %s20, 1
        %p1630 = scmp.lt.s32.totalorder %s21, 0
        %s1631 = scalar_select %p1630, %s21, 0
        %s1632 = smul.addr %s1629, 8
        %s1633 = sadd.s32 %s1631, %s1632
        %s1634 = smul.addr %s1633, 4
        %s1635 = scalar_lea.vmem %s3, %s1634
      $region44: #{bottleneck_forward.5} parent=39 // pred_fallthru
        _
    $region40: #{bottleneck_forward.5} parent=5 // pred_fallthru
      _
  $region6: #{bottleneck_forward.5} parent=0 // loop_footer
    %s13 = sadd.s32 1, %s9
  $region7: #{bottleneck_forward.5} parent=0 // loop_footer_branch
    %8 = sbr.rel target = $region3
  $region8: #{bottleneck_forward.5} parent=0 // loop_exit
    _

</llo_original>
